<compile_context>
chip_gen: v7x
topology: tpu7x:2x2x1
jax: 0.10.0
libtpu: 0.0.40
codegen_flags: <defaults>
</compile_context>

<pallas_src>
import functools
import math

import jax
import jax.numpy as jnp
from jax.experimental import pallas as pl
from jax.experimental.pallas import tpu as pltpu


# ----------------------------- tiling helpers -----------------------------

def _row_tile(m, pref=256):
    """Row (second-to-last) tile: full dim if small, else a multiple of 8."""
    if m <= pref:
        return m
    return (pref // 8) * 8


def _col_tile(n, pref=256):
    """Lane (last-dim) tile: full dim if small, else a multiple of 128."""
    if n <= pref:
        return n
    return (pref // 128) * 128


def _k_tile(k, pref=512):
    """Contraction tile: must divide K exactly (no padding along K)."""
    if k <= pref:
        return k
    t = (pref // 128) * 128
    while t >= 128:
        if k % t == 0:
            return t
        t -= 128
    return k


# ----------------------------- Pallas kernels -----------------------------

def _matmul_bias_kernel(x_ref, w_ref, b_ref, o_ref):
    # Single-K-step y = x @ W + b: no scratch, no init/finalize overhead.
    o_ref[...] = (jnp.dot(x_ref[...], w_ref[...],
                          preferred_element_type=jnp.float32)
                  + b_ref[...]).astype(o_ref.dtype)


def _matmul_bias_acc_kernel(x_ref, w_ref, b_ref, o_ref, acc_ref):
    # Tiled y = x @ W + b with fp32 VMEM accumulator; bf16 tiles on the MXU.
    @pl.when(pl.program_id(2) == 0)
    def _():
        acc_ref[...] = jnp.zeros_like(acc_ref)

    acc_ref[...] += jnp.dot(x_ref[...], w_ref[...],
                            preferred_element_type=jnp.float32)

    @pl.when(pl.program_id(2) == pl.num_programs(2) - 1)
    def _():
        o_ref[...] = (acc_ref[...] + b_ref[...]).astype(o_ref.dtype)


def _attention_kernel(qkv_ref, o_ref, *, nhead):
    # Bt videos per grid step.  qkv_ref: (Bt, S, 3E) bf16 with the 1/sqrt(Dh)
    # scale already folded into the Q projection.  Per head: batched
    # dot_general with last-dim contraction (no transposes), fp32 softmax,
    # result stored straight into its lane slice of o_ref (bounds liveness).
    E3 = qkv_ref.shape[2]
    E = E3 // 3
    Dh = E // nhead
    for h in range(nhead):                                 # short static unroll
        q = qkv_ref[:, :, h * Dh:(h + 1) * Dh]             # (Bt, S, Dh) bf16
        k = qkv_ref[:, :, E + h * Dh:E + (h + 1) * Dh]
        v = qkv_ref[:, :, 2 * E + h * Dh:2 * E + (h + 1) * Dh]
        s = jax.lax.dot_general(q, k, (((2,), (2,)), ((0,), (0,))),
                                preferred_element_type=jnp.float32)  # (Bt,S,S)
        s = s - jnp.max(s, axis=-1, keepdims=True)
        p = jnp.exp(s)
        p = p * pl.reciprocal(jnp.sum(p, axis=-1, keepdims=True), approx=True)
        o = jax.lax.dot_general(p.astype(jnp.bfloat16), v,
                                (((2,), (1,)), ((0,), (0,))),
                                preferred_element_type=jnp.float32)  # (Bt,S,Dh)
        o_ref[:, :, h * Dh:(h + 1) * Dh] = o.astype(o_ref.dtype)


def _proj_add_ln_kernel(a_ref, w_ref, b_ref, res_ref, g_ref, bt_ref, o_ref,
                        acc_ref):
    # Fused out_proj + residual + LayerNorm1, tiled over the contraction (E).
    k = pl.program_id(1)

    @pl.when(k == 0)
    def _():
        acc_ref[...] = jnp.zeros_like(acc_ref)

    acc_ref[...] += jnp.dot(a_ref[...], w_ref[...],
                            preferred_element_type=jnp.float32)

    @pl.when(k == pl.num_programs(1) - 1)
    def _():
        x = acc_ref[...] + b_ref[...] + res_ref[...].astype(jnp.float32)
        mean = jnp.mean(x, axis=-1, keepdims=True)
        xc = x - mean
        var = jnp.mean(xc * xc, axis=-1, keepdims=True)
        inv = jax.lax.rsqrt(var + 1e-5)
        o_ref[...] = (xc * inv * g_ref[...] + bt_ref[...]).astype(o_ref.dtype)


def _ffn_add_ln_kernel(x_ref, w1_ref, b1_ref, w2_ref, b2_ref, g_ref, bt_ref,
                       o_ref, acc_ref):
    # Fused FFN + residual + LayerNorm2, tiled over the FF dimension so the
    # weights are never fully VMEM-resident (v7x-safe).
    f = pl.program_id(1)

    @pl.when(f == 0)
    def _():
        acc_ref[...] = jnp.zeros_like(acc_ref)

    h = jnp.dot(x_ref[...], w1_ref[...],
                preferred_element_type=jnp.float32) + b1_ref[...]
    h = jnp.maximum(h, 0.0)
    acc_ref[...] += jnp.dot(h.astype(jnp.bfloat16), w2_ref[...],
                            preferred_element_type=jnp.float32)

    @pl.when(f == pl.num_programs(1) - 1)
    def _():
        z = acc_ref[...] + b2_ref[...] + x_ref[...].astype(jnp.float32)
        mean = jnp.mean(z, axis=-1, keepdims=True)
        zc = z - mean
        var = jnp.mean(zc * zc, axis=-1, keepdims=True)
        inv = jax.lax.rsqrt(var + 1e-5)
        o_ref[...] = (zc * inv * g_ref[...] + bt_ref[...]).astype(o_ref.dtype)


def _ln_kernel(x_ref, g_ref, b_ref, o_ref):
    x = x_ref[...].astype(jnp.float32)
    mean = jnp.mean(x, axis=-1, keepdims=True)
    xc = x - mean
    var = jnp.mean(xc * xc, axis=-1, keepdims=True)
    inv = jax.lax.rsqrt(var + 1e-5)
    o_ref[...] = (xc * inv * g_ref[...] + b_ref[...]).astype(o_ref.dtype)


# ----------------------------- kernel wrappers -----------------------------

def linear(x, w, b, *, tm=256, tn=256, tk=512):
    """x: (M, K) bf16, w: (K, N) bf16, b: (N,) fp32 -> (M, N) bf16."""
    M, K = x.shape
    N = w.shape[1]
    tm_, tn_, tk_ = _row_tile(M, tm), _col_tile(N, tn), _k_tile(K, tk)
    nk = K // tk_
    b2 = b.reshape(1, N)
    if nk == 1:
        return pl.pallas_call(
            _matmul_bias_kernel,
            out_shape=jax.ShapeDtypeStruct((M, N), x.dtype),
            grid=(pl.cdiv(M, tm_), pl.cdiv(N, tn_)),
            in_specs=[
                pl.BlockSpec((tm_, K), lambda i, j: (i, 0)),
                pl.BlockSpec((K, tn_), lambda i, j: (0, j)),
                pl.BlockSpec((1, tn_), lambda i, j: (0, j)),
            ],
            out_specs=pl.BlockSpec((tm_, tn_), lambda i, j: (i, j)),
            compiler_params=pltpu.CompilerParams(
                dimension_semantics=("parallel", "parallel")),
        )(x, w, b2)
    return pl.pallas_call(
        _matmul_bias_acc_kernel,
        out_shape=jax.ShapeDtypeStruct((M, N), x.dtype),
        grid=(pl.cdiv(M, tm_), pl.cdiv(N, tn_), nk),
        in_specs=[
            pl.BlockSpec((tm_, tk_), lambda i, j, k: (i, k)),
            pl.BlockSpec((tk_, tn_), lambda i, j, k: (k, j)),
            pl.BlockSpec((1, tn_), lambda i, j, k: (0, j)),
        ],
        out_specs=pl.BlockSpec((tm_, tn_), lambda i, j, k: (i, j)),
        scratch_shapes=[pltpu.VMEM((tm_, tn_), jnp.float32)],
        compiler_params=pltpu.CompilerParams(
            dimension_semantics=("parallel", "parallel", "arbitrary")),
    )(x, w, b2)


def attention(qkv, nhead, *, bt=8):
    """qkv: (B, S, 3E) bf16 -> (B, S, E) bf16; Bt videos per grid step."""
    B, S, E3 = qkv.shape
    E = E3 // 3
    Bt = min(B, bt)
    return pl.pallas_call(
        functools.partial(_attention_kernel, nhead=nhead),
        out_shape=jax.ShapeDtypeStruct((B, S, E), qkv.dtype),
        grid=(pl.cdiv(B, Bt),),
        in_specs=[pl.BlockSpec((Bt, S, E3), lambda b: (b, 0, 0))],
        out_specs=pl.BlockSpec((Bt, S, E), lambda b: (b, 0, 0)),
        compiler_params=pltpu.CompilerParams(dimension_semantics=("parallel",)),
    )(qkv)


def proj_add_layernorm(a, w, b, residual, gamma, beta, *, tm=256, tk=512):
    """LayerNorm(a @ w + b + residual); a, residual: (M, E) bf16 -> bf16."""
    M, K = a.shape
    E = w.shape[1]
    tm_ = _row_tile(M, tm)
    tk_ = _k_tile(K, tk)
    nk = K // tk_
    return pl.pallas_call(
        _proj_add_ln_kernel,
        out_shape=jax.ShapeDtypeStruct((M, E), a.dtype),
        grid=(pl.cdiv(M, tm_), nk),
        in_specs=[
            pl.BlockSpec((tm_, tk_), lambda i, k: (i, k)),
            pl.BlockSpec((tk_, E), lambda i, k: (k, 0)),
            pl.BlockSpec((1, E), lambda i, k: (0, 0)),
            pl.BlockSpec((tm_, E), lambda i, k: (i, 0)),
            pl.BlockSpec((1, E), lambda i, k: (0, 0)),
            pl.BlockSpec((1, E), lambda i, k: (0, 0)),
        ],
        out_specs=pl.BlockSpec((tm_, E), lambda i, k: (i, 0)),
        scratch_shapes=[pltpu.VMEM((tm_, E), jnp.float32)],
        compiler_params=pltpu.CompilerParams(
            dimension_semantics=("parallel", "arbitrary")),
    )(a, w, b.reshape(1, E), residual, gamma.reshape(1, E), beta.reshape(1, E))


def ffn_add_layernorm(x, w1, b1, w2, b2, gamma, beta, *, tm=128, tf=512):
    """LayerNorm(lin2(relu(lin1(x))) + x); x: (M, E) bf16 -> bf16.
    FF is tiled (tf) with an fp32 partial-sum accumulator, so weight blocks
    stay small (~2 MiB at E=FF=2048) and fit default scoped VMEM on all gens."""
    M, E = x.shape
    FF = w1.shape[1]
    tm_ = _row_tile(M, tm)
    tf_ = _k_tile(FF, tf)
    nf = FF // tf_
    return pl.pallas_call(
        _ffn_add_ln_kernel,
        out_shape=jax.ShapeDtypeStruct((M, E), x.dtype),
        grid=(pl.cdiv(M, tm_), nf),
        in_specs=[
            pl.BlockSpec((tm_, E), lambda i, f: (i, 0)),
            pl.BlockSpec((E, tf_), lambda i, f: (0, f)),
            pl.BlockSpec((1, tf_), lambda i, f: (0, f)),
            pl.BlockSpec((tf_, E), lambda i, f: (f, 0)),
            pl.BlockSpec((1, E), lambda i, f: (0, 0)),
            pl.BlockSpec((1, E), lambda i, f: (0, 0)),
            pl.BlockSpec((1, E), lambda i, f: (0, 0)),
        ],
        out_specs=pl.BlockSpec((tm_, E), lambda i, f: (i, 0)),
        scratch_shapes=[pltpu.VMEM((tm_, E), jnp.float32)],
        compiler_params=pltpu.CompilerParams(
            dimension_semantics=("parallel", "arbitrary")),
    )(x, w1, b1.reshape(1, FF), w2, b2.reshape(1, E),
      gamma.reshape(1, E), beta.reshape(1, E))


def layernorm(x, gamma, beta, *, tm=256, out_dtype=jnp.float32):
    """Plain LayerNorm over the last axis; x: (M, E) bf16 -> out_dtype."""
    M, E = x.shape
    tm_ = _row_tile(M, tm)
    return pl.pallas_call(
        _ln_kernel,
        out_shape=jax.ShapeDtypeStruct((M, E), out_dtype),
        grid=(pl.cdiv(M, tm_),),
        in_specs=[
            pl.BlockSpec((tm_, E), lambda i: (i, 0)),
            pl.BlockSpec((1, E), lambda i: (0, 0)),
            pl.BlockSpec((1, E), lambda i: (0, 0)),
        ],
        out_specs=pl.BlockSpec((tm_, E), lambda i: (i, 0)),
        compiler_params=pltpu.CompilerParams(dimension_semantics=("parallel",)),
    )(x, gamma.reshape(1, E), beta.reshape(1, E))


# ----------------------------- model (plain-JAX glue, no transposes) -----------------------------

def encoder_layer(x, p, nhead):
    """One nn.TransformerEncoderLayer (post-norm, ReLU, eval mode). x: (B, S, E) bf16."""
    B, S, E = x.shape
    xf = x.reshape(B * S, E)

    # QKV projection (scale folded into Q weights), batched multi-head
    # attention, then fused (out_proj + residual + LayerNorm1).
    qkv = linear(xf, p["in_proj_w"], p["in_proj_b"])             # (B*S, 3E) bf16
    a = attention(qkv.reshape(B, S, 3 * E), nhead)               # (B, S, E) bf16
    x1 = proj_add_layernorm(a.reshape(B * S, E),
                            p["out_proj_w"], p["out_proj_b"],
                            xf, p["ln1_w"], p["ln1_b"])          # (B*S, E) bf16

    # Fused feed-forward + residual + LayerNorm2 (FF-tiled).
    x2 = ffn_add_layernorm(x1, p["lin1_w"], p["lin1_b"],
                           p["lin2_w"], p["lin2_b"],
                           p["ln2_w"], p["ln2_b"])               # (B*S, E) bf16
    return x2.reshape(B, S, E)


def taggregate_forward(x, params, clip_length, nhead=8):
    """x: (nvids*clip_length, embed_dim) fp32 -> (nvids, embed_dim) fp32."""
    E = x.shape[-1]
    nvids = x.shape[0] // clip_length
    x = x.reshape(nvids, clip_length, E)
    cls = jnp.broadcast_to(params["cls_token"], (nvids, 1, E))
    x = jnp.concatenate([cls, x], axis=1)                        # (B, S, E)
    x = (x + params["pos_embed"]).astype(jnp.bfloat16)           # pos_drop p=0

    for lp in params["layers"]:
        x = encoder_layer(x, lp, nhead)

    # Final encoder norm: only the CLS rows are consumed, so only they are normed.
    cls_rows = x[:, 0, :]                                        # (B, E) bf16
    return layernorm(cls_rows, params["norm_w"], params["norm_b"],
                     out_dtype=jnp.float32)


# ----------------------------- deterministic parameter init -----------------------------

def _trunc_normal(key, shape, std=0.02):
    return std * jax.random.truncated_normal(key, -2.0, 2.0, shape, jnp.float32)


def init_params(key, clip_length, embed_dim, n_layers, ff_dim, nhead=8):
    E, FF = embed_dim, ff_dim
    Dh = E // nhead
    scale = 1.0 / math.sqrt(Dh)
    keys = jax.random.split(key, 2 + 4 * n_layers)
    ki = iter(keys)
    params = {
        "cls_token": _trunc_normal(next(ki), (1, 1, E)),
        "pos_embed": _trunc_normal(next(ki), (1, clip_length + 1, E)),
        "norm_w": jnp.ones((E,), jnp.float32),
        "norm_b": jnp.zeros((E,), jnp.float32),
        "layers": [],
    }
    # 1/sqrt(Dh) is folded into the Q columns of in_proj (weight + bias) so the
    # attention kernel never multiplies by the scale.  Weights are transposed
    # ONCE to (in, out) and stored bf16 (fp32 accumulation on the MXU).
    col_scale = jnp.concatenate([jnp.full((E,), scale, jnp.float32),
                                 jnp.ones((2 * E,), jnp.float32)])
    for _ in range(n_layers):
        in_w = _trunc_normal(next(ki), (3 * E, E)).T * col_scale[None, :]
        in_b = jnp.zeros((3 * E,), jnp.float32) * col_scale
        lp = {
            "in_proj_w": in_w.astype(jnp.bfloat16),
            "in_proj_b": in_b,
            "out_proj_w": _trunc_normal(next(ki), (E, E)).T.astype(jnp.bfloat16),
            "out_proj_b": jnp.zeros((E,), jnp.float32),
            "lin1_w": _trunc_normal(next(ki), (FF, E)).T.astype(jnp.bfloat16),
            "lin1_b": jnp.zeros((FF,), jnp.float32),
            "lin2_w": _trunc_normal(next(ki), (E, FF)).T.astype(jnp.bfloat16),
            "lin2_b": jnp.zeros((E,), jnp.float32),
            "ln1_w": jnp.ones((E,), jnp.float32),
            "ln1_b": jnp.zeros((E,), jnp.float32),
            "ln2_w": jnp.ones((E,), jnp.float32),
            "ln2_b": jnp.zeros((E,), jnp.float32),
        }
        params["layers"].append(lp)
    return params


# ----------------------------- main -----------------------------

if __name__ == "__main__":
    # Small shapes consistent with the module: embed_dim divisible by nhead=8.
    clip_length = 8
    embed_dim = 64
    n_layers = 2
    ff_dim = 128      # small stand-in for the 2048 default dim_feedforward
    nhead = 8
    nvids = 2

    root = jax.random.PRNGKey(0)
    pkey, xkey = jax.random.split(root)
    params = init_params(pkey, clip_length, embed_dim, n_layers, ff_dim, nhead)

    x = jax.random.normal(xkey, (nvids * clip_length, embed_dim), dtype=jnp.float32)

    fwd = jax.jit(functools.partial(taggregate_forward,
                                    clip_length=clip_length, nhead=nhead))
    out = fwd(x, params)
    out = jax.block_until_ready(out)

    assert out.shape == (nvids, embed_dim), out.shape
    assert bool(jnp.all(jnp.isfinite(out)))
    print("KERNEL_OK")
</pallas_src>

<mosaic_0001>
module attributes {stable_mosaic.version = 11 : i64} {
  func.func @_proj_add_ln_kernel(%arg0: i32, %arg1: i32, %arg2: memref<18x64xbf16, #tpu.memory_space<vmem>>, %arg3: memref<64x64xbf16, #tpu.memory_space<vmem>>, %arg4: memref<1x64xf32, #tpu.memory_space<vmem>>, %arg5: memref<18x64xbf16, #tpu.memory_space<vmem>>, %arg6: memref<1x64xf32, #tpu.memory_space<vmem>>, %arg7: memref<1x64xf32, #tpu.memory_space<vmem>>, %arg8: memref<18x64xbf16, #tpu.memory_space<vmem>>, %arg9: memref<18x64xf32, #tpu.memory_space<vmem>>) attributes {dimension_semantics = [#tpu.dimension_semantics<parallel>, #tpu.dimension_semantics<arbitrary>], iteration_bounds = array<i64: 1, 1>, scalar_prefetch = 0 : i64, scratch_operands = 1 : i64, tpu.core_type = #tpu.core_type<tc>, window_params = [{transform_indices = @transform_0, window_bounds = array<i64: 18, 64>}, {transform_indices = @transform_1, window_bounds = array<i64: 64, 64>}, {pipeline_mode = #tpu.pipeline_mode<synchronous>, transform_indices = @transform_2, window_bounds = array<i64: 1, 64>}, {transform_indices = @transform_3, window_bounds = array<i64: 18, 64>}, {pipeline_mode = #tpu.pipeline_mode<synchronous>, transform_indices = @transform_4, window_bounds = array<i64: 1, 64>}, {pipeline_mode = #tpu.pipeline_mode<synchronous>, transform_indices = @transform_5, window_bounds = array<i64: 1, 64>}, {transform_indices = @transform_6, window_bounds = array<i64: 18, 64>}]} {
    %c0_i32 = arith.constant 0 : i32
    %0 = arith.cmpi eq, %arg1, %c0_i32 : i32
    %1 = arith.extui %0 : i1 to i32
    %c0_i32_0 = arith.constant 0 : i32
    %2 = arith.cmpi ne, %1, %c0_i32_0 : i32
    scf.if %2 {
      %cst_10 = arith.constant 0.000000e+00 : f32
      %12 = vector.broadcast %cst_10 : f32 to vector<18x64xf32>
      %c0_11 = arith.constant 0 : index
      %c0_12 = arith.constant 0 : index
      %13 = vector.load %arg9[%c0_11, %c0_12] : memref<18x64xf32, #tpu.memory_space<vmem>>, vector<18x64xf32>
      tpu.vector_store %arg9[%c0_11, %c0_12], %12 {strides = array<i32>} : memref<18x64xf32, #tpu.memory_space<vmem>>, vector<18x64xf32>,
    } else {
    }
    %c0 = arith.constant 0 : index
    %c0_1 = arith.constant 0 : index
    %3 = vector.load %arg9[%c0, %c0_1] : memref<18x64xf32, #tpu.memory_space<vmem>>, vector<18x64xf32>
    %c0_2 = arith.constant 0 : index
    %c0_3 = arith.constant 0 : index
    %4 = vector.load %arg2[%c0_2, %c0_3] : memref<18x64xbf16, #tpu.memory_space<vmem>>, vector<18x64xbf16>
    %c0_4 = arith.constant 0 : index
    %c0_5 = arith.constant 0 : index
    %5 = vector.load %arg3[%c0_4, %c0_5] : memref<64x64xbf16, #tpu.memory_space<vmem>>, vector<64x64xbf16>
    %cst = arith.constant dense<0.000000e+00> : vector<18x64xf32>
    %6 = tpu.matmul %4, %5, %cst {dimension_numbers = #tpu.dot_dimension_numbers<[1], [0], [0], [1], [0, 0, 1, 1], [], []>} : vector<18x64xbf16>, vector<64x64xbf16>, vector<18x64xf32> -> vector<18x64xf32>
    %7 = arith.addf %3, %6 : vector<18x64xf32>
    %c0_6 = arith.constant 0 : index
    %c0_7 = arith.constant 0 : index
    %8 = vector.load %arg9[%c0_6, %c0_7] : memref<18x64xf32, #tpu.memory_space<vmem>>, vector<18x64xf32>
    tpu.vector_store %arg9[%c0_6, %c0_7], %7 {strides = array<i32>} : memref<18x64xf32, #tpu.memory_space<vmem>>, vector<18x64xf32>,
    %c0_i32_8 = arith.constant 0 : i32
    %9 = arith.cmpi eq, %arg1, %c0_i32_8 : i32
    %10 = arith.extui %9 : i1 to i32
    %c0_i32_9 = arith.constant 0 : i32
    %11 = arith.cmpi ne, %10, %c0_i32_9 : i32
    scf.if %11 {
      %c0_10 = arith.constant 0 : index
      %c0_11 = arith.constant 0 : index
      %12 = vector.load %arg9[%c0_10, %c0_11] : memref<18x64xf32, #tpu.memory_space<vmem>>, vector<18x64xf32>
      %c0_12 = arith.constant 0 : index
      %c0_13 = arith.constant 0 : index
      %13 = vector.load %arg4[%c0_12, %c0_13] : memref<1x64xf32, #tpu.memory_space<vmem>>, vector<1x64xf32>
      %14 = vector.broadcast %13 : vector<1x64xf32> to vector<18x64xf32>
      %15 = arith.addf %12, %14 : vector<18x64xf32>
      %c0_14 = arith.constant 0 : index
      %c0_15 = arith.constant 0 : index
      %16 = vector.load %arg5[%c0_14, %c0_15] : memref<18x64xbf16, #tpu.memory_space<vmem>>, vector<18x64xbf16>
      %17 = arith.extf %16 : vector<18x64xbf16> to vector<18x64xf32>
      %18 = arith.addf %15, %17 : vector<18x64xf32>
      %cst_16 = arith.constant dense<0.000000e+00> : vector<18xf32>
      %19 = vector.multi_reduction <add>, %18, %cst_16 [1] : vector<18x64xf32> to vector<18xf32>
      %20 = vector.shape_cast %19 : vector<18xf32> to vector<18x1xf32>
      %cst_17 = arith.constant 6.400000e+01 : f32
      %21 = vector.broadcast %cst_17 : f32 to vector<18x1xf32>
      %22 = arith.divf %20, %21 : vector<18x1xf32>
      %23 = vector.broadcast %22 : vector<18x1xf32> to vector<18x64xf32>
      %24 = arith.subf %18, %23 : vector<18x64xf32>
      %25 = arith.mulf %24, %24 : vector<18x64xf32>
      %cst_18 = arith.constant dense<0.000000e+00> : vector<18xf32>
      %26 = vector.multi_reduction <add>, %25, %cst_18 [1] : vector<18x64xf32> to vector<18xf32>
      %27 = vector.shape_cast %26 : vector<18xf32> to vector<18x1xf32>
      %cst_19 = arith.constant 6.400000e+01 : f32
      %28 = vector.broadcast %cst_19 : f32 to vector<18x1xf32>
      %29 = arith.divf %27, %28 : vector<18x1xf32>
      %cst_20 = arith.constant 9.99999974E-6 : f32
      %30 = vector.broadcast %cst_20 : f32 to vector<18x1xf32>
      %31 = arith.addf %29, %30 : vector<18x1xf32>
      %32 = math.rsqrt %31 : vector<18x1xf32>
      %33 = vector.broadcast %32 : vector<18x1xf32> to vector<18x64xf32>
      %34 = arith.mulf %24, %33 : vector<18x64xf32>
      %c0_21 = arith.constant 0 : index
      %c0_22 = arith.constant 0 : index
      %35 = vector.load %arg6[%c0_21, %c0_22] : memref<1x64xf32, #tpu.memory_space<vmem>>, vector<1x64xf32>
      %36 = vector.broadcast %35 : vector<1x64xf32> to vector<18x64xf32>
      %37 = arith.mulf %34, %36 : vector<18x64xf32>
      %c0_23 = arith.constant 0 : index
      %c0_24 = arith.constant 0 : index
      %38 = vector.load %arg7[%c0_23, %c0_24] : memref<1x64xf32, #tpu.memory_space<vmem>>, vector<1x64xf32>
      %39 = vector.broadcast %38 : vector<1x64xf32> to vector<18x64xf32>
      %40 = arith.addf %37, %39 : vector<18x64xf32>
      %41 = arith.truncf %40 : vector<18x64xf32> to vector<18x64xbf16>
      %c0_25 = arith.constant 0 : index
      %c0_26 = arith.constant 0 : index
      %42 = vector.load %arg8[%c0_25, %c0_26] : memref<18x64xbf16, #tpu.memory_space<vmem>>, vector<18x64xbf16>
      tpu.vector_store %arg8[%c0_25, %c0_26], %41 {strides = array<i32>} : memref<18x64xbf16, #tpu.memory_space<vmem>>, vector<18x64xbf16>,
    } else {
    }
    return
  }
  func.func @transform_0(%arg0: i32, %arg1: i32) -> (i32, i32) {
    %c0_i32 = arith.constant 0 : i32
    return %arg0, %arg1 : i32, i32
  }
  func.func @transform_1(%arg0: i32, %arg1: i32) -> (i32, i32) {
    %c0_i32 = arith.constant 0 : i32
    %c0_i32_0 = arith.constant 0 : i32
    return %arg1, %c0_i32 : i32, i32
  }
  func.func @transform_2(%arg0: i32, %arg1: i32) -> (i32, i32) {
    %c0_i32 = arith.constant 0 : i32
    %c0_i32_0 = arith.constant 0 : i32
    %c0_i32_1 = arith.constant 0 : i32
    return %c0_i32, %c0_i32_0 : i32, i32
  }
  func.func @transform_3(%arg0: i32, %arg1: i32) -> (i32, i32) {
    %c0_i32 = arith.constant 0 : i32
    %c0_i32_0 = arith.constant 0 : i32
    return %arg0, %c0_i32 : i32, i32
  }
  func.func @transform_4(%arg0: i32, %arg1: i32) -> (i32, i32) {
    %c0_i32 = arith.constant 0 : i32
    %c0_i32_0 = arith.constant 0 : i32
    %c0_i32_1 = arith.constant 0 : i32
    return %c0_i32, %c0_i32_0 : i32, i32
  }
  func.func @transform_5(%arg0: i32, %arg1: i32) -> (i32, i32) {
    %c0_i32 = arith.constant 0 : i32
    %c0_i32_0 = arith.constant 0 : i32
    %c0_i32_1 = arith.constant 0 : i32
    return %c0_i32, %c0_i32_0 : i32, i32
  }
  func.func @transform_6(%arg0: i32, %arg1: i32) -> (i32, i32) {
    %c0_i32 = arith.constant 0 : i32
    %c0_i32_0 = arith.constant 0 : i32
    return %arg0, %c0_i32 : i32, i32
  }
}

module attributes {stable_mosaic.version = 11 : i64} {
  func.func @_matmul_bias_kernel(%arg0: i32, %arg1: i32, %arg2: memref<18x64xbf16, #tpu.memory_space<vmem>>, %arg3: memref<64x192xbf16, #tpu.memory_space<vmem>>, %arg4: memref<1x192xf32, #tpu.memory_space<vmem>>, %arg5: memref<18x192xbf16, #tpu.memory_space<vmem>>) attributes {dimension_semantics = [#tpu.dimension_semantics<parallel>, #tpu.dimension_semantics<parallel>], iteration_bounds = array<i64: 1, 1>, scalar_prefetch = 0 : i64, scratch_operands = 0 : i64, tpu.core_type = #tpu.core_type<tc>, window_params = [{transform_indices = @transform_0, window_bounds = array<i64: 18, 64>}, {transform_indices = @transform_1, window_bounds = array<i64: 64, 192>}, {transform_indices = @transform_2, window_bounds = array<i64: 1, 192>}, {transform_indices = @transform_3, window_bounds = array<i64: 18, 192>}]} {
    %c0 = arith.constant 0 : index
    %c0_0 = arith.constant 0 : index
    %0 = vector.load %arg2[%c0, %c0_0] : memref<18x64xbf16, #tpu.memory_space<vmem>>, vector<18x64xbf16>
    %c0_1 = arith.constant 0 : index
    %c0_2 = arith.constant 0 : index
    %1 = vector.load %arg3[%c0_1, %c0_2] : memref<64x192xbf16, #tpu.memory_space<vmem>>, vector<64x192xbf16>
    %cst = arith.constant dense<0.000000e+00> : vector<18x192xf32>
    %2 = tpu.matmul %0, %1, %cst {dimension_numbers = #tpu.dot_dimension_numbers<[1], [0], [0], [1], [0, 0, 1, 1], [], []>} : vector<18x64xbf16>, vector<64x192xbf16>, vector<18x192xf32> -> vector<18x192xf32>
    %c0_3 = arith.constant 0 : index
    %c0_4 = arith.constant 0 : index
    %3 = vector.load %arg4[%c0_3, %c0_4] : memref<1x192xf32, #tpu.memory_space<vmem>>, vector<1x192xf32>
    %4 = vector.broadcast %3 : vector<1x192xf32> to vector<18x192xf32>
    %5 = arith.addf %2, %4 : vector<18x192xf32>
    %6 = arith.truncf %5 : vector<18x192xf32> to vector<18x192xbf16>
    %c0_5 = arith.constant 0 : index
    %c0_6 = arith.constant 0 : index
    %7 = vector.load %arg5[%c0_5, %c0_6] : memref<18x192xbf16, #tpu.memory_space<vmem>>, vector<18x192xbf16>
    tpu.vector_store %arg5[%c0_5, %c0_6], %6 {strides = array<i32>} : memref<18x192xbf16, #tpu.memory_space<vmem>>, vector<18x192xbf16>,
    return
  }
  func.func @transform_0(%arg0: i32, %arg1: i32) -> (i32, i32) {
    %c0_i32 = arith.constant 0 : i32
    %c0_i32_0 = arith.constant 0 : i32
    return %arg0, %c0_i32 : i32, i32
  }
  func.func @transform_1(%arg0: i32, %arg1: i32) -> (i32, i32) {
    %c0_i32 = arith.constant 0 : i32
    %c0_i32_0 = arith.constant 0 : i32
    return %c0_i32, %arg1 : i32, i32
  }
  func.func @transform_2(%arg0: i32, %arg1: i32) -> (i32, i32) {
    %c0_i32 = arith.constant 0 : i32
    %c0_i32_0 = arith.constant 0 : i32
    return %c0_i32, %arg1 : i32, i32
  }
  func.func @transform_3(%arg0: i32, %arg1: i32) -> (i32, i32) {
    %c0_i32 = arith.constant 0 : i32
    return %arg0, %arg1 : i32, i32
  }
}

module attributes {stable_mosaic.version = 11 : i64} {
  func.func @_attention_kernel(%arg0: i32, %arg1: memref<2x9x192xbf16, #tpu.memory_space<vmem>>, %arg2: memref<2x9x64xbf16, #tpu.memory_space<vmem>>) attributes {dimension_semantics = [#tpu.dimension_semantics<parallel>], iteration_bounds = array<i64: 1>, scalar_prefetch = 0 : i64, scratch_operands = 0 : i64, tpu.core_type = #tpu.core_type<tc>, window_params = [{transform_indices = @transform_0, window_bounds = array<i64: 2, 9, 192>}, {transform_indices = @transform_1, window_bounds = array<i64: 2, 9, 64>}]} {
    %c0 = arith.constant 0 : index
    %c0_0 = arith.constant 0 : index
    %c0_1 = arith.constant 0 : index
    %0 = vector.load %arg1[%c0, %c0_0, %c0_1] : memref<2x9x192xbf16, #tpu.memory_space<vmem>>, vector<2x9x8xbf16>
    %c0_2 = arith.constant 0 : index
    %c0_3 = arith.constant 0 : index
    %c64 = arith.constant 64 : index
    %1 = vector.load %arg1[%c0_2, %c0_3, %c64] : memref<2x9x192xbf16, #tpu.memory_space<vmem>>, vector<2x9x8xbf16>
    %c0_4 = arith.constant 0 : index
    %c0_5 = arith.constant 0 : index
    %c128 = arith.constant 128 : index
    %2 = vector.load %arg1[%c0_4, %c0_5, %c128] : memref<2x9x192xbf16, #tpu.memory_space<vmem>>, vector<2x9x8xbf16>
    %cst = arith.constant dense<0.000000e+00> : vector<2x9x9xf32>
    %3 = tpu.matmul %0, %1, %cst {dimension_numbers = #tpu.dot_dimension_numbers<[2], [2], [1], [1], [0, 0, 0, 1, 1, 1], [0], [0]>} : vector<2x9x8xbf16>, vector<2x9x8xbf16>, vector<2x9x9xf32> -> vector<2x9x9xf32>
    %cst_6 = arith.constant dense<0xFF800000> : vector<2x9xf32>
    %4 = vector.multi_reduction <maximumf>, %3, %cst_6 [2] : vector<2x9x9xf32> to vector<2x9xf32>
    %5 = vector.shape_cast %4 : vector<2x9xf32> to vector<2x9x1xf32>
    %6 = vector.broadcast %5 : vector<2x9x1xf32> to vector<2x9x9xf32>
    %7 = arith.subf %3, %6 : vector<2x9x9xf32>
    %8 = math.exp %7 : vector<2x9x9xf32>
    %cst_7 = arith.constant dense<0.000000e+00> : vector<2x9xf32>
    %9 = vector.multi_reduction <add>, %8, %cst_7 [2] : vector<2x9x9xf32> to vector<2x9xf32>
    %10 = vector.shape_cast %9 : vector<2x9xf32> to vector<2x9x1xf32>
    %11 = tpu.reciprocal %10 {approx = true} : vector<2x9x1xf32> -> vector<2x9x1xf32>
    %12 = vector.broadcast %11 : vector<2x9x1xf32> to vector<2x9x9xf32>
    %13 = arith.mulf %8, %12 : vector<2x9x9xf32>
    %14 = arith.truncf %13 : vector<2x9x9xf32> to vector<2x9x9xbf16>
    %cst_8 = arith.constant dense<0.000000e+00> : vector<2x9x8xf32>
    %15 = tpu.matmul %14, %2, %cst_8 {dimension_numbers = #tpu.dot_dimension_numbers<[2], [1], [1], [2], [0, 0, 0, 1, 1, 2], [0], [0]>} : vector<2x9x9xbf16>, vector<2x9x8xbf16>, vector<2x9x8xf32> -> vector<2x9x8xf32>
    %16 = arith.truncf %15 : vector<2x9x8xf32> to vector<2x9x8xbf16>
    %c0_9 = arith.constant 0 : index
    %c0_10 = arith.constant 0 : index
    %c0_11 = arith.constant 0 : index
    %17 = vector.load %arg2[%c0_9, %c0_10, %c0_11] : memref<2x9x64xbf16, #tpu.memory_space<vmem>>, vector<2x9x8xbf16>
    tpu.vector_store %arg2[%c0_9, %c0_10, %c0_11], %16 {strides = array<i32>} : memref<2x9x64xbf16, #tpu.memory_space<vmem>>, vector<2x9x8xbf16>,
    %c0_12 = arith.constant 0 : index
    %c0_13 = arith.constant 0 : index
    %c8 = arith.constant 8 : index
    %18 = vector.load %arg1[%c0_12, %c0_13, %c8] : memref<2x9x192xbf16, #tpu.memory_space<vmem>>, vector<2x9x8xbf16>
    %c0_14 = arith.constant 0 : index
    %c0_15 = arith.constant 0 : index
    %c72 = arith.constant 72 : index
    %19 = vector.load %arg1[%c0_14, %c0_15, %c72] : memref<2x9x192xbf16, #tpu.memory_space<vmem>>, vector<2x9x8xbf16>
    %c0_16 = arith.constant 0 : index
    %c0_17 = arith.constant 0 : index
    %c136 = arith.constant 136 : index
    %20 = vector.load %arg1[%c0_16, %c0_17, %c136] : memref<2x9x192xbf16, #tpu.memory_space<vmem>>, vector<2x9x8xbf16>
    %cst_18 = arith.constant dense<0.000000e+00> : vector<2x9x9xf32>
    %21 = tpu.matmul %18, %19, %cst_18 {dimension_numbers = #tpu.dot_dimension_numbers<[2], [2], [1], [1], [0, 0, 0, 1, 1, 1], [0], [0]>} : vector<2x9x8xbf16>, vector<2x9x8xbf16>, vector<2x9x9xf32> -> vector<2x9x9xf32>
    %cst_19 = arith.constant dense<0xFF800000> : vector<2x9xf32>
    %22 = vector.multi_reduction <maximumf>, %21, %cst_19 [2] : vector<2x9x9xf32> to vector<2x9xf32>
    %23 = vector.shape_cast %22 : vector<2x9xf32> to vector<2x9x1xf32>
    %24 = vector.broadcast %23 : vector<2x9x1xf32> to vector<2x9x9xf32>
    %25 = arith.subf %21, %24 : vector<2x9x9xf32>
    %26 = math.exp %25 : vector<2x9x9xf32>
    %cst_20 = arith.constant dense<0.000000e+00> : vector<2x9xf32>
    %27 = vector.multi_reduction <add>, %26, %cst_20 [2] : vector<2x9x9xf32> to vector<2x9xf32>
    %28 = vector.shape_cast %27 : vector<2x9xf32> to vector<2x9x1xf32>
    %29 = tpu.reciprocal %28 {approx = true} : vector<2x9x1xf32> -> vector<2x9x1xf32>
    %30 = vector.broadcast %29 : vector<2x9x1xf32> to vector<2x9x9xf32>
    %31 = arith.mulf %26, %30 : vector<2x9x9xf32>
    %32 = arith.truncf %31 : vector<2x9x9xf32> to vector<2x9x9xbf16>
    %cst_21 = arith.constant dense<0.000000e+00> : vector<2x9x8xf32>
    %33 = tpu.matmul %32, %20, %cst_21 {dimension_numbers = #tpu.dot_dimension_numbers<[2], [1], [1], [2], [0, 0, 0, 1, 1, 2], [0], [0]>} : vector<2x9x9xbf16>, vector<2x9x8xbf16>, vector<2x9x8xf32> -> vector<2x9x8xf32>
    %34 = arith.truncf %33 : vector<2x9x8xf32> to vector<2x9x8xbf16>
    %c0_22 = arith.constant 0 : index
    %c0_23 = arith.constant 0 : index
    %c8_24 = arith.constant 8 : index
    %35 = vector.load %arg2[%c0_22, %c0_23, %c8_24] : memref<2x9x64xbf16, #tpu.memory_space<vmem>>, vector<2x9x8xbf16>
    tpu.vector_store %arg2[%c0_22, %c0_23, %c8_24], %34 {strides = array<i32>} : memref<2x9x64xbf16, #tpu.memory_space<vmem>>, vector<2x9x8xbf16>,
    %c0_25 = arith.constant 0 : index
    %c0_26 = arith.constant 0 : index
    %c16 = arith.constant 16 : index
    %36 = vector.load %arg1[%c0_25, %c0_26, %c16] : memref<2x9x192xbf16, #tpu.memory_space<vmem>>, vector<2x9x8xbf16>
    %c0_27 = arith.constant 0 : index
    %c0_28 = arith.constant 0 : index
    %c80 = arith.constant 80 : index
    %37 = vector.load %arg1[%c0_27, %c0_28, %c80] : memref<2x9x192xbf16, #tpu.memory_space<vmem>>, vector<2x9x8xbf16>
    %c0_29 = arith.constant 0 : index
    %c0_30 = arith.constant 0 : index
    %c144 = arith.constant 144 : index
    %38 = vector.load %arg1[%c0_29, %c0_30, %c144] : memref<2x9x192xbf16, #tpu.memory_space<vmem>>, vector<2x9x8xbf16>
    %cst_31 = arith.constant dense<0.000000e+00> : vector<2x9x9xf32>
    %39 = tpu.matmul %36, %37, %cst_31 {dimension_numbers = #tpu.dot_dimension_numbers<[2], [2], [1], [1], [0, 0, 0, 1, 1, 1], [0], [0]>} : vector<2x9x8xbf16>, vector<2x9x8xbf16>, vector<2x9x9xf32> -> vector<2x9x9xf32>
    %cst_32 = arith.constant dense<0xFF800000> : vector<2x9xf32>
    %40 = vector.multi_reduction <maximumf>, %39, %cst_32 [2] : vector<2x9x9xf32> to vector<2x9xf32>
    %41 = vector.shape_cast %40 : vector<2x9xf32> to vector<2x9x1xf32>
    %42 = vector.broadcast %41 : vector<2x9x1xf32> to vector<2x9x9xf32>
    %43 = arith.subf %39, %42 : vector<2x9x9xf32>
    %44 = math.exp %43 : vector<2x9x9xf32>
    %cst_33 = arith.constant dense<0.000000e+00> : vector<2x9xf32>
    %45 = vector.multi_reduction <add>, %44, %cst_33 [2] : vector<2x9x9xf32> to vector<2x9xf32>
    %46 = vector.shape_cast %45 : vector<2x9xf32> to vector<2x9x1xf32>
    %47 = tpu.reciprocal %46 {approx = true} : vector<2x9x1xf32> -> vector<2x9x1xf32>
    %48 = vector.broadcast %47 : vector<2x9x1xf32> to vector<2x9x9xf32>
    %49 = arith.mulf %44, %48 : vector<2x9x9xf32>
    %50 = arith.truncf %49 : vector<2x9x9xf32> to vector<2x9x9xbf16>
    %cst_34 = arith.constant dense<0.000000e+00> : vector<2x9x8xf32>
    %51 = tpu.matmul %50, %38, %cst_34 {dimension_numbers = #tpu.dot_dimension_numbers<[2], [1], [1], [2], [0, 0, 0, 1, 1, 2], [0], [0]>} : vector<2x9x9xbf16>, vector<2x9x8xbf16>, vector<2x9x8xf32> -> vector<2x9x8xf32>
    %52 = arith.truncf %51 : vector<2x9x8xf32> to vector<2x9x8xbf16>
    %c0_35 = arith.constant 0 : index
    %c0_36 = arith.constant 0 : index
    %c16_37 = arith.constant 16 : index
    %53 = vector.load %arg2[%c0_35, %c0_36, %c16_37] : memref<2x9x64xbf16, #tpu.memory_space<vmem>>, vector<2x9x8xbf16>
    tpu.vector_store %arg2[%c0_35, %c0_36, %c16_37], %52 {strides = array<i32>} : memref<2x9x64xbf16, #tpu.memory_space<vmem>>, vector<2x9x8xbf16>,
    %c0_38 = arith.constant 0 : index
    %c0_39 = arith.constant 0 : index
    %c24 = arith.constant 24 : index
    %54 = vector.load %arg1[%c0_38, %c0_39, %c24] : memref<2x9x192xbf16, #tpu.memory_space<vmem>>, vector<2x9x8xbf16>
    %c0_40 = arith.constant 0 : index
    %c0_41 = arith.constant 0 : index
    %c88 = arith.constant 88 : index
    %55 = vector.load %arg1[%c0_40, %c0_41, %c88] : memref<2x9x192xbf16, #tpu.memory_space<vmem>>, vector<2x9x8xbf16>
    %c0_42 = arith.constant 0 : index
    %c0_43 = arith.constant 0 : index
    %c152 = arith.constant 152 : index
    %56 = vector.load %arg1[%c0_42, %c0_43, %c152] : memref<2x9x192xbf16, #tpu.memory_space<vmem>>, vector<2x9x8xbf16>
    %cst_44 = arith.constant dense<0.000000e+00> : vector<2x9x9xf32>
    %57 = tpu.matmul %54, %55, %cst_44 {dimension_numbers = #tpu.dot_dimension_numbers<[2], [2], [1], [1], [0, 0, 0, 1, 1, 1], [0], [0]>} : vector<2x9x8xbf16>, vector<2x9x8xbf16>, vector<2x9x9xf32> -> vector<2x9x9xf32>
    %cst_45 = arith.constant dense<0xFF800000> : vector<2x9xf32>
    %58 = vector.multi_reduction <maximumf>, %57, %cst_45 [2] : vector<2x9x9xf32> to vector<2x9xf32>
    %59 = vector.shape_cast %58 : vector<2x9xf32> to vector<2x9x1xf32>
    %60 = vector.broadcast %59 : vector<2x9x1xf32> to vector<2x9x9xf32>
    %61 = arith.subf %57, %60 : vector<2x9x9xf32>
    %62 = math.exp %61 : vector<2x9x9xf32>
    %cst_46 = arith.constant dense<0.000000e+00> : vector<2x9xf32>
    %63 = vector.multi_reduction <add>, %62, %cst_46 [2] : vector<2x9x9xf32> to vector<2x9xf32>
    %64 = vector.shape_cast %63 : vector<2x9xf32> to vector<2x9x1xf32>
    %65 = tpu.reciprocal %64 {approx = true} : vector<2x9x1xf32> -> vector<2x9x1xf32>
    %66 = vector.broadcast %65 : vector<2x9x1xf32> to vector<2x9x9xf32>
    %67 = arith.mulf %62, %66 : vector<2x9x9xf32>
    %68 = arith.truncf %67 : vector<2x9x9xf32> to vector<2x9x9xbf16>
    %cst_47 = arith.constant dense<0.000000e+00> : vector<2x9x8xf32>
    %69 = tpu.matmul %68, %56, %cst_47 {dimension_numbers = #tpu.dot_dimension_numbers<[2], [1], [1], [2], [0, 0, 0, 1, 1, 2], [0], [0]>} : vector<2x9x9xbf16>, vector<2x9x8xbf16>, vector<2x9x8xf32> -> vector<2x9x8xf32>
    %70 = arith.truncf %69 : vector<2x9x8xf32> to vector<2x9x8xbf16>
    %c0_48 = arith.constant 0 : index
    %c0_49 = arith.constant 0 : index
    %c24_50 = arith.constant 24 : index
    %71 = vector.load %arg2[%c0_48, %c0_49, %c24_50] : memref<2x9x64xbf16, #tpu.memory_space<vmem>>, vector<2x9x8xbf16>
    tpu.vector_store %arg2[%c0_48, %c0_49, %c24_50], %70 {strides = array<i32>} : memref<2x9x64xbf16, #tpu.memory_space<vmem>>, vector<2x9x8xbf16>,
    %c0_51 = arith.constant 0 : index
    %c0_52 = arith.constant 0 : index
    %c32 = arith.constant 32 : index
    %72 = vector.load %arg1[%c0_51, %c0_52, %c32] : memref<2x9x192xbf16, #tpu.memory_space<vmem>>, vector<2x9x8xbf16>
    %c0_53 = arith.constant 0 : index
    %c0_54 = arith.constant 0 : index
    %c96 = arith.constant 96 : index
    %73 = vector.load %arg1[%c0_53, %c0_54, %c96] : memref<2x9x192xbf16, #tpu.memory_space<vmem>>, vector<2x9x8xbf16>
    %c0_55 = arith.constant 0 : index
    %c0_56 = arith.constant 0 : index
    %c160 = arith.constant 160 : index
    %74 = vector.load %arg1[%c0_55, %c0_56, %c160] : memref<2x9x192xbf16, #tpu.memory_space<vmem>>, vector<2x9x8xbf16>
    %cst_57 = arith.constant dense<0.000000e+00> : vector<2x9x9xf32>
    %75 = tpu.matmul %72, %73, %cst_57 {dimension_numbers = #tpu.dot_dimension_numbers<[2], [2], [1], [1], [0, 0, 0, 1, 1, 1], [0], [0]>} : vector<2x9x8xbf16>, vector<2x9x8xbf16>, vector<2x9x9xf32> -> vector<2x9x9xf32>
    %cst_58 = arith.constant dense<0xFF800000> : vector<2x9xf32>
    %76 = vector.multi_reduction <maximumf>, %75, %cst_58 [2] : vector<2x9x9xf32> to vector<2x9xf32>
    %77 = vector.shape_cast %76 : vector<2x9xf32> to vector<2x9x1xf32>
    %78 = vector.broadcast %77 : vector<2x9x1xf32> to vector<2x9x9xf32>
    %79 = arith.subf %75, %78 : vector<2x9x9xf32>
    %80 = math.exp %79 : vector<2x9x9xf32>
    %cst_59 = arith.constant dense<0.000000e+00> : vector<2x9xf32>
    %81 = vector.multi_reduction <add>, %80, %cst_59 [2] : vector<2x9x9xf32> to vector<2x9xf32>
    %82 = vector.shape_cast %81 : vector<2x9xf32> to vector<2x9x1xf32>
    %83 = tpu.reciprocal %82 {approx = true} : vector<2x9x1xf32> -> vector<2x9x1xf32>
    %84 = vector.broadcast %83 : vector<2x9x1xf32> to vector<2x9x9xf32>
    %85 = arith.mulf %80, %84 : vector<2x9x9xf32>
    %86 = arith.truncf %85 : vector<2x9x9xf32> to vector<2x9x9xbf16>
    %cst_60 = arith.constant dense<0.000000e+00> : vector<2x9x8xf32>
    %87 = tpu.matmul %86, %74, %cst_60 {dimension_numbers = #tpu.dot_dimension_numbers<[2], [1], [1], [2], [0, 0, 0, 1, 1, 2], [0], [0]>} : vector<2x9x9xbf16>, vector<2x9x8xbf16>, vector<2x9x8xf32> -> vector<2x9x8xf32>
    %88 = arith.truncf %87 : vector<2x9x8xf32> to vector<2x9x8xbf16>
    %c0_61 = arith.constant 0 : index
    %c0_62 = arith.constant 0 : index
    %c32_63 = arith.constant 32 : index
    %89 = vector.load %arg2[%c0_61, %c0_62, %c32_63] : memref<2x9x64xbf16, #tpu.memory_space<vmem>>, vector<2x9x8xbf16>
    tpu.vector_store %arg2[%c0_61, %c0_62, %c32_63], %88 {strides = array<i32>} : memref<2x9x64xbf16, #tpu.memory_space<vmem>>, vector<2x9x8xbf16>,
    %c0_64 = arith.constant 0 : index
    %c0_65 = arith.constant 0 : index
    %c40 = arith.constant 40 : index
    %90 = vector.load %arg1[%c0_64, %c0_65, %c40] : memref<2x9x192xbf16, #tpu.memory_space<vmem>>, vector<2x9x8xbf16>
    %c0_66 = arith.constant 0 : index
    %c0_67 = arith.constant 0 : index
    %c104 = arith.constant 104 : index
    %91 = vector.load %arg1[%c0_66, %c0_67, %c104] : memref<2x9x192xbf16, #tpu.memory_space<vmem>>, vector<2x9x8xbf16>
    %c0_68 = arith.constant 0 : index
    %c0_69 = arith.constant 0 : index
    %c168 = arith.constant 168 : index
    %92 = vector.load %arg1[%c0_68, %c0_69, %c168] : memref<2x9x192xbf16, #tpu.memory_space<vmem>>, vector<2x9x8xbf16>
    %cst_70 = arith.constant dense<0.000000e+00> : vector<2x9x9xf32>
    %93 = tpu.matmul %90, %91, %cst_70 {dimension_numbers = #tpu.dot_dimension_numbers<[2], [2], [1], [1], [0, 0, 0, 1, 1, 1], [0], [0]>} : vector<2x9x8xbf16>, vector<2x9x8xbf16>, vector<2x9x9xf32> -> vector<2x9x9xf32>
    %cst_71 = arith.constant dense<0xFF800000> : vector<2x9xf32>
    %94 = vector.multi_reduction <maximumf>, %93, %cst_71 [2] : vector<2x9x9xf32> to vector<2x9xf32>
    %95 = vector.shape_cast %94 : vector<2x9xf32> to vector<2x9x1xf32>
    %96 = vector.broadcast %95 : vector<2x9x1xf32> to vector<2x9x9xf32>
    %97 = arith.subf %93, %96 : vector<2x9x9xf32>
    %98 = math.exp %97 : vector<2x9x9xf32>
    %cst_72 = arith.constant dense<0.000000e+00> : vector<2x9xf32>
    %99 = vector.multi_reduction <add>, %98, %cst_72 [2] : vector<2x9x9xf32> to vector<2x9xf32>
    %100 = vector.shape_cast %99 : vector<2x9xf32> to vector<2x9x1xf32>
    %101 = tpu.reciprocal %100 {approx = true} : vector<2x9x1xf32> -> vector<2x9x1xf32>
    %102 = vector.broadcast %101 : vector<2x9x1xf32> to vector<2x9x9xf32>
    %103 = arith.mulf %98, %102 : vector<2x9x9xf32>
    %104 = arith.truncf %103 : vector<2x9x9xf32> to vector<2x9x9xbf16>
    %cst_73 = arith.constant dense<0.000000e+00> : vector<2x9x8xf32>
    %105 = tpu.matmul %104, %92, %cst_73 {dimension_numbers = #tpu.dot_dimension_numbers<[2], [1], [1], [2], [0, 0, 0, 1, 1, 2], [0], [0]>} : vector<2x9x9xbf16>, vector<2x9x8xbf16>, vector<2x9x8xf32> -> vector<2x9x8xf32>
    %106 = arith.truncf %105 : vector<2x9x8xf32> to vector<2x9x8xbf16>
    %c0_74 = arith.constant 0 : index
    %c0_75 = arith.constant 0 : index
    %c40_76 = arith.constant 40 : index
    %107 = vector.load %arg2[%c0_74, %c0_75, %c40_76] : memref<2x9x64xbf16, #tpu.memory_space<vmem>>, vector<2x9x8xbf16>
    tpu.vector_store %arg2[%c0_74, %c0_75, %c40_76], %106 {strides = array<i32>} : memref<2x9x64xbf16, #tpu.memory_space<vmem>>, vector<2x9x8xbf16>,
    %c0_77 = arith.constant 0 : index
    %c0_78 = arith.constant 0 : index
    %c48 = arith.constant 48 : index
    %108 = vector.load %arg1[%c0_77, %c0_78, %c48] : memref<2x9x192xbf16, #tpu.memory_space<vmem>>, vector<2x9x8xbf16>
    %c0_79 = arith.constant 0 : index
    %c0_80 = arith.constant 0 : index
    %c112 = arith.constant 112 : index
    %109 = vector.load %arg1[%c0_79, %c0_80, %c112] : memref<2x9x192xbf16, #tpu.memory_space<vmem>>, vector<2x9x8xbf16>
    %c0_81 = arith.constant 0 : index
    %c0_82 = arith.constant 0 : index
    %c176 = arith.constant 176 : index
    %110 = vector.load %arg1[%c0_81, %c0_82, %c176] : memref<2x9x192xbf16, #tpu.memory_space<vmem>>, vector<2x9x8xbf16>
    %cst_83 = arith.constant dense<0.000000e+00> : vector<2x9x9xf32>
    %111 = tpu.matmul %108, %109, %cst_83 {dimension_numbers = #tpu.dot_dimension_numbers<[2], [2], [1], [1], [0, 0, 0, 1, 1, 1], [0], [0]>} : vector<2x9x8xbf16>, vector<2x9x8xbf16>, vector<2x9x9xf32> -> vector<2x9x9xf32>
    %cst_84 = arith.constant dense<0xFF800000> : vector<2x9xf32>
    %112 = vector.multi_reduction <maximumf>, %111, %cst_84 [2] : vector<2x9x9xf32> to vector<2x9xf32>
    %113 = vector.shape_cast %112 : vector<2x9xf32> to vector<2x9x1xf32>
    %114 = vector.broadcast %113 : vector<2x9x1xf32> to vector<2x9x9xf32>
    %115 = arith.subf %111, %114 : vector<2x9x9xf32>
    %116 = math.exp %115 : vector<2x9x9xf32>
    %cst_85 = arith.constant dense<0.000000e+00> : vector<2x9xf32>
    %117 = vector.multi_reduction <add>, %116, %cst_85 [2] : vector<2x9x9xf32> to vector<2x9xf32>
    %118 = vector.shape_cast %117 : vector<2x9xf32> to vector<2x9x1xf32>
    %119 = tpu.reciprocal %118 {approx = true} : vector<2x9x1xf32> -> vector<2x9x1xf32>
    %120 = vector.broadcast %119 : vector<2x9x1xf32> to vector<2x9x9xf32>
    %121 = arith.mulf %116, %120 : vector<2x9x9xf32>
    %122 = arith.truncf %121 : vector<2x9x9xf32> to vector<2x9x9xbf16>
    %cst_86 = arith.constant dense<0.000000e+00> : vector<2x9x8xf32>
    %123 = tpu.matmul %122, %110, %cst_86 {dimension_numbers = #tpu.dot_dimension_numbers<[2], [1], [1], [2], [0, 0, 0, 1, 1, 2], [0], [0]>} : vector<2x9x9xbf16>, vector<2x9x8xbf16>, vector<2x9x8xf32> -> vector<2x9x8xf32>
    %124 = arith.truncf %123 : vector<2x9x8xf32> to vector<2x9x8xbf16>
    %c0_87 = arith.constant 0 : index
    %c0_88 = arith.constant 0 : index
    %c48_89 = arith.constant 48 : index
    %125 = vector.load %arg2[%c0_87, %c0_88, %c48_89] : memref<2x9x64xbf16, #tpu.memory_space<vmem>>, vector<2x9x8xbf16>
    tpu.vector_store %arg2[%c0_87, %c0_88, %c48_89], %124 {strides = array<i32>} : memref<2x9x64xbf16, #tpu.memory_space<vmem>>, vector<2x9x8xbf16>,
    %c0_90 = arith.constant 0 : index
    %c0_91 = arith.constant 0 : index
    %c56 = arith.constant 56 : index
    %126 = vector.load %arg1[%c0_90, %c0_91, %c56] : memref<2x9x192xbf16, #tpu.memory_space<vmem>>, vector<2x9x8xbf16>
    %c0_92 = arith.constant 0 : index
    %c0_93 = arith.constant 0 : index
    %c120 = arith.constant 120 : index
    %127 = vector.load %arg1[%c0_92, %c0_93, %c120] : memref<2x9x192xbf16, #tpu.memory_space<vmem>>, vector<2x9x8xbf16>
    %c0_94 = arith.constant 0 : index
    %c0_95 = arith.constant 0 : index
    %c184 = arith.constant 184 : index
    %128 = vector.load %arg1[%c0_94, %c0_95, %c184] : memref<2x9x192xbf16, #tpu.memory_space<vmem>>, vector<2x9x8xbf16>
    %cst_96 = arith.constant dense<0.000000e+00> : vector<2x9x9xf32>
    %129 = tpu.matmul %126, %127, %cst_96 {dimension_numbers = #tpu.dot_dimension_numbers<[2], [2], [1], [1], [0, 0, 0, 1, 1, 1], [0], [0]>} : vector<2x9x8xbf16>, vector<2x9x8xbf16>, vector<2x9x9xf32> -> vector<2x9x9xf32>
    %cst_97 = arith.constant dense<0xFF800000> : vector<2x9xf32>
    %130 = vector.multi_reduction <maximumf>, %129, %cst_97 [2] : vector<2x9x9xf32> to vector<2x9xf32>
    %131 = vector.shape_cast %130 : vector<2x9xf32> to vector<2x9x1xf32>
    %132 = vector.broadcast %131 : vector<2x9x1xf32> to vector<2x9x9xf32>
    %133 = arith.subf %129, %132 : vector<2x9x9xf32>
    %134 = math.exp %133 : vector<2x9x9xf32>
    %cst_98 = arith.constant dense<0.000000e+00> : vector<2x9xf32>
    %135 = vector.multi_reduction <add>, %134, %cst_98 [2] : vector<2x9x9xf32> to vector<2x9xf32>
    %136 = vector.shape_cast %135 : vector<2x9xf32> to vector<2x9x1xf32>
    %137 = tpu.reciprocal %136 {approx = true} : vector<2x9x1xf32> -> vector<2x9x1xf32>
    %138 = vector.broadcast %137 : vector<2x9x1xf32> to vector<2x9x9xf32>
    %139 = arith.mulf %134, %138 : vector<2x9x9xf32>
    %140 = arith.truncf %139 : vector<2x9x9xf32> to vector<2x9x9xbf16>
    %cst_99 = arith.constant dense<0.000000e+00> : vector<2x9x8xf32>
    %141 = tpu.matmul %140, %128, %cst_99 {dimension_numbers = #tpu.dot_dimension_numbers<[2], [1], [1], [2], [0, 0, 0, 1, 1, 2], [0], [0]>} : vector<2x9x9xbf16>, vector<2x9x8xbf16>, vector<2x9x8xf32> -> vector<2x9x8xf32>
    %142 = arith.truncf %141 : vector<2x9x8xf32> to vector<2x9x8xbf16>
    %c0_100 = arith.constant 0 : index
    %c0_101 = arith.constant 0 : index
    %c56_102 = arith.constant 56 : index
    %143 = vector.load %arg2[%c0_100, %c0_101, %c56_102] : memref<2x9x64xbf16, #tpu.memory_space<vmem>>, vector<2x9x8xbf16>
    tpu.vector_store %arg2[%c0_100, %c0_101, %c56_102], %142 {strides = array<i32>} : memref<2x9x64xbf16, #tpu.memory_space<vmem>>, vector<2x9x8xbf16>,
    return
  }
  func.func @transform_0(%arg0: i32) -> (i32, i32, i32) {
    %c0_i32 = arith.constant 0 : i32
    %c0_i32_0 = arith.constant 0 : i32
    %c0_i32_1 = arith.constant 0 : i32
    return %arg0, %c0_i32, %c0_i32_0 : i32, i32, i32
  }
  func.func @transform_1(%arg0: i32) -> (i32, i32, i32) {
    %c0_i32 = arith.constant 0 : i32
    %c0_i32_0 = arith.constant 0 : i32
    %c0_i32_1 = arith.constant 0 : i32
    return %arg0, %c0_i32, %c0_i32_0 : i32, i32, i32
  }
}

module attributes {stable_mosaic.version = 11 : i64} {
  func.func @_ffn_add_ln_kernel(%arg0: i32, %arg1: i32, %arg2: memref<18x64xbf16, #tpu.memory_space<vmem>>, %arg3: memref<64x128xbf16, #tpu.memory_space<vmem>>, %arg4: memref<1x128xf32, #tpu.memory_space<vmem>>, %arg5: memref<128x64xbf16, #tpu.memory_space<vmem>>, %arg6: memref<1x64xf32, #tpu.memory_space<vmem>>, %arg7: memref<1x64xf32, #tpu.memory_space<vmem>>, %arg8: memref<1x64xf32, #tpu.memory_space<vmem>>, %arg9: memref<18x64xbf16, #tpu.memory_space<vmem>>, %arg10: memref<18x64xf32, #tpu.memory_space<vmem>>) attributes {dimension_semantics = [#tpu.dimension_semantics<parallel>, #tpu.dimension_semantics<arbitrary>], iteration_bounds = array<i64: 1, 1>, scalar_prefetch = 0 : i64, scratch_operands = 1 : i64, tpu.core_type = #tpu.core_type<tc>, window_params = [{transform_indices = @transform_0, window_bounds = array<i64: 18, 64>}, {transform_indices = @transform_1, window_bounds = array<i64: 64, 128>}, {transform_indices = @transform_2, window_bounds = array<i64: 1, 128>}, {transform_indices = @transform_3, window_bounds = array<i64: 128, 64>}, {pipeline_mode = #tpu.pipeline_mode<synchronous>, transform_indices = @transform_4, window_bounds = array<i64: 1, 64>}, {pipeline_mode = #tpu.pipeline_mode<synchronous>, transform_indices = @transform_5, window_bounds = array<i64: 1, 64>}, {pipeline_mode = #tpu.pipeline_mode<synchronous>, transform_indices = @transform_6, window_bounds = array<i64: 1, 64>}, {transform_indices = @transform_7, window_bounds = array<i64: 18, 64>}]} {
    %c0_i32 = arith.constant 0 : i32
    %0 = arith.cmpi eq, %arg1, %c0_i32 : i32
    %1 = arith.extui %0 : i1 to i32
    %c0_i32_0 = arith.constant 0 : i32
    %2 = arith.cmpi ne, %1, %c0_i32_0 : i32
    scf.if %2 {
      %cst_16 = arith.constant 0.000000e+00 : f32
      %20 = vector.broadcast %cst_16 : f32 to vector<18x64xf32>
      %c0_17 = arith.constant 0 : index
      %c0_18 = arith.constant 0 : index
      %21 = vector.load %arg10[%c0_17, %c0_18] : memref<18x64xf32, #tpu.memory_space<vmem>>, vector<18x64xf32>
      tpu.vector_store %arg10[%c0_17, %c0_18], %20 {strides = array<i32>} : memref<18x64xf32, #tpu.memory_space<vmem>>, vector<18x64xf32>,
    } else {
    }
    %c0 = arith.constant 0 : index
    %c0_1 = arith.constant 0 : index
    %3 = vector.load %arg2[%c0, %c0_1] : memref<18x64xbf16, #tpu.memory_space<vmem>>, vector<18x64xbf16>
    %c0_2 = arith.constant 0 : index
    %c0_3 = arith.constant 0 : index
    %4 = vector.load %arg3[%c0_2, %c0_3] : memref<64x128xbf16, #tpu.memory_space<vmem>>, vector<64x128xbf16>
    %cst = arith.constant dense<0.000000e+00> : vector<18x128xf32>
    %5 = tpu.matmul %3, %4, %cst {dimension_numbers = #tpu.dot_dimension_numbers<[1], [0], [0], [1], [0, 0, 1, 1], [], []>} : vector<18x64xbf16>, vector<64x128xbf16>, vector<18x128xf32> -> vector<18x128xf32>
    %c0_4 = arith.constant 0 : index
    %c0_5 = arith.constant 0 : index
    %6 = vector.load %arg4[%c0_4, %c0_5] : memref<1x128xf32, #tpu.memory_space<vmem>>, vector<1x128xf32>
    %7 = vector.broadcast %6 : vector<1x128xf32> to vector<18x128xf32>
    %8 = arith.addf %5, %7 : vector<18x128xf32>
    %cst_6 = arith.constant 0.000000e+00 : f32
    %9 = vector.broadcast %cst_6 : f32 to vector<18x128xf32>
    %10 = arith.maximumf %8, %9 : vector<18x128xf32>
    %c0_7 = arith.constant 0 : index
    %c0_8 = arith.constant 0 : index
    %11 = vector.load %arg10[%c0_7, %c0_8] : memref<18x64xf32, #tpu.memory_space<vmem>>, vector<18x64xf32>
    %12 = arith.truncf %10 : vector<18x128xf32> to vector<18x128xbf16>
    %c0_9 = arith.constant 0 : index
    %c0_10 = arith.constant 0 : index
    %13 = vector.load %arg5[%c0_9, %c0_10] : memref<128x64xbf16, #tpu.memory_space<vmem>>, vector<128x64xbf16>
    %cst_11 = arith.constant dense<0.000000e+00> : vector<18x64xf32>
    %14 = tpu.matmul %12, %13, %cst_11 {dimension_numbers = #tpu.dot_dimension_numbers<[1], [0], [0], [1], [0, 0, 1, 1], [], []>} : vector<18x128xbf16>, vector<128x64xbf16>, vector<18x64xf32> -> vector<18x64xf32>
    %15 = arith.addf %11, %14 : vector<18x64xf32>
    %c0_12 = arith.constant 0 : index
    %c0_13 = arith.constant 0 : index
    %16 = vector.load %arg10[%c0_12, %c0_13] : memref<18x64xf32, #tpu.memory_space<vmem>>, vector<18x64xf32>
    tpu.vector_store %arg10[%c0_12, %c0_13], %15 {strides = array<i32>} : memref<18x64xf32, #tpu.memory_space<vmem>>, vector<18x64xf32>,
    %c0_i32_14 = arith.constant 0 : i32
    %17 = arith.cmpi eq, %arg1, %c0_i32_14 : i32
    %18 = arith.extui %17 : i1 to i32
    %c0_i32_15 = arith.constant 0 : i32
    %19 = arith.cmpi ne, %18, %c0_i32_15 : i32
    scf.if %19 {
      %c0_16 = arith.constant 0 : index
      %c0_17 = arith.constant 0 : index
      %20 = vector.load %arg10[%c0_16, %c0_17] : memref<18x64xf32, #tpu.memory_space<vmem>>, vector<18x64xf32>
      %c0_18 = arith.constant 0 : index
      %c0_19 = arith.constant 0 : index
      %21 = vector.load %arg6[%c0_18, %c0_19] : memref<1x64xf32, #tpu.memory_space<vmem>>, vector<1x64xf32>
      %22 = vector.broadcast %21 : vector<1x64xf32> to vector<18x64xf32>
      %23 = arith.addf %20, %22 : vector<18x64xf32>
      %c0_20 = arith.constant 0 : index
      %c0_21 = arith.constant 0 : index
      %24 = vector.load %arg2[%c0_20, %c0_21] : memref<18x64xbf16, #tpu.memory_space<vmem>>, vector<18x64xbf16>
      %25 = arith.extf %24 : vector<18x64xbf16> to vector<18x64xf32>
      %26 = arith.addf %23, %25 : vector<18x64xf32>
      %cst_22 = arith.constant dense<0.000000e+00> : vector<18xf32>
      %27 = vector.multi_reduction <add>, %26, %cst_22 [1] : vector<18x64xf32> to vector<18xf32>
      %28 = vector.shape_cast %27 : vector<18xf32> to vector<18x1xf32>
      %cst_23 = arith.constant 6.400000e+01 : f32
      %29 = vector.broadcast %cst_23 : f32 to vector<18x1xf32>
      %30 = arith.divf %28, %29 : vector<18x1xf32>
      %31 = vector.broadcast %30 : vector<18x1xf32> to vector<18x64xf32>
      %32 = arith.subf %26, %31 : vector<18x64xf32>
      %33 = arith.mulf %32, %32 : vector<18x64xf32>
      %cst_24 = arith.constant dense<0.000000e+00> : vector<18xf32>
      %34 = vector.multi_reduction <add>, %33, %cst_24 [1] : vector<18x64xf32> to vector<18xf32>
      %35 = vector.shape_cast %34 : vector<18xf32> to vector<18x1xf32>
      %cst_25 = arith.constant 6.400000e+01 : f32
      %36 = vector.broadcast %cst_25 : f32 to vector<18x1xf32>
      %37 = arith.divf %35, %36 : vector<18x1xf32>
      %cst_26 = arith.constant 9.99999974E-6 : f32
      %38 = vector.broadcast %cst_26 : f32 to vector<18x1xf32>
      %39 = arith.addf %37, %38 : vector<18x1xf32>
      %40 = math.rsqrt %39 : vector<18x1xf32>
      %41 = vector.broadcast %40 : vector<18x1xf32> to vector<18x64xf32>
      %42 = arith.mulf %32, %41 : vector<18x64xf32>
      %c0_27 = arith.constant 0 : index
      %c0_28 = arith.constant 0 : index
      %43 = vector.load %arg7[%c0_27, %c0_28] : memref<1x64xf32, #tpu.memory_space<vmem>>, vector<1x64xf32>
      %44 = vector.broadcast %43 : vector<1x64xf32> to vector<18x64xf32>
      %45 = arith.mulf %42, %44 : vector<18x64xf32>
      %c0_29 = arith.constant 0 : index
      %c0_30 = arith.constant 0 : index
      %46 = vector.load %arg8[%c0_29, %c0_30] : memref<1x64xf32, #tpu.memory_space<vmem>>, vector<1x64xf32>
      %47 = vector.broadcast %46 : vector<1x64xf32> to vector<18x64xf32>
      %48 = arith.addf %45, %47 : vector<18x64xf32>
      %49 = arith.truncf %48 : vector<18x64xf32> to vector<18x64xbf16>
      %c0_31 = arith.constant 0 : index
      %c0_32 = arith.constant 0 : index
      %50 = vector.load %arg9[%c0_31, %c0_32] : memref<18x64xbf16, #tpu.memory_space<vmem>>, vector<18x64xbf16>
      tpu.vector_store %arg9[%c0_31, %c0_32], %49 {strides = array<i32>} : memref<18x64xbf16, #tpu.memory_space<vmem>>, vector<18x64xbf16>,
    } else {
    }
    return
  }
  func.func @transform_0(%arg0: i32, %arg1: i32) -> (i32, i32) {
    %c0_i32 = arith.constant 0 : i32
    %c0_i32_0 = arith.constant 0 : i32
    return %arg0, %c0_i32 : i32, i32
  }
  func.func @transform_1(%arg0: i32, %arg1: i32) -> (i32, i32) {
    %c0_i32 = arith.constant 0 : i32
    %c0_i32_0 = arith.constant 0 : i32
    return %c0_i32, %arg1 : i32, i32
  }
  func.func @transform_2(%arg0: i32, %arg1: i32) -> (i32, i32) {
    %c0_i32 = arith.constant 0 : i32
    %c0_i32_0 = arith.constant 0 : i32
    return %c0_i32, %arg1 : i32, i32
  }
  func.func @transform_3(%arg0: i32, %arg1: i32) -> (i32, i32) {
    %c0_i32 = arith.constant 0 : i32
    %c0_i32_0 = arith.constant 0 : i32
    return %arg1, %c0_i32 : i32, i32
  }
  func.func @transform_4(%arg0: i32, %arg1: i32) -> (i32, i32) {
    %c0_i32 = arith.constant 0 : i32
    %c0_i32_0 = arith.constant 0 : i32
    %c0_i32_1 = arith.constant 0 : i32
    return %c0_i32, %c0_i32_0 : i32, i32
  }
  func.func @transform_5(%arg0: i32, %arg1: i32) -> (i32, i32) {
    %c0_i32 = arith.constant 0 : i32
    %c0_i32_0 = arith.constant 0 : i32
    %c0_i32_1 = arith.constant 0 : i32
    return %c0_i32, %c0_i32_0 : i32, i32
  }
  func.func @transform_6(%arg0: i32, %arg1: i32) -> (i32, i32) {
    %c0_i32 = arith.constant 0 : i32
    %c0_i32_0 = arith.constant 0 : i32
    %c0_i32_1 = arith.constant 0 : i32
    return %c0_i32, %c0_i32_0 : i32, i32
  }
  func.func @transform_7(%arg0: i32, %arg1: i32) -> (i32, i32) {
    %c0_i32 = arith.constant 0 : i32
    %c0_i32_0 = arith.constant 0 : i32
    return %arg0, %c0_i32 : i32, i32
  }
}

module attributes {stable_mosaic.version = 11 : i64} {
  func.func @_ln_kernel(%arg0: i32, %arg1: memref<2x64xbf16, #tpu.memory_space<vmem>>, %arg2: memref<1x64xf32, #tpu.memory_space<vmem>>, %arg3: memref<1x64xf32, #tpu.memory_space<vmem>>, %arg4: memref<2x64xf32, #tpu.memory_space<vmem>>) attributes {dimension_semantics = [#tpu.dimension_semantics<parallel>], iteration_bounds = array<i64: 1>, scalar_prefetch = 0 : i64, scratch_operands = 0 : i64, tpu.core_type = #tpu.core_type<tc>, window_params = [{transform_indices = @transform_0, window_bounds = array<i64: 2, 64>}, {pipeline_mode = #tpu.pipeline_mode<synchronous>, transform_indices = @transform_1, window_bounds = array<i64: 1, 64>}, {pipeline_mode = #tpu.pipeline_mode<synchronous>, transform_indices = @transform_2, window_bounds = array<i64: 1, 64>}, {transform_indices = @transform_3, window_bounds = array<i64: 2, 64>}]} {
    %c0 = arith.constant 0 : index
    %c0_0 = arith.constant 0 : index
    %0 = vector.load %arg1[%c0, %c0_0] : memref<2x64xbf16, #tpu.memory_space<vmem>>, vector<2x64xbf16>
    %1 = arith.extf %0 : vector<2x64xbf16> to vector<2x64xf32>
    %cst = arith.constant dense<0.000000e+00> : vector<2xf32>
    %2 = vector.multi_reduction <add>, %1, %cst [1] : vector<2x64xf32> to vector<2xf32>
    %3 = vector.shape_cast %2 : vector<2xf32> to vector<2x1xf32>
    %cst_1 = arith.constant 6.400000e+01 : f32
    %4 = vector.broadcast %cst_1 : f32 to vector<2x1xf32>
    %5 = arith.divf %3, %4 : vector<2x1xf32>
    %6 = vector.broadcast %5 : vector<2x1xf32> to vector<2x64xf32>
    %7 = arith.subf %1, %6 : vector<2x64xf32>
    %8 = arith.mulf %7, %7 : vector<2x64xf32>
    %cst_2 = arith.constant dense<0.000000e+00> : vector<2xf32>
    %9 = vector.multi_reduction <add>, %8, %cst_2 [1] : vector<2x64xf32> to vector<2xf32>
    %10 = vector.shape_cast %9 : vector<2xf32> to vector<2x1xf32>
    %cst_3 = arith.constant 6.400000e+01 : f32
    %11 = vector.broadcast %cst_3 : f32 to vector<2x1xf32>
    %12 = arith.divf %10, %11 : vector<2x1xf32>
    %cst_4 = arith.constant 9.99999974E-6 : f32
    %13 = vector.broadcast %cst_4 : f32 to vector<2x1xf32>
    %14 = arith.addf %12, %13 : vector<2x1xf32>
    %15 = math.rsqrt %14 : vector<2x1xf32>
    %16 = vector.broadcast %15 : vector<2x1xf32> to vector<2x64xf32>
    %17 = arith.mulf %7, %16 : vector<2x64xf32>
    %c0_5 = arith.constant 0 : index
    %c0_6 = arith.constant 0 : index
    %18 = vector.load %arg2[%c0_5, %c0_6] : memref<1x64xf32, #tpu.memory_space<vmem>>, vector<1x64xf32>
    %19 = vector.broadcast %18 : vector<1x64xf32> to vector<2x64xf32>
    %20 = arith.mulf %17, %19 : vector<2x64xf32>
    %c0_7 = arith.constant 0 : index
    %c0_8 = arith.constant 0 : index
    %21 = vector.load %arg3[%c0_7, %c0_8] : memref<1x64xf32, #tpu.memory_space<vmem>>, vector<1x64xf32>
    %22 = vector.broadcast %21 : vector<1x64xf32> to vector<2x64xf32>
    %23 = arith.addf %20, %22 : vector<2x64xf32>
    %c0_9 = arith.constant 0 : index
    %c0_10 = arith.constant 0 : index
    %24 = vector.load %arg4[%c0_9, %c0_10] : memref<2x64xf32, #tpu.memory_space<vmem>>, vector<2x64xf32>
    tpu.vector_store %arg4[%c0_9, %c0_10], %23 {strides = array<i32>} : memref<2x64xf32, #tpu.memory_space<vmem>>, vector<2x64xf32>,
    return
  }
  func.func @transform_0(%arg0: i32) -> (i32, i32) {
    %c0_i32 = arith.constant 0 : i32
    %c0_i32_0 = arith.constant 0 : i32
    return %arg0, %c0_i32 : i32, i32
  }
  func.func @transform_1(%arg0: i32) -> (i32, i32) {
    %c0_i32 = arith.constant 0 : i32
    %c0_i32_0 = arith.constant 0 : i32
    %c0_i32_1 = arith.constant 0 : i32
    return %c0_i32, %c0_i32_0 : i32, i32
  }
  func.func @transform_2(%arg0: i32) -> (i32, i32) {
    %c0_i32 = arith.constant 0 : i32
    %c0_i32_0 = arith.constant 0 : i32
    %c0_i32_1 = arith.constant 0 : i32
    return %c0_i32, %c0_i32_0 : i32, i32
  }
  func.func @transform_3(%arg0: i32) -> (i32, i32) {
    %c0_i32 = arith.constant 0 : i32
    %c0_i32_0 = arith.constant 0 : i32
    return %arg0, %c0_i32 : i32, i32
  }
}

</mosaic_0001>

<llo_original>
// kernel: taggregate_forward.11
$region0: #{taggregate_forward.11}
  #allocation0 [shape = 'u32[]', space=smem, size = 0x4, offset = 0x4, fixed_abs, tag = 'smem constant byte address 0x4 - core index']
  #allocation1 [shape = 'u32[144,128]{1,0:T(1,128)}', space=vmem, size = 0x12000, scoped, tag = 'internal scratch']
  #allocation2 [shape = 'f32[18,64]{1,0:T(8,128)}', space=vmem, size = 0x3000, scoped, tag = 'scratch operand']
  %s0 = inlined_call_operand.vmem [shape: bf16[18,64], index: 0, kind: input, shape index: {}]
  %s1 = inlined_call_operand.vmem [shape: bf16[64,64], index: 1, kind: input, shape index: {}]
  %s2 = inlined_call_operand.vmem [shape: f32[1,64], index: 2, kind: input, shape index: {}]
  %s3 = inlined_call_operand.vmem [shape: bf16[18,64], index: 3, kind: input, shape index: {}]
  %s4 = inlined_call_operand.vmem [shape: f32[1,64], index: 4, kind: input, shape index: {}]
  %s5 = inlined_call_operand.vmem [shape: f32[1,64], index: 5, kind: input, shape index: {}]
  %s6 = inlined_call_operand.vmem [shape: bf16[18,64], index: 6, kind: output, shape index: {}]
  %s7 = sld [smem:[#allocation0]]
  $region42: #{taggregate_forward.11} parent=0
    _
  %s9 = ssub.s32 1, %s7
  %s10 = scalar_select 0, %s9, %s7
  // Predicated region
  $region2: #{taggregate_forward.11} parent=0 // pred_check
    _
  $region3: #{taggregate_forward.11} parent=0 // pred_check_branch
    %12 = sbr.rel (0) target = $region5
  $region4: #{taggregate_forward.11} parent=0 // pred_region
    _
  $region5: #{taggregate_forward.11} parent=0 // pred_fallthru
    _
  // Predicated region
  $region6: #{taggregate_forward.11} parent=0 // pred_check
    _
  $region7: #{taggregate_forward.11} parent=0 // pred_check_branch
    %14 = sbr.rel (0) target = $region9
  $region8: #{taggregate_forward.11} parent=0 // pred_region
    _
  $region9: #{taggregate_forward.11} parent=0 // pred_fallthru
    _
  // Predicated region
  $region10: #{taggregate_forward.11} parent=0 // pred_check
    _
  $region11: #{taggregate_forward.11} parent=0 // pred_check_branch
    %16 = sbr.rel (0) target = $region13
  $region12: #{taggregate_forward.11} parent=0 // pred_region
    _
  $region13: #{taggregate_forward.11} parent=0 // pred_fallthru
    _
  // Predicated region
  $region14: #{taggregate_forward.11} parent=0 // pred_check
    _
  $region15: #{taggregate_forward.11} parent=0 // pred_check_branch
    %18 = sbr.rel (0) target = $region17
  $region16: #{taggregate_forward.11} parent=0 // pred_region
    _
  $region17: #{taggregate_forward.11} parent=0 // pred_fallthru
    _
  // Predicated region
  $region18: #{taggregate_forward.11} parent=0 // pred_check
    _
  $region19: #{taggregate_forward.11} parent=0 // pred_check_branch
    %20 = sbr.rel (0) target = $region21
  $region20: #{taggregate_forward.11} parent=0 // pred_region
    _
  $region21: #{taggregate_forward.11} parent=0 // pred_fallthru
    _
  // Predicated region
  $region22: #{taggregate_forward.11} parent=0 // pred_check
    _
  $region23: #{taggregate_forward.11} parent=0 // pred_check_branch
    %22 = sbr.rel (0) target = $region25
  $region24: #{taggregate_forward.11} parent=0 // pred_region
    _
  $region25: #{taggregate_forward.11} parent=0 // pred_fallthru
    _
  %p24 = scmp.eq.s32.totalorder 0, 0
  // Predicated region
  $region26: #{taggregate_forward.11} parent=0 // pred_check
    %p25 = pneg %p24
  $region27: #{taggregate_forward.11} parent=0 // pred_check_branch
    %27 = sbr.rel (%p25) target = $region29
  $region28: #{taggregate_forward.11} parent=0 // pred_region
    %vm28 = vcmask 523264
    %29 = vst.msk [vmem:[#allocation2] sm:$0xff] %vm28, 0.0
    %30 = vst.msk [vmem:[#allocation2 + $0x8] sm:$0xff] %vm28, 0.0
    %vm31 = vcmask 517120
    %32 = vst.msk [vmem:[#allocation2 + $0x10] sm:$0x3] %vm31, 0.0
  $region29: #{taggregate_forward.11} parent=0 // pred_fallthru
    _
  %v33 = vld [vmem:[#allocation2] sm:$0xff]
  %v34 = vld [vmem:[#allocation2 + $0x8] sm:$0xff]
  %v35 = vld [vmem:[#allocation2 + $0x10] sm:$0x3]
  %v36 = vld [vmem:[%s0] sm:$0xf]
  %v37 = vld [vmem:[%s0 + $0x4] sm:$0xf]
  %v38 = vld [vmem:[%s0 + $0x8] sm:$0x1]
  %v39 = vld [vmem:[%s1] sm:$0xf]
  %v40 = vld [vmem:[%s1 + $0x4] sm:$0xf]
  %v41 = vld [vmem:[%s1 + $0x8] sm:$0xf]
  %v42 = vld [vmem:[%s1 + $0xc] sm:$0xf]
  %v43 = vld [vmem:[%s1 + $0x10] sm:$0xf]
  %v44 = vld [vmem:[%s1 + $0x14] sm:$0xf]
  %v45 = vld [vmem:[%s1 + $0x18] sm:$0xf]
  %v46 = vld [vmem:[%s1 + $0x1c] sm:$0xf]
  %v50 = vunpack.c.l.b16 %v36
  %v51 = vunpack.c.l.b16 %v37
  %v52 = vunpack.c.l.b16 %v38
  %v53 = vpack.c.b16 %v51, %v50
  %v54 = vpack.c.b16 %v52, %v52
  %v63 = vunpack.c.l.b16 %v39
  %v64 = vunpack.c.l.b16 %v40
  %v65 = vunpack.c.l.b16 %v41
  %v66 = vunpack.c.l.b16 %v42
  %v67 = vunpack.c.l.b16 %v43
  %v68 = vunpack.c.l.b16 %v44
  %v69 = vunpack.c.l.b16 %v45
  %v70 = vunpack.c.l.b16 %v46
  %v71 = vpack.c.b16 %v64, %v63
  %v72 = vpack.c.b16 %v66, %v65
  %v73 = vpack.c.b16 %v68, %v67
  %v74 = vpack.c.b16 %v70, %v69
  %vm79 = vcmask 523264
  %v81 = vsel %vm79, %v53, 0
  %v84 = vsel %vm79, %v54, 0
  %86 = vmatprep.subr.bf16.mxu0 0
  %87 = vmatpush1.bf16.msra.mxu0 %v71
  %88 = vmatprep.subr.bf16.mxu0 0
  %89 = vmatpush1.bf16.msra.mxu0 %v72
  %90 = vmatprep.subr.bf16.mxu0 0
  %91 = vmatpush1.bf16.msra.mxu0 %v73
  %92 = vmatprep.subr.bf16.mxu0 0
  %93 = vmatpush1.bf16.msra.mxu0 %v74
  %94 = vmatprep.subr.bf16.mxu0 0
  %95 = vmatpush1.bf16.msra.mxu0 0
  %96 = vmatprep.subr.bf16.mxu0 0
  %97 = vmatpush1.bf16.msra.mxu0 0
  %98 = vmatprep.subr.bf16.mxu0 0
  %99 = vmatpush1.bf16.msra.mxu0 0
  %100 = vmatprep.subr.bf16.mxu0 0
  %101 = vmatpush1.bf16.msra.mxu0 0
  %102 = vmatprep.subr.bf16.mxu0 0
  %103 = vmatpush1.bf16.msra.mxu0 0
  %104 = vmatprep.subr.bf16.mxu0 0
  %105 = vmatpush1.bf16.msra.mxu0 0
  %106 = vmatprep.subr.bf16.mxu0 0
  %107 = vmatpush1.bf16.msra.mxu0 0
  %108 = vmatprep.subr.bf16.mxu0 0
  %109 = vmatpush1.bf16.msra.mxu0 0
  %110 = vmatprep.subr.bf16.mxu0 0
  %111 = vmatpush1.bf16.msra.mxu0 0
  %112 = vmatprep.subr.bf16.mxu0 0
  %113 = vmatpush1.bf16.msra.mxu0 0
  %114 = vmatprep.subr.bf16.mxu0 0
  %115 = vmatpush1.bf16.msra.mxu0 0
  %116 = vmatprep.subr.bf16.mxu0 0
  %117 = vmatpush1.bf16.msra.mxu0 0
  %118 = vmatprep.mubr.bf16.mxu0 0
  %119 = vmatmul.mubr.bf16.gmra.mrb[0].mxu0 %v81
  %v120 = vpop.f32.mrb[0].mxu0
  %v121 = vadd.f32 0.0, %v120
  %v122 = vpop.f32.mrb[0].mxu0
  %v123 = vpop.f32.mrb[0].mxu0
  %v124 = vadd.f32 0.0, %v123
  %v125 = vpop.f32.mrb[0].mxu0
  %126 = vmatprep.mubr.bf16.mxu0 0
  %127 = vmatmul.mubr.bf16.gmra.mrb[0].mxu0 %v84
  %v128 = vpop.f32.mrb[0].mxu0
  %v129 = vadd.f32 0.0, %v128
  %v130 = vpop.f32.mrb[0].mxu0
  %v131 = vpop.f32.mrb[0].mxu0
  %v132 = vpop.f32.mrb[0].mxu0
  %133 = vdwg.mxu0
  %v134 = vadd.f32 %v33, %v121
  %v135 = vadd.f32 %v34, %v124
  %v136 = vadd.f32 %v35, %v129
  %137 = vst.msk [vmem:[#allocation2] sm:$0xff] %vm79, %v134
  %138 = vst.msk [vmem:[#allocation2 + $0x8] sm:$0xff] %vm79, %v135
  %vm139 = vcmask 517120
  %140 = vst.msk [vmem:[#allocation2 + $0x10] sm:$0x3] %vm139, %v136
  // Predicated region
  $region30: #{taggregate_forward.11} parent=0 // pred_check
    %p141 = pneg %p24
  $region31: #{taggregate_forward.11} parent=0 // pred_check_branch
    %143 = sbr.rel (%p141) target = $region33
  $region32: #{taggregate_forward.11} parent=0 // pred_region
    %v144 = vld [vmem:[#allocation2] sm:$0xff]
    %v145 = vld [vmem:[#allocation2 + $0x8] sm:$0xff]
    %v146 = vld [vmem:[#allocation2 + $0x10] sm:$0x3]
    %v147 = vld [vmem:[%s2] sm:$0x1]
    %v149 = vlaneseq
    %v150 = vshrl.u32 %v149, 7
    %v151 = vsub.s32 0, %v150
    %v152 = vrot.slane %v147, %v151
    %v154 = vadd.f32 %v144, %v152
    %v155 = vadd.f32 %v145, %v152
    %v156 = vadd.f32 %v146, %v152
    %v157 = vld [vmem:[%s3] sm:$0xf]
    %v158 = vld [vmem:[%s3 + $0x4] sm:$0xf]
    %v159 = vld [vmem:[%s3 + $0x8] sm:$0x1]
    %v160 = vunpack.c.l.bf16 %v157
    %v161 = vunpack.c.l.bf16 %v158
    %v162 = vunpack.c.l.bf16 %v159
    %v163 = vadd.f32 %v154, %v160
    %v164 = vadd.f32 %v155, %v161
    %v165 = vadd.f32 %v156, %v162
    %v166 = vsel %vm79, %v163, 0.0
    %167 = vadd.xlane.f32.xlu0 %v166
    %v168 = vpop.xlane.xlu0 %167
    %v169 = vsel %vm79, %v164, 0.0
    %170 = vadd.xlane.f32.xlu0 %v169
    %v171 = vpop.xlane.xlu0 %170
    %v172 = vsel %vm139, %v165, 0.0
    %173 = vadd.xlane.f32.xlu0 %v172
    %v174 = vpop.xlane.xlu0 %173
    %v175 = vrcp.pop 64.0
    %v176 = vmul.f32 %v168, %v175
    %v177 = vmul.f32 %v171, %v175
    %v178 = vmul.f32 %v174, %v175
    %v179 = vsub.f32 %v163, %v176
    %v180 = vsub.f32 %v164, %v177
    %v181 = vsub.f32 %v165, %v178
    %v182 = vmul.f32 %v179, %v179
    %v183 = vmul.f32 %v180, %v180
    %v184 = vmul.f32 %v181, %v181
    %v185 = vsel %vm79, %v182, 0.0
    %186 = vadd.xlane.f32.xlu0 %v185
    %v187 = vpop.xlane.xlu0 %186
    %v188 = vsel %vm79, %v183, 0.0
    %189 = vadd.xlane.f32.xlu0 %v188
    %v190 = vpop.xlane.xlu0 %189
    %v191 = vsel %vm139, %v184, 0.0
    %192 = vadd.xlane.f32.xlu0 %v191
    %v193 = vpop.xlane.xlu0 %192
    %v194 = vmul.f32 %v187, %v175
    %v195 = vmul.f32 %v190, %v175
    %v196 = vmul.f32 %v193, %v175
    %v197 = vadd.f32 %v194, 1e-05
    %v198 = vadd.f32 %v195, 1e-05
    %v199 = vadd.f32 %v196, 1e-05
    %v200 = vrsqrt.pop %v197
    %v201 = vrsqrt.pop %v198
    %v202 = vrsqrt.pop %v199
    %v203 = vmul.f32 %v179, %v200
    %v204 = vmul.f32 %v180, %v201
    %v205 = vmul.f32 %v181, %v202
    %v206 = vld [vmem:[%s4] sm:$0x1]
    %v208 = vlaneseq
    %v209 = vshrl.u32 %v208, 7
    %v210 = vsub.s32 0, %v209
    %v211 = vrot.slane %v206, %v210
    %v213 = vmul.f32 %v203, %v211
    %v214 = vmul.f32 %v204, %v211
    %v215 = vmul.f32 %v205, %v211
    %v216 = vld [vmem:[%s5] sm:$0x1]
    %v218 = vlaneseq
    %v219 = vshrl.u32 %v218, 7
    %v220 = vsub.s32 0, %v219
    %v221 = vrot.slane %v216, %v220
    %v223 = vadd.f32 %v213, %v221
    %v224 = vadd.f32 %v214, %v221
    %v225 = vadd.f32 %v215, %v221
    %v226 = vpack.c.bf16 %v224, %v223
    %v227 = vpack.c.bf16 %v225, %v225
    %v230 = vunpack.c.l.b16 %v226
    %v231 = vunpack.c.h.b16 %v226
    %v232 = vunpack.c.l.b16 %v227
    %v233 = vpack.c.b16 %v230, %v230
    %v234 = vpack.c.b16 %v231, %v231
    %v235 = vpack.c.b16 %v232, %v232
    %vm239 = vcmask 519168
    %240 = vst.msk [vmem:[%s6] sm:$0xf] %vm239, %v233
    %241 = vst.msk [vmem:[%s6 + $0x4] sm:$0xf] %vm239, %v234
    %vm242 = vcmask 516096
    %243 = vst.msk [vmem:[%s6 + $0x8] sm:$0x1] %vm242, %v235
  $region33: #{taggregate_forward.11} parent=0 // pred_fallthru
    _
  // Predicated region
  $region34: #{taggregate_forward.11} parent=0 // pred_check
    _
  $region35: #{taggregate_forward.11} parent=0 // pred_check_branch
    %245 = sbr.rel (0) target = $region37
  $region36: #{taggregate_forward.11} parent=0 // pred_region
    _
  $region37: #{taggregate_forward.11} parent=0 // pred_fallthru
    _
  // Predicated region
  $region38: #{taggregate_forward.11} parent=0 // pred_check
    _
  $region39: #{taggregate_forward.11} parent=0 // pred_check_branch
    %247 = sbr.rel (0) target = $region41
  $region40: #{taggregate_forward.11} parent=0 // pred_region
    _
  $region41: #{taggregate_forward.11} parent=0 // pred_fallthru
    _

// kernel: taggregate_forward.9
$region0: #{taggregate_forward.9}
  #allocation0 [shape = 'u32[]', space=smem, size = 0x4, offset = 0x4, fixed_abs, tag = 'smem constant byte address 0x4 - core index']
  #allocation1 [shape = 'u32[144,128]{1,0:T(1,128)}', space=vmem, size = 0x12000, scoped, tag = 'internal scratch']
  %s0 = inlined_call_operand.vmem [shape: bf16[18,64], index: 0, kind: input, shape index: {}]
  %s1 = inlined_call_operand.vmem [shape: bf16[64,192], index: 1, kind: input, shape index: {}]
  %s2 = inlined_call_operand.vmem [shape: f32[1,192], index: 2, kind: input, shape index: {}]
  %s3 = inlined_call_operand.vmem [shape: bf16[18,192], index: 3, kind: output, shape index: {}]
  %s4 = sld [smem:[#allocation0]]
  $region22: #{taggregate_forward.9} parent=0
    _
  %s6 = ssub.s32 1, %s4
  %s7 = scalar_select 0, %s6, %s4
  // Predicated region
  $region2: #{taggregate_forward.9} parent=0 // pred_check
    _
  $region3: #{taggregate_forward.9} parent=0 // pred_check_branch
    %9 = sbr.rel (0) target = $region5
  $region4: #{taggregate_forward.9} parent=0 // pred_region
    _
  $region5: #{taggregate_forward.9} parent=0 // pred_fallthru
    _
  // Predicated region
  $region6: #{taggregate_forward.9} parent=0 // pred_check
    _
  $region7: #{taggregate_forward.9} parent=0 // pred_check_branch
    %11 = sbr.rel (0) target = $region9
  $region8: #{taggregate_forward.9} parent=0 // pred_region
    _
  $region9: #{taggregate_forward.9} parent=0 // pred_fallthru
    _
  // Predicated region
  $region10: #{taggregate_forward.9} parent=0 // pred_check
    _
  $region11: #{taggregate_forward.9} parent=0 // pred_check_branch
    %13 = sbr.rel (0) target = $region13
  $region12: #{taggregate_forward.9} parent=0 // pred_region
    _
  $region13: #{taggregate_forward.9} parent=0 // pred_fallthru
    _
  %v15 = vld [vmem:[%s0] sm:$0xf]
  %v16 = vld [vmem:[%s0 + $0x4] sm:$0xf]
  %v17 = vld [vmem:[%s0 + $0x8] sm:$0x1]
  %v18 = vld [vmem:[%s1] sm:$0xff]
  %v19 = vld [vmem:[%s1 + $0x8] sm:$0xff]
  %v20 = vld [vmem:[%s1 + $0x10] sm:$0xff]
  %v21 = vld [vmem:[%s1 + $0x18] sm:$0xff]
  %v22 = vld [vmem:[%s1 + $0x20] sm:$0xff]
  %v23 = vld [vmem:[%s1 + $0x28] sm:$0xff]
  %v24 = vld [vmem:[%s1 + $0x30] sm:$0xff]
  %v25 = vld [vmem:[%s1 + $0x38] sm:$0xff]
  %v26 = vld [vmem:[%s2] sm:$0x3]
  %v28 = vlaneseq
  %v29 = vshrl.u32 %v28, 7
  %v30 = vsub.s32 0, %v29
  %v31 = vrot.slane %v26, %v30
  %v32 = vlaneseq
  %v33 = vshrl.u32 %v32, 7
  %v34 = vsub.s32 1, %v33
  %v35 = vrot.slane %v26, %v34
  %v41 = vunpack.c.l.b16 %v15
  %v42 = vunpack.c.l.b16 %v16
  %v43 = vunpack.c.l.b16 %v17
  %v44 = vpack.c.b16 %v42, %v41
  %v45 = vpack.c.b16 %v43, %v43
  %v54 = vunpack.c.l.b16 %v18
  %v55 = vunpack.c.h.b16 %v18
  %v56 = vunpack.c.l.b16 %v19
  %v57 = vunpack.c.h.b16 %v19
  %v58 = vunpack.c.l.b16 %v20
  %v59 = vunpack.c.h.b16 %v20
  %v60 = vunpack.c.l.b16 %v21
  %v61 = vunpack.c.h.b16 %v21
  %v62 = vunpack.c.l.b16 %v22
  %v63 = vunpack.c.h.b16 %v22
  %v64 = vunpack.c.l.b16 %v23
  %v65 = vunpack.c.h.b16 %v23
  %v66 = vunpack.c.l.b16 %v24
  %v67 = vunpack.c.h.b16 %v24
  %v68 = vunpack.c.l.b16 %v25
  %v69 = vunpack.c.h.b16 %v25
  %v70 = vpack.c.b16 %v56, %v54
  %v71 = vpack.c.b16 %v57, %v55
  %v72 = vpack.c.b16 %v60, %v58
  %v73 = vpack.c.b16 %v61, %v59
  %v74 = vpack.c.b16 %v64, %v62
  %v75 = vpack.c.b16 %v65, %v63
  %v76 = vpack.c.b16 %v68, %v66
  %v77 = vpack.c.b16 %v69, %v67
  %vm86 = vcmask 523264
  %v88 = vsel %vm86, %v44, 0
  %v91 = vsel %vm86, %v45, 0
  %93 = vmatprep.subr.bf16.mxu0 %v71
  %94 = vmatpush1.bf16.msra.mxu0 %v70
  %95 = vmatprep.subr.bf16.mxu0 %v73
  %96 = vmatpush1.bf16.msra.mxu0 %v72
  %97 = vmatprep.subr.bf16.mxu0 %v75
  %98 = vmatpush1.bf16.msra.mxu0 %v74
  %99 = vmatprep.subr.bf16.mxu0 %v77
  %100 = vmatpush1.bf16.msra.mxu0 %v76
  %101 = vmatprep.subr.bf16.mxu0 0
  %102 = vmatpush1.bf16.msra.mxu0 0
  %103 = vmatprep.subr.bf16.mxu0 0
  %104 = vmatpush1.bf16.msra.mxu0 0
  %105 = vmatprep.subr.bf16.mxu0 0
  %106 = vmatpush1.bf16.msra.mxu0 0
  %107 = vmatprep.subr.bf16.mxu0 0
  %108 = vmatpush1.bf16.msra.mxu0 0
  %109 = vmatprep.subr.bf16.mxu0 0
  %110 = vmatpush1.bf16.msra.mxu0 0
  %111 = vmatprep.subr.bf16.mxu0 0
  %112 = vmatpush1.bf16.msra.mxu0 0
  %113 = vmatprep.subr.bf16.mxu0 0
  %114 = vmatpush1.bf16.msra.mxu0 0
  %115 = vmatprep.subr.bf16.mxu0 0
  %116 = vmatpush1.bf16.msra.mxu0 0
  %117 = vmatprep.subr.bf16.mxu0 0
  %118 = vmatpush1.bf16.msra.mxu0 0
  %119 = vmatprep.subr.bf16.mxu0 0
  %120 = vmatpush1.bf16.msra.mxu0 0
  %121 = vmatprep.subr.bf16.mxu0 0
  %122 = vmatpush1.bf16.msra.mxu0 0
  %123 = vmatprep.subr.bf16.mxu0 0
  %124 = vmatpush1.bf16.msra.mxu0 0
  %125 = vmatprep.mubr.bf16.mxu0 0
  %126 = vmatmul.mubr.bf16.gmra.mrb[0].mxu0 %v88
  %v127 = vpop.f32.mrb[0].mxu0
  %v128 = vadd.f32 %v31, %v127
  %v129 = vpop.f32.mrb[0].mxu0
  %v130 = vadd.f32 %v35, %v129
  %v131 = vpop.f32.mrb[0].mxu0
  %v132 = vadd.f32 %v31, %v131
  %v133 = vpop.f32.mrb[0].mxu0
  %v134 = vadd.f32 %v35, %v133
  %135 = vmatprep.mubr.bf16.mxu0 0
  %136 = vmatmul.mubr.bf16.gmra.mrb[0].mxu0 %v91
  %v137 = vpop.f32.mrb[0].mxu0
  %v138 = vadd.f32 %v31, %v137
  %v139 = vpop.f32.mrb[0].mxu0
  %v140 = vadd.f32 %v35, %v139
  %v141 = vpop.f32.mrb[0].mxu0
  %v142 = vpop.f32.mrb[0].mxu0
  %143 = vdwg.mxu0
  %v144 = vpack.c.bf16 %v132, %v128
  %v145 = vpack.c.bf16 %v134, %v130
  %v146 = vpack.c.bf16 %v138, %v138
  %v147 = vpack.c.bf16 %v140, %v140
  %v152 = vunpack.c.l.b16 %v144
  %v153 = vunpack.c.l.b16 %v145
  %v154 = vunpack.c.h.b16 %v144
  %v155 = vunpack.c.h.b16 %v145
  %v156 = vunpack.c.l.b16 %v146
  %v157 = vunpack.c.l.b16 %v147
  %v158 = vpack.c.b16 %v153, %v152
  %v159 = vpack.c.b16 %v155, %v154
  %v160 = vpack.c.b16 %v157, %v156
  %vm164 = vcmask 1043456
  %vm165 = vcmask 523268
  %vm166 = vmor %vm165, %vm164
  %167 = vst.msk [vmem:[%s3] sm:$0xff] %vm166, %v158
  %168 = vst.msk [vmem:[%s3 + $0x8] sm:$0xff] %vm166, %v159
  %vm169 = vcmask 1040384
  %vm170 = vcmask 520196
  %vm171 = vmor %vm170, %vm169
  %172 = vst.msk [vmem:[%s3 + $0x10] sm:$0x11] %vm171, %v160
  // Predicated region
  $region14: #{taggregate_forward.9} parent=0 // pred_check
    _
  $region15: #{taggregate_forward.9} parent=0 // pred_check_branch
    %174 = sbr.rel (0) target = $region17
  $region16: #{taggregate_forward.9} parent=0 // pred_region
    _
  $region17: #{taggregate_forward.9} parent=0 // pred_fallthru
    _
  // Predicated region
  $region18: #{taggregate_forward.9} parent=0 // pred_check
    _
  $region19: #{taggregate_forward.9} parent=0 // pred_check_branch
    %176 = sbr.rel (0) target = $region21
  $region20: #{taggregate_forward.9} parent=0 // pred_region
    _
  $region21: #{taggregate_forward.9} parent=0 // pred_fallthru
    _

// kernel: taggregate_forward.12
$region0: #{taggregate_forward.12}
  #allocation0 [shape = 'u32[]', space=smem, size = 0x4, offset = 0x4, fixed_abs, tag = 'smem constant byte address 0x4 - core index']
  #allocation1 [shape = 'u32[144,128]{1,0:T(1,128)}', space=vmem, size = 0x12000, scoped, tag = 'internal scratch']
  #allocation2 [shape = 'f32[18,64]{1,0:T(8,128)}', space=vmem, size = 0x3000, scoped, tag = 'scratch operand']
  %s0 = inlined_call_operand.vmem [shape: bf16[18,64], index: 0, kind: input, shape index: {}]
  %s1 = inlined_call_operand.vmem [shape: bf16[64,128], index: 1, kind: input, shape index: {}]
  %s2 = inlined_call_operand.vmem [shape: f32[1,128], index: 2, kind: input, shape index: {}]
  %s3 = inlined_call_operand.vmem [shape: bf16[128,64], index: 3, kind: input, shape index: {}]
  %s4 = inlined_call_operand.vmem [shape: f32[1,64], index: 4, kind: input, shape index: {}]
  %s5 = inlined_call_operand.vmem [shape: f32[1,64], index: 5, kind: input, shape index: {}]
  %s6 = inlined_call_operand.vmem [shape: f32[1,64], index: 6, kind: input, shape index: {}]
  %s7 = inlined_call_operand.vmem [shape: bf16[18,64], index: 7, kind: output, shape index: {}]
  %s8 = sld [smem:[#allocation0]]
  $region46: #{taggregate_forward.12} parent=0
    _
  %s10 = ssub.s32 1, %s8
  %s11 = scalar_select 0, %s10, %s8
  // Predicated region
  $region2: #{taggregate_forward.12} parent=0 // pred_check
    _
  $region3: #{taggregate_forward.12} parent=0 // pred_check_branch
    %13 = sbr.rel (0) target = $region5
  $region4: #{taggregate_forward.12} parent=0 // pred_region
    _
  $region5: #{taggregate_forward.12} parent=0 // pred_fallthru
    _
  // Predicated region
  $region6: #{taggregate_forward.12} parent=0 // pred_check
    _
  $region7: #{taggregate_forward.12} parent=0 // pred_check_branch
    %15 = sbr.rel (0) target = $region9
  $region8: #{taggregate_forward.12} parent=0 // pred_region
    _
  $region9: #{taggregate_forward.12} parent=0 // pred_fallthru
    _
  // Predicated region
  $region10: #{taggregate_forward.12} parent=0 // pred_check
    _
  $region11: #{taggregate_forward.12} parent=0 // pred_check_branch
    %17 = sbr.rel (0) target = $region13
  $region12: #{taggregate_forward.12} parent=0 // pred_region
    _
  $region13: #{taggregate_forward.12} parent=0 // pred_fallthru
    _
  // Predicated region
  $region14: #{taggregate_forward.12} parent=0 // pred_check
    _
  $region15: #{taggregate_forward.12} parent=0 // pred_check_branch
    %19 = sbr.rel (0) target = $region17
  $region16: #{taggregate_forward.12} parent=0 // pred_region
    _
  $region17: #{taggregate_forward.12} parent=0 // pred_fallthru
    _
  // Predicated region
  $region18: #{taggregate_forward.12} parent=0 // pred_check
    _
  $region19: #{taggregate_forward.12} parent=0 // pred_check_branch
    %21 = sbr.rel (0) target = $region21
  $region20: #{taggregate_forward.12} parent=0 // pred_region
    _
  $region21: #{taggregate_forward.12} parent=0 // pred_fallthru
    _
  // Predicated region
  $region22: #{taggregate_forward.12} parent=0 // pred_check
    _
  $region23: #{taggregate_forward.12} parent=0 // pred_check_branch
    %23 = sbr.rel (0) target = $region25
  $region24: #{taggregate_forward.12} parent=0 // pred_region
    _
  $region25: #{taggregate_forward.12} parent=0 // pred_fallthru
    _
  // Predicated region
  $region26: #{taggregate_forward.12} parent=0 // pred_check
    _
  $region27: #{taggregate_forward.12} parent=0 // pred_check_branch
    %25 = sbr.rel (0) target = $region29
  $region28: #{taggregate_forward.12} parent=0 // pred_region
    _
  $region29: #{taggregate_forward.12} parent=0 // pred_fallthru
    _
  %p27 = scmp.eq.s32.totalorder 0, 0
  // Predicated region
  $region30: #{taggregate_forward.12} parent=0 // pred_check
    %p28 = pneg %p27
  $region31: #{taggregate_forward.12} parent=0 // pred_check_branch
    %30 = sbr.rel (%p28) target = $region33
  $region32: #{taggregate_forward.12} parent=0 // pred_region
    %vm31 = vcmask 523264
    %32 = vst.msk [vmem:[#allocation2] sm:$0xff] %vm31, 0.0
    %33 = vst.msk [vmem:[#allocation2 + $0x8] sm:$0xff] %vm31, 0.0
    %vm34 = vcmask 517120
    %35 = vst.msk [vmem:[#allocation2 + $0x10] sm:$0x3] %vm34, 0.0
  $region33: #{taggregate_forward.12} parent=0 // pred_fallthru
    _
  %v36 = vld [vmem:[%s0] sm:$0xf]
  %v37 = vld [vmem:[%s0 + $0x4] sm:$0xf]
  %v38 = vld [vmem:[%s0 + $0x8] sm:$0x1]
  %v39 = vld [vmem:[%s1] sm:$0xf]
  %v40 = vld [vmem:[%s1 + $0x4] sm:$0xf]
  %v41 = vld [vmem:[%s1 + $0x8] sm:$0xf]
  %v42 = vld [vmem:[%s1 + $0xc] sm:$0xf]
  %v43 = vld [vmem:[%s1 + $0x10] sm:$0xf]
  %v44 = vld [vmem:[%s1 + $0x14] sm:$0xf]
  %v45 = vld [vmem:[%s1 + $0x18] sm:$0xf]
  %v46 = vld [vmem:[%s1 + $0x1c] sm:$0xf]
  %v47 = vld [vmem:[%s2] sm:$0x1]
  %v49 = vlaneseq
  %v50 = vshrl.u32 %v49, 7
  %v51 = vsub.s32 0, %v50
  %v52 = vrot.slane %v47, %v51
  %v57 = vunpack.c.l.b16 %v36
  %v58 = vunpack.c.l.b16 %v37
  %v59 = vunpack.c.l.b16 %v38
  %v60 = vpack.c.b16 %v58, %v57
  %v61 = vpack.c.b16 %v59, %v59
  %v70 = vunpack.c.l.b16 %v39
  %v71 = vunpack.c.l.b16 %v40
  %v72 = vunpack.c.l.b16 %v41
  %v73 = vunpack.c.l.b16 %v42
  %v74 = vunpack.c.l.b16 %v43
  %v75 = vunpack.c.l.b16 %v44
  %v76 = vunpack.c.l.b16 %v45
  %v77 = vunpack.c.l.b16 %v46
  %v78 = vpack.c.b16 %v71, %v70
  %v79 = vpack.c.b16 %v73, %v72
  %v80 = vpack.c.b16 %v75, %v74
  %v81 = vpack.c.b16 %v77, %v76
  %vm86 = vcmask 523264
  %v88 = vsel %vm86, %v60, 0
  %v91 = vsel %vm86, %v61, 0
  %93 = vmatprep.subr.bf16.mxu0 0
  %94 = vmatpush1.bf16.msra.mxu0 %v78
  %95 = vmatprep.subr.bf16.mxu0 0
  %96 = vmatpush1.bf16.msra.mxu0 %v79
  %97 = vmatprep.subr.bf16.mxu0 0
  %98 = vmatpush1.bf16.msra.mxu0 %v80
  %99 = vmatprep.subr.bf16.mxu0 0
  %100 = vmatpush1.bf16.msra.mxu0 %v81
  %101 = vmatprep.subr.bf16.mxu0 0
  %102 = vmatpush1.bf16.msra.mxu0 0
  %103 = vmatprep.subr.bf16.mxu0 0
  %104 = vmatpush1.bf16.msra.mxu0 0
  %105 = vmatprep.subr.bf16.mxu0 0
  %106 = vmatpush1.bf16.msra.mxu0 0
  %107 = vmatprep.subr.bf16.mxu0 0
  %108 = vmatpush1.bf16.msra.mxu0 0
  %109 = vmatprep.subr.bf16.mxu0 0
  %110 = vmatpush1.bf16.msra.mxu0 0
  %111 = vmatprep.subr.bf16.mxu0 0
  %112 = vmatpush1.bf16.msra.mxu0 0
  %113 = vmatprep.subr.bf16.mxu0 0
  %114 = vmatpush1.bf16.msra.mxu0 0
  %115 = vmatprep.subr.bf16.mxu0 0
  %116 = vmatpush1.bf16.msra.mxu0 0
  %117 = vmatprep.subr.bf16.mxu0 0
  %118 = vmatpush1.bf16.msra.mxu0 0
  %119 = vmatprep.subr.bf16.mxu0 0
  %120 = vmatpush1.bf16.msra.mxu0 0
  %121 = vmatprep.subr.bf16.mxu0 0
  %122 = vmatpush1.bf16.msra.mxu0 0
  %123 = vmatprep.subr.bf16.mxu0 0
  %124 = vmatpush1.bf16.msra.mxu0 0
  %125 = vmatprep.mubr.bf16.mxu0 0
  %126 = vmatmul.mubr.bf16.gmra.mrb[0].mxu0 %v88
  %v127 = vpop.f32.mrb[0].mxu0
  %v128 = vadd.f32 %v52, %v127
  %v129 = vpop.f32.mrb[0].mxu0
  %v130 = vpop.f32.mrb[0].mxu0
  %v131 = vadd.f32 %v52, %v130
  %v132 = vpop.f32.mrb[0].mxu0
  %133 = vmatprep.mubr.bf16.mxu0 0
  %134 = vmatmul.mubr.bf16.gmra.mrb[0].mxu0 %v91
  %v135 = vpop.f32.mrb[0].mxu0
  %v136 = vadd.f32 %v52, %v135
  %v137 = vpop.f32.mrb[0].mxu0
  %v138 = vpop.f32.mrb[0].mxu0
  %v139 = vpop.f32.mrb[0].mxu0
  %140 = vdwg.mxu0
  %v141 = vmax.f32 %v128, 0.0
  %v142 = vmax.f32 %v131, 0.0
  %v143 = vmax.f32 %v136, 0.0
  %v144 = vld [vmem:[#allocation2] sm:$0xff]
  %v145 = vld [vmem:[#allocation2 + $0x8] sm:$0xff]
  %v146 = vld [vmem:[#allocation2 + $0x10] sm:$0x3]
  %v147 = vpack.c.bf16 %v142, %v141
  %v148 = vpack.c.bf16 %v143, %v143
  %v149 = vld [vmem:[%s3] sm:$0xf]
  %v150 = vld [vmem:[%s3 + $0x4] sm:$0xf]
  %v151 = vld [vmem:[%s3 + $0x8] sm:$0xf]
  %v152 = vld [vmem:[%s3 + $0xc] sm:$0xf]
  %v153 = vld [vmem:[%s3 + $0x10] sm:$0xf]
  %v154 = vld [vmem:[%s3 + $0x14] sm:$0xf]
  %v155 = vld [vmem:[%s3 + $0x18] sm:$0xf]
  %v156 = vld [vmem:[%s3 + $0x1c] sm:$0xf]
  %v157 = vld [vmem:[%s3 + $0x20] sm:$0xf]
  %v158 = vld [vmem:[%s3 + $0x24] sm:$0xf]
  %v159 = vld [vmem:[%s3 + $0x28] sm:$0xf]
  %v160 = vld [vmem:[%s3 + $0x2c] sm:$0xf]
  %v161 = vld [vmem:[%s3 + $0x30] sm:$0xf]
  %v162 = vld [vmem:[%s3 + $0x34] sm:$0xf]
  %v163 = vld [vmem:[%s3 + $0x38] sm:$0xf]
  %v164 = vld [vmem:[%s3 + $0x3c] sm:$0xf]
  %v181 = vunpack.c.l.b16 %v149
  %v182 = vunpack.c.l.b16 %v150
  %v183 = vunpack.c.l.b16 %v151
  %v184 = vunpack.c.l.b16 %v152
  %v185 = vunpack.c.l.b16 %v153
  %v186 = vunpack.c.l.b16 %v154
  %v187 = vunpack.c.l.b16 %v155
  %v188 = vunpack.c.l.b16 %v156
  %v189 = vunpack.c.l.b16 %v157
  %v190 = vunpack.c.l.b16 %v158
  %v191 = vunpack.c.l.b16 %v159
  %v192 = vunpack.c.l.b16 %v160
  %v193 = vunpack.c.l.b16 %v161
  %v194 = vunpack.c.l.b16 %v162
  %v195 = vunpack.c.l.b16 %v163
  %v196 = vunpack.c.l.b16 %v164
  %v197 = vpack.c.b16 %v182, %v181
  %v198 = vpack.c.b16 %v184, %v183
  %v199 = vpack.c.b16 %v186, %v185
  %v200 = vpack.c.b16 %v188, %v187
  %v201 = vpack.c.b16 %v190, %v189
  %v202 = vpack.c.b16 %v192, %v191
  %v203 = vpack.c.b16 %v194, %v193
  %v204 = vpack.c.b16 %v196, %v195
  %213 = vmatprep.subr.bf16.mxu0 0
  %214 = vmatpush1.bf16.msra.mxu0 %v197
  %215 = vmatprep.subr.bf16.mxu0 0
  %216 = vmatpush1.bf16.msra.mxu0 %v198
  %217 = vmatprep.subr.bf16.mxu0 0
  %218 = vmatpush1.bf16.msra.mxu0 %v199
  %219 = vmatprep.subr.bf16.mxu0 0
  %220 = vmatpush1.bf16.msra.mxu0 %v200
  %221 = vmatprep.subr.bf16.mxu0 0
  %222 = vmatpush1.bf16.msra.mxu0 %v201
  %223 = vmatprep.subr.bf16.mxu0 0
  %224 = vmatpush1.bf16.msra.mxu0 %v202
  %225 = vmatprep.subr.bf16.mxu0 0
  %226 = vmatpush1.bf16.msra.mxu0 %v203
  %227 = vmatprep.subr.bf16.mxu0 0
  %228 = vmatpush1.bf16.msra.mxu0 %v204
  %229 = vmatprep.subr.bf16.mxu0 0
  %230 = vmatpush1.bf16.msra.mxu0 0
  %231 = vmatprep.subr.bf16.mxu0 0
  %232 = vmatpush1.bf16.msra.mxu0 0
  %233 = vmatprep.subr.bf16.mxu0 0
  %234 = vmatpush1.bf16.msra.mxu0 0
  %235 = vmatprep.subr.bf16.mxu0 0
  %236 = vmatpush1.bf16.msra.mxu0 0
  %237 = vmatprep.subr.bf16.mxu0 0
  %238 = vmatpush1.bf16.msra.mxu0 0
  %239 = vmatprep.subr.bf16.mxu0 0
  %240 = vmatpush1.bf16.msra.mxu0 0
  %241 = vmatprep.subr.bf16.mxu0 0
  %242 = vmatpush1.bf16.msra.mxu0 0
  %243 = vmatprep.subr.bf16.mxu0 0
  %244 = vmatpush1.bf16.msra.mxu0 0
  %245 = vmatprep.mubr.bf16.mxu0 0
  %246 = vmatmul.mubr.bf16.gmra.mrb[0].mxu0 %v147
  %v247 = vpop.f32.mrb[0].mxu0
  %v248 = vadd.f32 0.0, %v247
  %v249 = vpop.f32.mrb[0].mxu0
  %v250 = vpop.f32.mrb[0].mxu0
  %v251 = vadd.f32 0.0, %v250
  %v252 = vpop.f32.mrb[0].mxu0
  %253 = vmatprep.mubr.bf16.mxu0 0
  %254 = vmatmul.mubr.bf16.gmra.mrb[0].mxu0 %v148
  %v255 = vpop.f32.mrb[0].mxu0
  %v256 = vadd.f32 0.0, %v255
  %v257 = vpop.f32.mrb[0].mxu0
  %v258 = vpop.f32.mrb[0].mxu0
  %v259 = vpop.f32.mrb[0].mxu0
  %260 = vdwg.mxu0
  %v261 = vadd.f32 %v144, %v248
  %v262 = vadd.f32 %v145, %v251
  %v263 = vadd.f32 %v146, %v256
  %264 = vst.msk [vmem:[#allocation2] sm:$0xff] %vm86, %v261
  %265 = vst.msk [vmem:[#allocation2 + $0x8] sm:$0xff] %vm86, %v262
  %vm266 = vcmask 517120
  %267 = vst.msk [vmem:[#allocation2 + $0x10] sm:$0x3] %vm266, %v263
  // Predicated region
  $region34: #{taggregate_forward.12} parent=0 // pred_check
    %p268 = pneg %p27
  $region35: #{taggregate_forward.12} parent=0 // pred_check_branch
    %270 = sbr.rel (%p268) target = $region37
  $region36: #{taggregate_forward.12} parent=0 // pred_region
    %v271 = vld [vmem:[#allocation2] sm:$0xff]
    %v272 = vld [vmem:[#allocation2 + $0x8] sm:$0xff]
    %v273 = vld [vmem:[#allocation2 + $0x10] sm:$0x3]
    %v274 = vld [vmem:[%s4] sm:$0x1]
    %v276 = vlaneseq
    %v277 = vshrl.u32 %v276, 7
    %v278 = vsub.s32 0, %v277
    %v279 = vrot.slane %v274, %v278
    %v281 = vadd.f32 %v271, %v279
    %v282 = vadd.f32 %v272, %v279
    %v283 = vadd.f32 %v273, %v279
    %v284 = vld [vmem:[%s0] sm:$0xf]
    %v285 = vld [vmem:[%s0 + $0x4] sm:$0xf]
    %v286 = vld [vmem:[%s0 + $0x8] sm:$0x1]
    %v287 = vunpack.c.l.bf16 %v284
    %v288 = vunpack.c.l.bf16 %v285
    %v289 = vunpack.c.l.bf16 %v286
    %v290 = vadd.f32 %v281, %v287
    %v291 = vadd.f32 %v282, %v288
    %v292 = vadd.f32 %v283, %v289
    %v293 = vsel %vm86, %v290, 0.0
    %294 = vadd.xlane.f32.xlu0 %v293
    %v295 = vpop.xlane.xlu0 %294
    %v296 = vsel %vm86, %v291, 0.0
    %297 = vadd.xlane.f32.xlu0 %v296
    %v298 = vpop.xlane.xlu0 %297
    %v299 = vsel %vm266, %v292, 0.0
    %300 = vadd.xlane.f32.xlu0 %v299
    %v301 = vpop.xlane.xlu0 %300
    %v302 = vrcp.pop 64.0
    %v303 = vmul.f32 %v295, %v302
    %v304 = vmul.f32 %v298, %v302
    %v305 = vmul.f32 %v301, %v302
    %v306 = vsub.f32 %v290, %v303
    %v307 = vsub.f32 %v291, %v304
    %v308 = vsub.f32 %v292, %v305
    %v309 = vmul.f32 %v306, %v306
    %v310 = vmul.f32 %v307, %v307
    %v311 = vmul.f32 %v308, %v308
    %v312 = vsel %vm86, %v309, 0.0
    %313 = vadd.xlane.f32.xlu0 %v312
    %v314 = vpop.xlane.xlu0 %313
    %v315 = vsel %vm86, %v310, 0.0
    %316 = vadd.xlane.f32.xlu0 %v315
    %v317 = vpop.xlane.xlu0 %316
    %v318 = vsel %vm266, %v311, 0.0
    %319 = vadd.xlane.f32.xlu0 %v318
    %v320 = vpop.xlane.xlu0 %319
    %v321 = vmul.f32 %v314, %v302
    %v322 = vmul.f32 %v317, %v302
    %v323 = vmul.f32 %v320, %v302
    %v324 = vadd.f32 %v321, 1e-05
    %v325 = vadd.f32 %v322, 1e-05
    %v326 = vadd.f32 %v323, 1e-05
    %v327 = vrsqrt.pop %v324
    %v328 = vrsqrt.pop %v325
    %v329 = vrsqrt.pop %v326
    %v330 = vmul.f32 %v306, %v327
    %v331 = vmul.f32 %v307, %v328
    %v332 = vmul.f32 %v308, %v329
    %v333 = vld [vmem:[%s5] sm:$0x1]
    %v335 = vlaneseq
    %v336 = vshrl.u32 %v335, 7
    %v337 = vsub.s32 0, %v336
    %v338 = vrot.slane %v333, %v337
    %v340 = vmul.f32 %v330, %v338
    %v341 = vmul.f32 %v331, %v338
    %v342 = vmul.f32 %v332, %v338
    %v343 = vld [vmem:[%s6] sm:$0x1]
    %v345 = vlaneseq
    %v346 = vshrl.u32 %v345, 7
    %v347 = vsub.s32 0, %v346
    %v348 = vrot.slane %v343, %v347
    %v350 = vadd.f32 %v340, %v348
    %v351 = vadd.f32 %v341, %v348
    %v352 = vadd.f32 %v342, %v348
    %v353 = vpack.c.bf16 %v351, %v350
    %v354 = vpack.c.bf16 %v352, %v352
    %v357 = vunpack.c.l.b16 %v353
    %v358 = vunpack.c.h.b16 %v353
    %v359 = vunpack.c.l.b16 %v354
    %v360 = vpack.c.b16 %v357, %v357
    %v361 = vpack.c.b16 %v358, %v358
    %v362 = vpack.c.b16 %v359, %v359
    %vm366 = vcmask 519168
    %367 = vst.msk [vmem:[%s7] sm:$0xf] %vm366, %v360
    %368 = vst.msk [vmem:[%s7 + $0x4] sm:$0xf] %vm366, %v361
    %vm369 = vcmask 516096
    %370 = vst.msk [vmem:[%s7 + $0x8] sm:$0x1] %vm369, %v362
  $region37: #{taggregate_forward.12} parent=0 // pred_fallthru
    _
  // Predicated region
  $region38: #{taggregate_forward.12} parent=0 // pred_check
    _
  $region39: #{taggregate_forward.12} parent=0 // pred_check_branch
    %372 = sbr.rel (0) target = $region41
  $region40: #{taggregate_forward.12} parent=0 // pred_region
    _
  $region41: #{taggregate_forward.12} parent=0 // pred_fallthru
    _
  // Predicated region
  $region42: #{taggregate_forward.12} parent=0 // pred_check
    _
  $region43: #{taggregate_forward.12} parent=0 // pred_check_branch
    %374 = sbr.rel (0) target = $region45
  $region44: #{taggregate_forward.12} parent=0 // pred_region
    _
  $region45: #{taggregate_forward.12} parent=0 // pred_fallthru
    _

// kernel: taggregate_forward.17
$region0: #{taggregate_forward.17}
  #allocation0 [shape = 'u32[]', space=smem, size = 0x4, offset = 0x4, fixed_abs, tag = 'smem constant byte address 0x4 - core index']
  #allocation1 [shape = 'u32[144,128]{1,0:T(1,128)}', space=vmem, size = 0x12000, scoped, tag = 'internal scratch']
  %s0 = inlined_call_operand.vmem [shape: bf16[2,64], index: 0, kind: input, shape index: {}]
  %s1 = inlined_call_operand.vmem [shape: f32[1,64], index: 1, kind: input, shape index: {}]
  %s2 = inlined_call_operand.vmem [shape: f32[1,64], index: 2, kind: input, shape index: {}]
  %s3 = inlined_call_operand.hbm [shape: f32[2,64], index: 3, kind: output, shape index: {}]
  %s4 = sld [smem:[#allocation0]]
  $region22: #{taggregate_forward.17} parent=0
    _
  %s6 = ssub.s32 1, %s4
  %s7 = scalar_select 0, %s6, %s4
  $region1: #{taggregate_forward.17} parent=0
    #allocation2 [shape = 'u8[1024]{0}', space=vmem, size = 0x400, scoped, tag = 'output window, operand 0, single buffered']
    #allocation3 [shape = 's32[1]{0}', space=sflag, size = 0x4, scoped, tag = 'scoped memory for taggregate_forward.17']
    %8 = vsyncpa [#allocation3], 0
    // Predicated region
    $region2: #{taggregate_forward.17} parent=1 // pred_check
      _
    $region3: #{taggregate_forward.17} parent=1 // pred_check_branch
      %10 = sbr.rel (0) target = $region5
    $region4: #{taggregate_forward.17} parent=1 // pred_region
      _
    $region5: #{taggregate_forward.17} parent=1 // pred_fallthru
      _
    // Predicated region
    $region6: #{taggregate_forward.17} parent=1 // pred_check
      _
    $region7: #{taggregate_forward.17} parent=1 // pred_check_branch
      %12 = sbr.rel (0) target = $region9
    $region8: #{taggregate_forward.17} parent=1 // pred_region
      _
    $region9: #{taggregate_forward.17} parent=1 // pred_fallthru
      _
    // Predicated region
    $region10: #{taggregate_forward.17} parent=1 // pred_check
      _
    $region11: #{taggregate_forward.17} parent=1 // pred_check_branch
      %14 = sbr.rel (0) target = $region13
    $region12: #{taggregate_forward.17} parent=1 // pred_region
      _
    $region13: #{taggregate_forward.17} parent=1 // pred_fallthru
      _
    %v15 = vld [vmem:[%s0] sm:$0x1]
    %v16 = vunpack.c.l.bf16 %v15
    %vm17 = vcmask 517120
    %v18 = vsel %vm17, %v16, 0.0
    %19 = vadd.xlane.f32.xlu0 %v18
    %v20 = vpop.xlane.xlu0 %19
    %v21 = vrcp.pop 64.0
    %v22 = vmul.f32 %v20, %v21
    %v23 = vsub.f32 %v16, %v22
    %v24 = vmul.f32 %v23, %v23
    %v25 = vsel %vm17, %v24, 0.0
    %26 = vadd.xlane.f32.xlu0 %v25
    %v27 = vpop.xlane.xlu0 %26
    %v28 = vmul.f32 %v27, %v21
    %v29 = vadd.f32 %v28, 1e-05
    %v30 = vrsqrt.pop %v29
    %v31 = vmul.f32 %v23, %v30
    %v32 = vld [vmem:[%s1] sm:$0x1]
    %v34 = vlaneseq
    %v35 = vshrl.u32 %v34, 7
    %v36 = vsub.s32 0, %v35
    %v37 = vrot.slane %v32, %v36
    %v39 = vmul.f32 %v31, %v37
    %v40 = vld [vmem:[%s2] sm:$0x1]
    %v42 = vlaneseq
    %v43 = vshrl.u32 %v42, 7
    %v44 = vsub.s32 0, %v43
    %v45 = vrot.slane %v40, %v44
    %v47 = vadd.f32 %v39, %v45
    %48 = vst.msk [vmem:[#allocation2] sm:$0x3] %vm17, %v47
    // Predicated region
    $region14: #{taggregate_forward.17} parent=1 // pred_check
      _
    $region15: #{taggregate_forward.17} parent=1 // pred_check_branch
      %50 = sbr.rel (0) target = $region17
    $region16: #{taggregate_forward.17} parent=1 // pred_region
      %s52 = ssub.s32 32, 32
      %53 = vsyncadd [#allocation3], %s52
      %s55 = sshll.u32 [#allocation2], 4
      %s56 = int_to_ptr.vmem [resolvable:$true] %s55
      %58 = dma.vmem_to_hbm [thread:$0]  %s56, 32, %s3, [#allocation3]
    $region17: #{taggregate_forward.17} parent=1 // pred_fallthru
      _
    // Predicated region
    $region18: #{taggregate_forward.17} parent=1 // pred_check
      _
    $region19: #{taggregate_forward.17} parent=1 // pred_check_branch
      %60 = sbr.rel (0) target = $region21
    $region20: #{taggregate_forward.17} parent=1 // pred_region
      %61 = dma.done [#allocation3], 32
    $region21: #{taggregate_forward.17} parent=1 // pred_fallthru
      _
    %62 = vsyncpa [#allocation3], 1

// kernel: taggregate_forward.10
$region0: #{taggregate_forward.10}
  #allocation0 [shape = 'u32[]', space=smem, size = 0x4, offset = 0x4, fixed_abs, tag = 'smem constant byte address 0x4 - core index']
  #allocation1 [shape = 'u32[144,128]{1,0:T(1,128)}', space=vmem, size = 0x12000, scoped, tag = 'internal scratch']
  %s0 = inlined_call_operand.vmem [shape: bf16[2,9,192], index: 0, kind: input, shape index: {}]
  %s1 = inlined_call_operand.vmem [shape: bf16[2,9,64], index: 1, kind: output, shape index: {}]
  %s2 = sld [smem:[#allocation0]]
  $region14: #{taggregate_forward.10} parent=0
    _
  %s4 = ssub.s32 1, %s2
  %s5 = scalar_select 0, %s4, %s2
  // Predicated region
  $region2: #{taggregate_forward.10} parent=0 // pred_check
    _
  $region3: #{taggregate_forward.10} parent=0 // pred_check_branch
    %7 = sbr.rel (0) target = $region5
  $region4: #{taggregate_forward.10} parent=0 // pred_region
    _
  $region5: #{taggregate_forward.10} parent=0 // pred_fallthru
    _
  %v9 = vld [vmem:[%s0] sm:$0xf]
  %v10 = vld [vmem:[%s0 + $0x8] sm:$0x1]
  %v11 = vld [vmem:[%s0 + $0x10] sm:$0xf]
  %v12 = vld [vmem:[%s0 + $0x18] sm:$0x1]
  %v13 = vld [vmem:[%s0 + $0x4] sm:$0xf]
  %v14 = vld [vmem:[%s0 + $0xc] sm:$0x1]
  %v15 = vld [vmem:[%s0 + $0x14] sm:$0xf]
  %v16 = vld [vmem:[%s0 + $0x1c] sm:$0x1]
  %v19 = vunpack.c.l.b16 %v9
  %v20 = vunpack.c.l.b16 %v10
  %v21 = vpack.c.b16 %v20, %v19
  %22 = vrot.lane.b32.xlu0 %v21, 64
  %v23 = vpop.permute.xlu0 %22
  %vm24 = vcmask 64512
  %v26 = vsel %vm24, %v21, 0
  %v29 = vsel %vm24, %v23, 0
  %31 = vmatprep.subr.bf16.mxu0 0
  %32 = vmatpush1.bf16.xpose.msra.mxu0 %v29
  %33 = vmatprep.subr.bf16.mxu0 0
  %34 = vmatpush1.bf16.xpose.msra.mxu0 0
  %35 = vmatprep.subr.bf16.mxu0 0
  %36 = vmatpush1.bf16.xpose.msra.mxu0 0
  %37 = vmatprep.subr.bf16.mxu0 0
  %38 = vmatpush1.bf16.xpose.msra.mxu0 0
  %39 = vmatprep.subr.bf16.mxu0 0
  %40 = vmatpush1.bf16.xpose.msra.mxu0 0
  %41 = vmatprep.subr.bf16.mxu0 0
  %42 = vmatpush1.bf16.xpose.msra.mxu0 0
  %43 = vmatprep.subr.bf16.mxu0 0
  %44 = vmatpush1.bf16.xpose.msra.mxu0 0
  %45 = vmatprep.subr.bf16.mxu0 0
  %46 = vmatpush1.bf16.xpose.msra.mxu0 0
  %47 = vmatprep.subr.bf16.mxu0 0
  %48 = vmatpush1.bf16.xpose.msra.mxu0 0
  %49 = vmatprep.subr.bf16.mxu0 0
  %50 = vmatpush1.bf16.xpose.msra.mxu0 0
  %51 = vmatprep.subr.bf16.mxu0 0
  %52 = vmatpush1.bf16.xpose.msra.mxu0 0
  %53 = vmatprep.subr.bf16.mxu0 0
  %54 = vmatpush1.bf16.xpose.msra.mxu0 0
  %55 = vmatprep.subr.bf16.mxu0 0
  %56 = vmatpush1.bf16.xpose.msra.mxu0 0
  %57 = vmatprep.subr.bf16.mxu0 0
  %58 = vmatpush1.bf16.xpose.msra.mxu0 0
  %59 = vmatprep.subr.bf16.mxu0 0
  %60 = vmatpush1.bf16.xpose.msra.mxu0 0
  %61 = vmatprep.subr.bf16.mxu0 0
  %62 = vmatpush1.bf16.xpose.msra.mxu0 0
  %63 = vmatprep.mubr.bf16.mxu0 0
  %64 = vmatmul.mubr.bf16.gmra.mrb[0].mxu0 %v26
  %v65 = vpop.f32.mrb[0].mxu0
  %v66 = vadd.f32 0.0, %v65
  %v67 = vpop.f32.mrb[0].mxu0
  %v68 = vpop.f32.mrb[0].mxu0
  %v69 = vadd.f32 0.0, %v68
  %v70 = vpop.f32.mrb[0].mxu0
  %71 = vdwg.mxu0
  %v74 = vunpack.c.l.b16 %v11
  %v75 = vunpack.c.l.b16 %v12
  %v76 = vpack.c.b16 %v75, %v74
  %77 = vrot.lane.b32.xlu0 %v76, 64
  %v78 = vpop.permute.xlu0 %77
  %v80 = vsel %vm24, %v76, 0
  %v83 = vsel %vm24, %v78, 0
  %85 = vmatprep.subr.bf16.mxu0 0
  %86 = vmatpush1.bf16.xpose.msra.mxu0 %v83
  %87 = vmatprep.subr.bf16.mxu0 0
  %88 = vmatpush1.bf16.xpose.msra.mxu0 0
  %89 = vmatprep.subr.bf16.mxu0 0
  %90 = vmatpush1.bf16.xpose.msra.mxu0 0
  %91 = vmatprep.subr.bf16.mxu0 0
  %92 = vmatpush1.bf16.xpose.msra.mxu0 0
  %93 = vmatprep.subr.bf16.mxu0 0
  %94 = vmatpush1.bf16.xpose.msra.mxu0 0
  %95 = vmatprep.subr.bf16.mxu0 0
  %96 = vmatpush1.bf16.xpose.msra.mxu0 0
  %97 = vmatprep.subr.bf16.mxu0 0
  %98 = vmatpush1.bf16.xpose.msra.mxu0 0
  %99 = vmatprep.subr.bf16.mxu0 0
  %100 = vmatpush1.bf16.xpose.msra.mxu0 0
  %101 = vmatprep.subr.bf16.mxu0 0
  %102 = vmatpush1.bf16.xpose.msra.mxu0 0
  %103 = vmatprep.subr.bf16.mxu0 0
  %104 = vmatpush1.bf16.xpose.msra.mxu0 0
  %105 = vmatprep.subr.bf16.mxu0 0
  %106 = vmatpush1.bf16.xpose.msra.mxu0 0
  %107 = vmatprep.subr.bf16.mxu0 0
  %108 = vmatpush1.bf16.xpose.msra.mxu0 0
  %109 = vmatprep.subr.bf16.mxu0 0
  %110 = vmatpush1.bf16.xpose.msra.mxu0 0
  %111 = vmatprep.subr.bf16.mxu0 0
  %112 = vmatpush1.bf16.xpose.msra.mxu0 0
  %113 = vmatprep.subr.bf16.mxu0 0
  %114 = vmatpush1.bf16.xpose.msra.mxu0 0
  %115 = vmatprep.subr.bf16.mxu0 0
  %116 = vmatpush1.bf16.xpose.msra.mxu0 0
  %117 = vmatprep.mubr.bf16.mxu0 0
  %118 = vmatmul.mubr.bf16.gmra.mrb[0].mxu0 %v80
  %v119 = vpop.f32.mrb[0].mxu0
  %v120 = vadd.f32 0.0, %v119
  %v121 = vpop.f32.mrb[0].mxu0
  %v122 = vpop.f32.mrb[0].mxu0
  %v123 = vadd.f32 0.0, %v122
  %v124 = vpop.f32.mrb[0].mxu0
  %125 = vdwg.mxu0
  %vm126 = vcmask 72704
  %v127 = vsel %vm126, %v66, -inf
  %128 = vmax.xlane.f32.xlu0 %v127
  %v129 = vpop.xlane.xlu0 %128
  %vm130 = vcmask 65536
  %v131 = vsel %vm130, %v69, -inf
  %132 = vmax.xlane.f32.xlu0 %v131
  %v133 = vpop.xlane.xlu0 %132
  %v134 = vsel %vm126, %v120, -inf
  %135 = vmax.xlane.f32.xlu0 %v134
  %v136 = vpop.xlane.xlu0 %135
  %v137 = vsel %vm130, %v123, -inf
  %138 = vmax.xlane.f32.xlu0 %v137
  %v139 = vpop.xlane.xlu0 %138
  %v140 = vsub.f32 %v66, %v129
  %v141 = vsub.f32 %v69, %v133
  %v142 = vsub.f32 %v120, %v136
  %v143 = vsub.f32 %v123, %v139
  %v144 = vmul.f32 %v140, 1.442695
  %v145 = vpow.pop %v144
  %v146 = vmul.f32 %v141, 1.442695
  %v147 = vpow.pop %v146
  %v148 = vmul.f32 %v142, 1.442695
  %v149 = vpow.pop %v148
  %v150 = vmul.f32 %v143, 1.442695
  %v151 = vpow.pop %v150
  %v152 = vsel %vm126, %v145, 0.0
  %153 = vadd.xlane.f32.xlu0 %v152
  %v154 = vpop.xlane.xlu0 %153
  %v155 = vsel %vm130, %v147, 0.0
  %156 = vadd.xlane.f32.xlu0 %v155
  %v157 = vpop.xlane.xlu0 %156
  %v158 = vsel %vm126, %v149, 0.0
  %159 = vadd.xlane.f32.xlu0 %v158
  %v160 = vpop.xlane.xlu0 %159
  %v161 = vsel %vm130, %v151, 0.0
  %162 = vadd.xlane.f32.xlu0 %v161
  %v163 = vpop.xlane.xlu0 %162
  %v164 = vrcp.pop %v154
  %v165 = vrcp.pop %v157
  %v166 = vrcp.pop %v160
  %v167 = vrcp.pop %v163
  %v168 = vmul.f32 %v145, %v164
  %v169 = vmul.f32 %v147, %v165
  %v170 = vmul.f32 %v149, %v166
  %v171 = vmul.f32 %v151, %v167
  %v172 = vpack.c.bf16 %v169, %v168
  %v173 = vpack.c.bf16 %v171, %v170
  %v176 = vunpack.c.l.b16 %v13
  %v177 = vunpack.c.l.b16 %v14
  %v178 = vpack.c.b16 %v177, %v176
  %v180 = vsel %vm126, %v172, 0
  %vm182 = vcmask 1043456
  %vm183 = vcmask 1044480
  %v184 = vsel %vm182, 4294967295, 65535
  %v185 = vsel %vm183, %v184, 0
  %v187 = vand.u32 %v178, %v185
  %189 = vmatprep.subr.bf16.mxu0 0
  %190 = vmatpush1.bf16.msra.mxu0 %v187
  %191 = vmatprep.subr.bf16.mxu0 0
  %192 = vmatpush1.bf16.msra.mxu0 0
  %193 = vmatprep.subr.bf16.mxu0 0
  %194 = vmatpush1.bf16.msra.mxu0 0
  %195 = vmatprep.subr.bf16.mxu0 0
  %196 = vmatpush1.bf16.msra.mxu0 0
  %197 = vmatprep.subr.bf16.mxu0 0
  %198 = vmatpush1.bf16.msra.mxu0 0
  %199 = vmatprep.subr.bf16.mxu0 0
  %200 = vmatpush1.bf16.msra.mxu0 0
  %201 = vmatprep.subr.bf16.mxu0 0
  %202 = vmatpush1.bf16.msra.mxu0 0
  %203 = vmatprep.subr.bf16.mxu0 0
  %204 = vmatpush1.bf16.msra.mxu0 0
  %205 = vmatprep.subr.bf16.mxu0 0
  %206 = vmatpush1.bf16.msra.mxu0 0
  %207 = vmatprep.subr.bf16.mxu0 0
  %208 = vmatpush1.bf16.msra.mxu0 0
  %209 = vmatprep.subr.bf16.mxu0 0
  %210 = vmatpush1.bf16.msra.mxu0 0
  %211 = vmatprep.subr.bf16.mxu0 0
  %212 = vmatpush1.bf16.msra.mxu0 0
  %213 = vmatprep.subr.bf16.mxu0 0
  %214 = vmatpush1.bf16.msra.mxu0 0
  %215 = vmatprep.subr.bf16.mxu0 0
  %216 = vmatpush1.bf16.msra.mxu0 0
  %217 = vmatprep.subr.bf16.mxu0 0
  %218 = vmatpush1.bf16.msra.mxu0 0
  %219 = vmatprep.subr.bf16.mxu0 0
  %220 = vmatpush1.bf16.msra.mxu0 0
  %221 = vmatprep.mubr.bf16.mxu0 0
  %222 = vmatmul.mubr.bf16.gmra.mrb[0].mxu0 %v180
  %v223 = vpop.f32.mrb[0].mxu0
  %v224 = vadd.f32 0.0, %v223
  %v225 = vpop.f32.mrb[0].mxu0
  %v226 = vpop.f32.mrb[0].mxu0
  %v227 = vadd.f32 0.0, %v226
  %v228 = vpop.f32.mrb[0].mxu0
  %229 = vdwg.mxu0
  %v232 = vunpack.c.l.b16 %v15
  %v233 = vunpack.c.l.b16 %v16
  %v234 = vpack.c.b16 %v233, %v232
  %v236 = vsel %vm126, %v173, 0
  %v239 = vand.u32 %v234, %v185
  %241 = vmatprep.subr.bf16.mxu0 0
  %242 = vmatpush1.bf16.msra.mxu0 %v239
  %243 = vmatprep.subr.bf16.mxu0 0
  %244 = vmatpush1.bf16.msra.mxu0 0
  %245 = vmatprep.subr.bf16.mxu0 0
  %246 = vmatpush1.bf16.msra.mxu0 0
  %247 = vmatprep.subr.bf16.mxu0 0
  %248 = vmatpush1.bf16.msra.mxu0 0
  %249 = vmatprep.subr.bf16.mxu0 0
  %250 = vmatpush1.bf16.msra.mxu0 0
  %251 = vmatprep.subr.bf16.mxu0 0
  %252 = vmatpush1.bf16.msra.mxu0 0
  %253 = vmatprep.subr.bf16.mxu0 0
  %254 = vmatpush1.bf16.msra.mxu0 0
  %255 = vmatprep.subr.bf16.mxu0 0
  %256 = vmatpush1.bf16.msra.mxu0 0
  %257 = vmatprep.subr.bf16.mxu0 0
  %258 = vmatpush1.bf16.msra.mxu0 0
  %259 = vmatprep.subr.bf16.mxu0 0
  %260 = vmatpush1.bf16.msra.mxu0 0
  %261 = vmatprep.subr.bf16.mxu0 0
  %262 = vmatpush1.bf16.msra.mxu0 0
  %263 = vmatprep.subr.bf16.mxu0 0
  %264 = vmatpush1.bf16.msra.mxu0 0
  %265 = vmatprep.subr.bf16.mxu0 0
  %266 = vmatpush1.bf16.msra.mxu0 0
  %267 = vmatprep.subr.bf16.mxu0 0
  %268 = vmatpush1.bf16.msra.mxu0 0
  %269 = vmatprep.subr.bf16.mxu0 0
  %270 = vmatpush1.bf16.msra.mxu0 0
  %271 = vmatprep.subr.bf16.mxu0 0
  %272 = vmatpush1.bf16.msra.mxu0 0
  %273 = vmatprep.mubr.bf16.mxu0 0
  %274 = vmatmul.mubr.bf16.gmra.mrb[0].mxu0 %v236
  %v275 = vpop.f32.mrb[0].mxu0
  %v276 = vadd.f32 0.0, %v275
  %v277 = vpop.f32.mrb[0].mxu0
  %v278 = vpop.f32.mrb[0].mxu0
  %v279 = vadd.f32 0.0, %v278
  %v280 = vpop.f32.mrb[0].mxu0
  %281 = vdwg.mxu0
  %v282 = vpack.c.bf16 %v227, %v224
  %v283 = vpack.c.bf16 %v279, %v276
  %v286 = vunpack.c.l.b16 %v282
  %v287 = vunpack.c.h.b16 %v282
  %v288 = vunpack.c.l.b16 %v283
  %v289 = vunpack.c.h.b16 %v283
  %v290 = vpack.c.b16 %v286, %v286
  %v291 = vpack.c.b16 %v287, %v287
  %v292 = vpack.c.b16 %v288, %v288
  %v293 = vpack.c.b16 %v289, %v289
  %vm298 = vcmask 60416
  %299 = vst.msk [vmem:[%s1] sm:$0xf] %vm298, %v290
  %vm300 = vcmask 57344
  %vm301 = vsmask.f32 256
  %vm302 = vmand %vm300, %vm301
  %v303 = vld [vmem:[%s1 + $0x4] sm:$0x1]
  %v304 = vsel %vm302, %v291, %v303
  %305 = vst [vmem:[%s1 + $0x4] sm:$0x1] %v304
  %306 = vst.msk [vmem:[%s1 + $0x8] sm:$0xf] %vm298, %v292
  %v307 = vld [vmem:[%s1 + $0xc] sm:$0x1]
  %v308 = vsel %vm302, %v293, %v307
  %309 = vst [vmem:[%s1 + $0xc] sm:$0x1] %v308
  %v310 = vld [vmem:[%s0] sm:$0xf]
  %v311 = vld [vmem:[%s0 + $0x8] sm:$0x1]
  %v312 = vld [vmem:[%s0 + $0x10] sm:$0xf]
  %v313 = vld [vmem:[%s0 + $0x18] sm:$0x1]
  %v314 = vld [vmem:[%s0 + $0x4] sm:$0xf]
  %v315 = vld [vmem:[%s0 + $0xc] sm:$0x1]
  %v316 = vld [vmem:[%s0 + $0x14] sm:$0xf]
  %v317 = vld [vmem:[%s0 + $0x1c] sm:$0x1]
  %v320 = vunpack.c.l.b16 %v310
  %v321 = vunpack.c.l.b16 %v311
  %v322 = vpack.c.b16 %v321, %v320
  %323 = vrot.lane.b32.xlu0 %v322, 120
  %v324 = vpop.permute.xlu0 %323
  %325 = vrot.lane.b32.xlu0 %v322, 56
  %v326 = vpop.permute.xlu0 %325
  %v328 = vsel %vm24, %v324, 0
  %v331 = vsel %vm24, %v326, 0
  %333 = vmatprep.subr.bf16.mxu0 0
  %334 = vmatpush1.bf16.xpose.msra.mxu0 %v331
  %335 = vmatprep.subr.bf16.mxu0 0
  %336 = vmatpush1.bf16.xpose.msra.mxu0 0
  %337 = vmatprep.subr.bf16.mxu0 0
  %338 = vmatpush1.bf16.xpose.msra.mxu0 0
  %339 = vmatprep.subr.bf16.mxu0 0
  %340 = vmatpush1.bf16.xpose.msra.mxu0 0
  %341 = vmatprep.subr.bf16.mxu0 0
  %342 = vmatpush1.bf16.xpose.msra.mxu0 0
  %343 = vmatprep.subr.bf16.mxu0 0
  %344 = vmatpush1.bf16.xpose.msra.mxu0 0
  %345 = vmatprep.subr.bf16.mxu0 0
  %346 = vmatpush1.bf16.xpose.msra.mxu0 0
  %347 = vmatprep.subr.bf16.mxu0 0
  %348 = vmatpush1.bf16.xpose.msra.mxu0 0
  %349 = vmatprep.subr.bf16.mxu0 0
  %350 = vmatpush1.bf16.xpose.msra.mxu0 0
  %351 = vmatprep.subr.bf16.mxu0 0
  %352 = vmatpush1.bf16.xpose.msra.mxu0 0
  %353 = vmatprep.subr.bf16.mxu0 0
  %354 = vmatpush1.bf16.xpose.msra.mxu0 0
  %355 = vmatprep.subr.bf16.mxu0 0
  %356 = vmatpush1.bf16.xpose.msra.mxu0 0
  %357 = vmatprep.subr.bf16.mxu0 0
  %358 = vmatpush1.bf16.xpose.msra.mxu0 0
  %359 = vmatprep.subr.bf16.mxu0 0
  %360 = vmatpush1.bf16.xpose.msra.mxu0 0
  %361 = vmatprep.subr.bf16.mxu0 0
  %362 = vmatpush1.bf16.xpose.msra.mxu0 0
  %363 = vmatprep.subr.bf16.mxu0 0
  %364 = vmatpush1.bf16.xpose.msra.mxu0 0
  %365 = vmatprep.mubr.bf16.mxu0 0
  %366 = vmatmul.mubr.bf16.gmra.mrb[0].mxu0 %v328
  %v367 = vpop.f32.mrb[0].mxu0
  %v368 = vadd.f32 0.0, %v367
  %v369 = vpop.f32.mrb[0].mxu0
  %v370 = vpop.f32.mrb[0].mxu0
  %v371 = vadd.f32 0.0, %v370
  %v372 = vpop.f32.mrb[0].mxu0
  %373 = vdwg.mxu0
  %v376 = vunpack.c.l.b16 %v312
  %v377 = vunpack.c.l.b16 %v313
  %v378 = vpack.c.b16 %v377, %v376
  %379 = vrot.lane.b32.xlu0 %v378, 120
  %v380 = vpop.permute.xlu0 %379
  %381 = vrot.lane.b32.xlu0 %v378, 56
  %v382 = vpop.permute.xlu0 %381
  %v384 = vsel %vm24, %v380, 0
  %v387 = vsel %vm24, %v382, 0
  %389 = vmatprep.subr.bf16.mxu0 0
  %390 = vmatpush1.bf16.xpose.msra.mxu0 %v387
  %391 = vmatprep.subr.bf16.mxu0 0
  %392 = vmatpush1.bf16.xpose.msra.mxu0 0
  %393 = vmatprep.subr.bf16.mxu0 0
  %394 = vmatpush1.bf16.xpose.msra.mxu0 0
  %395 = vmatprep.subr.bf16.mxu0 0
  %396 = vmatpush1.bf16.xpose.msra.mxu0 0
  %397 = vmatprep.subr.bf16.mxu0 0
  %398 = vmatpush1.bf16.xpose.msra.mxu0 0
  %399 = vmatprep.subr.bf16.mxu0 0
  %400 = vmatpush1.bf16.xpose.msra.mxu0 0
  %401 = vmatprep.subr.bf16.mxu0 0
  %402 = vmatpush1.bf16.xpose.msra.mxu0 0
  %403 = vmatprep.subr.bf16.mxu0 0
  %404 = vmatpush1.bf16.xpose.msra.mxu0 0
  %405 = vmatprep.subr.bf16.mxu0 0
  %406 = vmatpush1.bf16.xpose.msra.mxu0 0
  %407 = vmatprep.subr.bf16.mxu0 0
  %408 = vmatpush1.bf16.xpose.msra.mxu0 0
  %409 = vmatprep.subr.bf16.mxu0 0
  %410 = vmatpush1.bf16.xpose.msra.mxu0 0
  %411 = vmatprep.subr.bf16.mxu0 0
  %412 = vmatpush1.bf16.xpose.msra.mxu0 0
  %413 = vmatprep.subr.bf16.mxu0 0
  %414 = vmatpush1.bf16.xpose.msra.mxu0 0
  %415 = vmatprep.subr.bf16.mxu0 0
  %416 = vmatpush1.bf16.xpose.msra.mxu0 0
  %417 = vmatprep.subr.bf16.mxu0 0
  %418 = vmatpush1.bf16.xpose.msra.mxu0 0
  %419 = vmatprep.subr.bf16.mxu0 0
  %420 = vmatpush1.bf16.xpose.msra.mxu0 0
  %421 = vmatprep.mubr.bf16.mxu0 0
  %422 = vmatmul.mubr.bf16.gmra.mrb[0].mxu0 %v384
  %v423 = vpop.f32.mrb[0].mxu0
  %v424 = vadd.f32 0.0, %v423
  %v425 = vpop.f32.mrb[0].mxu0
  %v426 = vpop.f32.mrb[0].mxu0
  %v427 = vadd.f32 0.0, %v426
  %v428 = vpop.f32.mrb[0].mxu0
  %429 = vdwg.mxu0
  %v430 = vsel %vm126, %v368, -inf
  %431 = vmax.xlane.f32.xlu0 %v430
  %v432 = vpop.xlane.xlu0 %431
  %v433 = vsel %vm130, %v371, -inf
  %434 = vmax.xlane.f32.xlu0 %v433
  %v435 = vpop.xlane.xlu0 %434
  %v436 = vsel %vm126, %v424, -inf
  %437 = vmax.xlane.f32.xlu0 %v436
  %v438 = vpop.xlane.xlu0 %437
  %v439 = vsel %vm130, %v427, -inf
  %440 = vmax.xlane.f32.xlu0 %v439
  %v441 = vpop.xlane.xlu0 %440
  %v442 = vsub.f32 %v368, %v432
  %v443 = vsub.f32 %v371, %v435
  %v444 = vsub.f32 %v424, %v438
  %v445 = vsub.f32 %v427, %v441
  %v446 = vmul.f32 %v442, 1.442695
  %v447 = vpow.pop %v446
  %v448 = vmul.f32 %v443, 1.442695
  %v449 = vpow.pop %v448
  %v450 = vmul.f32 %v444, 1.442695
  %v451 = vpow.pop %v450
  %v452 = vmul.f32 %v445, 1.442695
  %v453 = vpow.pop %v452
  %v454 = vsel %vm126, %v447, 0.0
  %455 = vadd.xlane.f32.xlu0 %v454
  %v456 = vpop.xlane.xlu0 %455
  %v457 = vsel %vm130, %v449, 0.0
  %458 = vadd.xlane.f32.xlu0 %v457
  %v459 = vpop.xlane.xlu0 %458
  %v460 = vsel %vm126, %v451, 0.0
  %461 = vadd.xlane.f32.xlu0 %v460
  %v462 = vpop.xlane.xlu0 %461
  %v463 = vsel %vm130, %v453, 0.0
  %464 = vadd.xlane.f32.xlu0 %v463
  %v465 = vpop.xlane.xlu0 %464
  %v466 = vrcp.pop %v456
  %v467 = vrcp.pop %v459
  %v468 = vrcp.pop %v462
  %v469 = vrcp.pop %v465
  %v470 = vmul.f32 %v447, %v466
  %v471 = vmul.f32 %v449, %v467
  %v472 = vmul.f32 %v451, %v468
  %v473 = vmul.f32 %v453, %v469
  %v474 = vpack.c.bf16 %v471, %v470
  %v475 = vpack.c.bf16 %v473, %v472
  %v478 = vunpack.c.l.b16 %v314
  %v479 = vunpack.c.l.b16 %v315
  %v480 = vpack.c.b16 %v479, %v478
  %481 = vrot.lane.b32.xlu0 %v480, 120
  %v482 = vpop.permute.xlu0 %481
  %v484 = vsel %vm126, %v474, 0
  %v487 = vand.u32 %v482, %v185
  %489 = vmatprep.subr.bf16.mxu0 0
  %490 = vmatpush1.bf16.msra.mxu0 %v487
  %491 = vmatprep.subr.bf16.mxu0 0
  %492 = vmatpush1.bf16.msra.mxu0 0
  %493 = vmatprep.subr.bf16.mxu0 0
  %494 = vmatpush1.bf16.msra.mxu0 0
  %495 = vmatprep.subr.bf16.mxu0 0
  %496 = vmatpush1.bf16.msra.mxu0 0
  %497 = vmatprep.subr.bf16.mxu0 0
  %498 = vmatpush1.bf16.msra.mxu0 0
  %499 = vmatprep.subr.bf16.mxu0 0
  %500 = vmatpush1.bf16.msra.mxu0 0
  %501 = vmatprep.subr.bf16.mxu0 0
  %502 = vmatpush1.bf16.msra.mxu0 0
  %503 = vmatprep.subr.bf16.mxu0 0
  %504 = vmatpush1.bf16.msra.mxu0 0
  %505 = vmatprep.subr.bf16.mxu0 0
  %506 = vmatpush1.bf16.msra.mxu0 0
  %507 = vmatprep.subr.bf16.mxu0 0
  %508 = vmatpush1.bf16.msra.mxu0 0
  %509 = vmatprep.subr.bf16.mxu0 0
  %510 = vmatpush1.bf16.msra.mxu0 0
  %511 = vmatprep.subr.bf16.mxu0 0
  %512 = vmatpush1.bf16.msra.mxu0 0
  %513 = vmatprep.subr.bf16.mxu0 0
  %514 = vmatpush1.bf16.msra.mxu0 0
  %515 = vmatprep.subr.bf16.mxu0 0
  %516 = vmatpush1.bf16.msra.mxu0 0
  %517 = vmatprep.subr.bf16.mxu0 0
  %518 = vmatpush1.bf16.msra.mxu0 0
  %519 = vmatprep.subr.bf16.mxu0 0
  %520 = vmatpush1.bf16.msra.mxu0 0
  %521 = vmatprep.mubr.bf16.mxu0 0
  %522 = vmatmul.mubr.bf16.gmra.mrb[0].mxu0 %v484
  %v523 = vpop.f32.mrb[0].mxu0
  %v524 = vadd.f32 0.0, %v523
  %v525 = vpop.f32.mrb[0].mxu0
  %v526 = vpop.f32.mrb[0].mxu0
  %v527 = vadd.f32 0.0, %v526
  %v528 = vpop.f32.mrb[0].mxu0
  %529 = vdwg.mxu0
  %v532 = vunpack.c.l.b16 %v316
  %v533 = vunpack.c.l.b16 %v317
  %v534 = vpack.c.b16 %v533, %v532
  %535 = vrot.lane.b32.xlu0 %v534, 120
  %v536 = vpop.permute.xlu0 %535
  %v538 = vsel %vm126, %v475, 0
  %v541 = vand.u32 %v536, %v185
  %543 = vmatprep.subr.bf16.mxu0 0
  %544 = vmatpush1.bf16.msra.mxu0 %v541
  %545 = vmatprep.subr.bf16.mxu0 0
  %546 = vmatpush1.bf16.msra.mxu0 0
  %547 = vmatprep.subr.bf16.mxu0 0
  %548 = vmatpush1.bf16.msra.mxu0 0
  %549 = vmatprep.subr.bf16.mxu0 0
  %550 = vmatpush1.bf16.msra.mxu0 0
  %551 = vmatprep.subr.bf16.mxu0 0
  %552 = vmatpush1.bf16.msra.mxu0 0
  %553 = vmatprep.subr.bf16.mxu0 0
  %554 = vmatpush1.bf16.msra.mxu0 0
  %555 = vmatprep.subr.bf16.mxu0 0
  %556 = vmatpush1.bf16.msra.mxu0 0
  %557 = vmatprep.subr.bf16.mxu0 0
  %558 = vmatpush1.bf16.msra.mxu0 0
  %559 = vmatprep.subr.bf16.mxu0 0
  %560 = vmatpush1.bf16.msra.mxu0 0
  %561 = vmatprep.subr.bf16.mxu0 0
  %562 = vmatpush1.bf16.msra.mxu0 0
  %563 = vmatprep.subr.bf16.mxu0 0
  %564 = vmatpush1.bf16.msra.mxu0 0
  %565 = vmatprep.subr.bf16.mxu0 0
  %566 = vmatpush1.bf16.msra.mxu0 0
  %567 = vmatprep.subr.bf16.mxu0 0
  %568 = vmatpush1.bf16.msra.mxu0 0
  %569 = vmatprep.subr.bf16.mxu0 0
  %570 = vmatpush1.bf16.msra.mxu0 0
  %571 = vmatprep.subr.bf16.mxu0 0
  %572 = vmatpush1.bf16.msra.mxu0 0
  %573 = vmatprep.subr.bf16.mxu0 0
  %574 = vmatpush1.bf16.msra.mxu0 0
  %575 = vmatprep.mubr.bf16.mxu0 0
  %576 = vmatmul.mubr.bf16.gmra.mrb[0].mxu0 %v538
  %v577 = vpop.f32.mrb[0].mxu0
  %v578 = vadd.f32 0.0, %v577
  %v579 = vpop.f32.mrb[0].mxu0
  %v580 = vpop.f32.mrb[0].mxu0
  %v581 = vadd.f32 0.0, %v580
  %v582 = vpop.f32.mrb[0].mxu0
  %583 = vdwg.mxu0
  %v584 = vpack.c.bf16 %v527, %v524
  %v585 = vpack.c.bf16 %v581, %v578
  %v588 = vunpack.c.l.b16 %v584
  %v589 = vunpack.c.h.b16 %v584
  %v590 = vunpack.c.l.b16 %v585
  %v591 = vunpack.c.h.b16 %v585
  %v592 = vpack.c.b16 %v588, %v588
  %v593 = vpack.c.b16 %v589, %v589
  %v594 = vpack.c.b16 %v590, %v590
  %v595 = vpack.c.b16 %v591, %v591
  %596 = vrot.lane.b32.xlu0 %v592, 8
  %v597 = vpop.permute.xlu0 %596
  %598 = vrot.lane.b32.xlu0 %v593, 8
  %v599 = vpop.permute.xlu0 %598
  %600 = vrot.lane.b32.xlu0 %v594, 8
  %v601 = vpop.permute.xlu0 %600
  %602 = vrot.lane.b32.xlu0 %v595, 8
  %v603 = vpop.permute.xlu0 %602
  %vm608 = vcmask 126016
  %609 = vst.msk [vmem:[%s1] sm:$0xf] %vm608, %v597
  %vm610 = vcmask 122944
  %vm611 = vmand %vm610, %vm301
  %v612 = vld [vmem:[%s1 + $0x4] sm:$0x1]
  %v613 = vsel %vm611, %v599, %v612
  %614 = vst [vmem:[%s1 + $0x4] sm:$0x1] %v613
  %615 = vst.msk [vmem:[%s1 + $0x8] sm:$0xf] %vm608, %v601
  %v616 = vld [vmem:[%s1 + $0xc] sm:$0x1]
  %v617 = vsel %vm611, %v603, %v616
  %618 = vst [vmem:[%s1 + $0xc] sm:$0x1] %v617
  %v619 = vld [vmem:[%s0] sm:$0xf]
  %v620 = vld [vmem:[%s0 + $0x8] sm:$0x1]
  %v621 = vld [vmem:[%s0 + $0x10] sm:$0xf]
  %v622 = vld [vmem:[%s0 + $0x18] sm:$0x1]
  %v623 = vld [vmem:[%s0 + $0x4] sm:$0xf]
  %v624 = vld [vmem:[%s0 + $0xc] sm:$0x1]
  %v625 = vld [vmem:[%s0 + $0x14] sm:$0xf]
  %v626 = vld [vmem:[%s0 + $0x1c] sm:$0x1]
  %v629 = vunpack.c.l.b16 %v619
  %v630 = vunpack.c.l.b16 %v620
  %v631 = vpack.c.b16 %v630, %v629
  %632 = vrot.lane.b32.xlu0 %v631, 112
  %v633 = vpop.permute.xlu0 %632
  %634 = vrot.lane.b32.xlu0 %v631, 48
  %v635 = vpop.permute.xlu0 %634
  %v637 = vsel %vm24, %v633, 0
  %v640 = vsel %vm24, %v635, 0
  %642 = vmatprep.subr.bf16.mxu0 0
  %643 = vmatpush1.bf16.xpose.msra.mxu0 %v640
  %644 = vmatprep.subr.bf16.mxu0 0
  %645 = vmatpush1.bf16.xpose.msra.mxu0 0
  %646 = vmatprep.subr.bf16.mxu0 0
  %647 = vmatpush1.bf16.xpose.msra.mxu0 0
  %648 = vmatprep.subr.bf16.mxu0 0
  %649 = vmatpush1.bf16.xpose.msra.mxu0 0
  %650 = vmatprep.subr.bf16.mxu0 0
  %651 = vmatpush1.bf16.xpose.msra.mxu0 0
  %652 = vmatprep.subr.bf16.mxu0 0
  %653 = vmatpush1.bf16.xpose.msra.mxu0 0
  %654 = vmatprep.subr.bf16.mxu0 0
  %655 = vmatpush1.bf16.xpose.msra.mxu0 0
  %656 = vmatprep.subr.bf16.mxu0 0
  %657 = vmatpush1.bf16.xpose.msra.mxu0 0
  %658 = vmatprep.subr.bf16.mxu0 0
  %659 = vmatpush1.bf16.xpose.msra.mxu0 0
  %660 = vmatprep.subr.bf16.mxu0 0
  %661 = vmatpush1.bf16.xpose.msra.mxu0 0
  %662 = vmatprep.subr.bf16.mxu0 0
  %663 = vmatpush1.bf16.xpose.msra.mxu0 0
  %664 = vmatprep.subr.bf16.mxu0 0
  %665 = vmatpush1.bf16.xpose.msra.mxu0 0
  %666 = vmatprep.subr.bf16.mxu0 0
  %667 = vmatpush1.bf16.xpose.msra.mxu0 0
  %668 = vmatprep.subr.bf16.mxu0 0
  %669 = vmatpush1.bf16.xpose.msra.mxu0 0
  %670 = vmatprep.subr.bf16.mxu0 0
  %671 = vmatpush1.bf16.xpose.msra.mxu0 0
  %672 = vmatprep.subr.bf16.mxu0 0
  %673 = vmatpush1.bf16.xpose.msra.mxu0 0
  %674 = vmatprep.mubr.bf16.mxu0 0
  %675 = vmatmul.mubr.bf16.gmra.mrb[0].mxu0 %v637
  %v676 = vpop.f32.mrb[0].mxu0
  %v677 = vadd.f32 0.0, %v676
  %v678 = vpop.f32.mrb[0].mxu0
  %v679 = vpop.f32.mrb[0].mxu0
  %v680 = vadd.f32 0.0, %v679
  %v681 = vpop.f32.mrb[0].mxu0
  %682 = vdwg.mxu0
  %v685 = vunpack.c.l.b16 %v621
  %v686 = vunpack.c.l.b16 %v622
  %v687 = vpack.c.b16 %v686, %v685
  %688 = vrot.lane.b32.xlu0 %v687, 112
  %v689 = vpop.permute.xlu0 %688
  %690 = vrot.lane.b32.xlu0 %v687, 48
  %v691 = vpop.permute.xlu0 %690
  %v693 = vsel %vm24, %v689, 0
  %v696 = vsel %vm24, %v691, 0
  %698 = vmatprep.subr.bf16.mxu0 0
  %699 = vmatpush1.bf16.xpose.msra.mxu0 %v696
  %700 = vmatprep.subr.bf16.mxu0 0
  %701 = vmatpush1.bf16.xpose.msra.mxu0 0
  %702 = vmatprep.subr.bf16.mxu0 0
  %703 = vmatpush1.bf16.xpose.msra.mxu0 0
  %704 = vmatprep.subr.bf16.mxu0 0
  %705 = vmatpush1.bf16.xpose.msra.mxu0 0
  %706 = vmatprep.subr.bf16.mxu0 0
  %707 = vmatpush1.bf16.xpose.msra.mxu0 0
  %708 = vmatprep.subr.bf16.mxu0 0
  %709 = vmatpush1.bf16.xpose.msra.mxu0 0
  %710 = vmatprep.subr.bf16.mxu0 0
  %711 = vmatpush1.bf16.xpose.msra.mxu0 0
  %712 = vmatprep.subr.bf16.mxu0 0
  %713 = vmatpush1.bf16.xpose.msra.mxu0 0
  %714 = vmatprep.subr.bf16.mxu0 0
  %715 = vmatpush1.bf16.xpose.msra.mxu0 0
  %716 = vmatprep.subr.bf16.mxu0 0
  %717 = vmatpush1.bf16.xpose.msra.mxu0 0
  %718 = vmatprep.subr.bf16.mxu0 0
  %719 = vmatpush1.bf16.xpose.msra.mxu0 0
  %720 = vmatprep.subr.bf16.mxu0 0
  %721 = vmatpush1.bf16.xpose.msra.mxu0 0
  %722 = vmatprep.subr.bf16.mxu0 0
  %723 = vmatpush1.bf16.xpose.msra.mxu0 0
  %724 = vmatprep.subr.bf16.mxu0 0
  %725 = vmatpush1.bf16.xpose.msra.mxu0 0
  %726 = vmatprep.subr.bf16.mxu0 0
  %727 = vmatpush1.bf16.xpose.msra.mxu0 0
  %728 = vmatprep.subr.bf16.mxu0 0
  %729 = vmatpush1.bf16.xpose.msra.mxu0 0
  %730 = vmatprep.mubr.bf16.mxu0 0
  %731 = vmatmul.mubr.bf16.gmra.mrb[0].mxu0 %v693
  %v732 = vpop.f32.mrb[0].mxu0
  %v733 = vadd.f32 0.0, %v732
  %v734 = vpop.f32.mrb[0].mxu0
  %v735 = vpop.f32.mrb[0].mxu0
  %v736 = vadd.f32 0.0, %v735
  %v737 = vpop.f32.mrb[0].mxu0
  %738 = vdwg.mxu0
  %v739 = vsel %vm126, %v677, -inf
  %740 = vmax.xlane.f32.xlu0 %v739
  %v741 = vpop.xlane.xlu0 %740
  %v742 = vsel %vm130, %v680, -inf
  %743 = vmax.xlane.f32.xlu0 %v742
  %v744 = vpop.xlane.xlu0 %743
  %v745 = vsel %vm126, %v733, -inf
  %746 = vmax.xlane.f32.xlu0 %v745
  %v747 = vpop.xlane.xlu0 %746
  %v748 = vsel %vm130, %v736, -inf
  %749 = vmax.xlane.f32.xlu0 %v748
  %v750 = vpop.xlane.xlu0 %749
  %v751 = vsub.f32 %v677, %v741
  %v752 = vsub.f32 %v680, %v744
  %v753 = vsub.f32 %v733, %v747
  %v754 = vsub.f32 %v736, %v750
  %v755 = vmul.f32 %v751, 1.442695
  %v756 = vpow.pop %v755
  %v757 = vmul.f32 %v752, 1.442695
  %v758 = vpow.pop %v757
  %v759 = vmul.f32 %v753, 1.442695
  %v760 = vpow.pop %v759
  %v761 = vmul.f32 %v754, 1.442695
  %v762 = vpow.pop %v761
  %v763 = vsel %vm126, %v756, 0.0
  %764 = vadd.xlane.f32.xlu0 %v763
  %v765 = vpop.xlane.xlu0 %764
  %v766 = vsel %vm130, %v758, 0.0
  %767 = vadd.xlane.f32.xlu0 %v766
  %v768 = vpop.xlane.xlu0 %767
  %v769 = vsel %vm126, %v760, 0.0
  %770 = vadd.xlane.f32.xlu0 %v769
  %v771 = vpop.xlane.xlu0 %770
  %v772 = vsel %vm130, %v762, 0.0
  %773 = vadd.xlane.f32.xlu0 %v772
  %v774 = vpop.xlane.xlu0 %773
  %v775 = vrcp.pop %v765
  %v776 = vrcp.pop %v768
  %v777 = vrcp.pop %v771
  %v778 = vrcp.pop %v774
  %v779 = vmul.f32 %v756, %v775
  %v780 = vmul.f32 %v758, %v776
  %v781 = vmul.f32 %v760, %v777
  %v782 = vmul.f32 %v762, %v778
  %v783 = vpack.c.bf16 %v780, %v779
  %v784 = vpack.c.bf16 %v782, %v781
  %v787 = vunpack.c.l.b16 %v623
  %v788 = vunpack.c.l.b16 %v624
  %v789 = vpack.c.b16 %v788, %v787
  %790 = vrot.lane.b32.xlu0 %v789, 112
  %v791 = vpop.permute.xlu0 %790
  %v793 = vsel %vm126, %v783, 0
  %v796 = vand.u32 %v791, %v185
  %798 = vmatprep.subr.bf16.mxu0 0
  %799 = vmatpush1.bf16.msra.mxu0 %v796
  %800 = vmatprep.subr.bf16.mxu0 0
  %801 = vmatpush1.bf16.msra.mxu0 0
  %802 = vmatprep.subr.bf16.mxu0 0
  %803 = vmatpush1.bf16.msra.mxu0 0
  %804 = vmatprep.subr.bf16.mxu0 0
  %805 = vmatpush1.bf16.msra.mxu0 0
  %806 = vmatprep.subr.bf16.mxu0 0
  %807 = vmatpush1.bf16.msra.mxu0 0
  %808 = vmatprep.subr.bf16.mxu0 0
  %809 = vmatpush1.bf16.msra.mxu0 0
  %810 = vmatprep.subr.bf16.mxu0 0
  %811 = vmatpush1.bf16.msra.mxu0 0
  %812 = vmatprep.subr.bf16.mxu0 0
  %813 = vmatpush1.bf16.msra.mxu0 0
  %814 = vmatprep.subr.bf16.mxu0 0
  %815 = vmatpush1.bf16.msra.mxu0 0
  %816 = vmatprep.subr.bf16.mxu0 0
  %817 = vmatpush1.bf16.msra.mxu0 0
  %818 = vmatprep.subr.bf16.mxu0 0
  %819 = vmatpush1.bf16.msra.mxu0 0
  %820 = vmatprep.subr.bf16.mxu0 0
  %821 = vmatpush1.bf16.msra.mxu0 0
  %822 = vmatprep.subr.bf16.mxu0 0
  %823 = vmatpush1.bf16.msra.mxu0 0
  %824 = vmatprep.subr.bf16.mxu0 0
  %825 = vmatpush1.bf16.msra.mxu0 0
  %826 = vmatprep.subr.bf16.mxu0 0
  %827 = vmatpush1.bf16.msra.mxu0 0
  %828 = vmatprep.subr.bf16.mxu0 0
  %829 = vmatpush1.bf16.msra.mxu0 0
  %830 = vmatprep.mubr.bf16.mxu0 0
  %831 = vmatmul.mubr.bf16.gmra.mrb[0].mxu0 %v793
  %v832 = vpop.f32.mrb[0].mxu0
  %v833 = vadd.f32 0.0, %v832
  %v834 = vpop.f32.mrb[0].mxu0
  %v835 = vpop.f32.mrb[0].mxu0
  %v836 = vadd.f32 0.0, %v835
  %v837 = vpop.f32.mrb[0].mxu0
  %838 = vdwg.mxu0
  %v841 = vunpack.c.l.b16 %v625
  %v842 = vunpack.c.l.b16 %v626
  %v843 = vpack.c.b16 %v842, %v841
  %844 = vrot.lane.b32.xlu0 %v843, 112
  %v845 = vpop.permute.xlu0 %844
  %v847 = vsel %vm126, %v784, 0
  %v850 = vand.u32 %v845, %v185
  %852 = vmatprep.subr.bf16.mxu0 0
  %853 = vmatpush1.bf16.msra.mxu0 %v850
  %854 = vmatprep.subr.bf16.mxu0 0
  %855 = vmatpush1.bf16.msra.mxu0 0
  %856 = vmatprep.subr.bf16.mxu0 0
  %857 = vmatpush1.bf16.msra.mxu0 0
  %858 = vmatprep.subr.bf16.mxu0 0
  %859 = vmatpush1.bf16.msra.mxu0 0
  %860 = vmatprep.subr.bf16.mxu0 0
  %861 = vmatpush1.bf16.msra.mxu0 0
  %862 = vmatprep.subr.bf16.mxu0 0
  %863 = vmatpush1.bf16.msra.mxu0 0
  %864 = vmatprep.subr.bf16.mxu0 0
  %865 = vmatpush1.bf16.msra.mxu0 0
  %866 = vmatprep.subr.bf16.mxu0 0
  %867 = vmatpush1.bf16.msra.mxu0 0
  %868 = vmatprep.subr.bf16.mxu0 0
  %869 = vmatpush1.bf16.msra.mxu0 0
  %870 = vmatprep.subr.bf16.mxu0 0
  %871 = vmatpush1.bf16.msra.mxu0 0
  %872 = vmatprep.subr.bf16.mxu0 0
  %873 = vmatpush1.bf16.msra.mxu0 0
  %874 = vmatprep.subr.bf16.mxu0 0
  %875 = vmatpush1.bf16.msra.mxu0 0
  %876 = vmatprep.subr.bf16.mxu0 0
  %877 = vmatpush1.bf16.msra.mxu0 0
  %878 = vmatprep.subr.bf16.mxu0 0
  %879 = vmatpush1.bf16.msra.mxu0 0
  %880 = vmatprep.subr.bf16.mxu0 0
  %881 = vmatpush1.bf16.msra.mxu0 0
  %882 = vmatprep.subr.bf16.mxu0 0
  %883 = vmatpush1.bf16.msra.mxu0 0
  %884 = vmatprep.mubr.bf16.mxu0 0
  %885 = vmatmul.mubr.bf16.gmra.mrb[0].mxu0 %v847
  %v886 = vpop.f32.mrb[0].mxu0
  %v887 = vadd.f32 0.0, %v886
  %v888 = vpop.f32.mrb[0].mxu0
  %v889 = vpop.f32.mrb[0].mxu0
  %v890 = vadd.f32 0.0, %v889
  %v891 = vpop.f32.mrb[0].mxu0
  %892 = vdwg.mxu0
  %v893 = vpack.c.bf16 %v836, %v833
  %v894 = vpack.c.bf16 %v890, %v887
  %v897 = vunpack.c.l.b16 %v893
  %v898 = vunpack.c.h.b16 %v893
  %v899 = vunpack.c.l.b16 %v894
  %v900 = vunpack.c.h.b16 %v894
  %v901 = vpack.c.b16 %v897, %v897
  %v902 = vpack.c.b16 %v898, %v898
  %v903 = vpack.c.b16 %v899, %v899
  %v904 = vpack.c.b16 %v900, %v900
  %905 = vrot.lane.b32.xlu0 %v901, 16
  %v906 = vpop.permute.xlu0 %905
  %907 = vrot.lane.b32.xlu0 %v902, 16
  %v908 = vpop.permute.xlu0 %907
  %909 = vrot.lane.b32.xlu0 %v903, 16
  %v910 = vpop.permute.xlu0 %909
  %911 = vrot.lane.b32.xlu0 %v904, 16
  %v912 = vpop.permute.xlu0 %911
  %vm917 = vcmask 191616
  %918 = vst.msk [vmem:[%s1] sm:$0xf] %vm917, %v906
  %vm919 = vcmask 188544
  %vm920 = vmand %vm919, %vm301
  %v921 = vld [vmem:[%s1 + $0x4] sm:$0x1]
  %v922 = vsel %vm920, %v908, %v921
  %923 = vst [vmem:[%s1 + $0x4] sm:$0x1] %v922
  %924 = vst.msk [vmem:[%s1 + $0x8] sm:$0xf] %vm917, %v910
  %v925 = vld [vmem:[%s1 + $0xc] sm:$0x1]
  %v926 = vsel %vm920, %v912, %v925
  %927 = vst [vmem:[%s1 + $0xc] sm:$0x1] %v926
  %v928 = vld [vmem:[%s0] sm:$0xf]
  %v929 = vld [vmem:[%s0 + $0x8] sm:$0x1]
  %v930 = vld [vmem:[%s0 + $0x10] sm:$0xf]
  %v931 = vld [vmem:[%s0 + $0x18] sm:$0x1]
  %v932 = vld [vmem:[%s0 + $0x4] sm:$0xf]
  %v933 = vld [vmem:[%s0 + $0xc] sm:$0x1]
  %v934 = vld [vmem:[%s0 + $0x14] sm:$0xf]
  %v935 = vld [vmem:[%s0 + $0x1c] sm:$0x1]
  %v938 = vunpack.c.l.b16 %v928
  %v939 = vunpack.c.l.b16 %v929
  %v940 = vpack.c.b16 %v939, %v938
  %941 = vrot.lane.b32.xlu0 %v940, 104
  %v942 = vpop.permute.xlu0 %941
  %943 = vrot.lane.b32.xlu0 %v940, 40
  %v944 = vpop.permute.xlu0 %943
  %v946 = vsel %vm24, %v942, 0
  %v949 = vsel %vm24, %v944, 0
  %951 = vmatprep.subr.bf16.mxu0 0
  %952 = vmatpush1.bf16.xpose.msra.mxu0 %v949
  %953 = vmatprep.subr.bf16.mxu0 0
  %954 = vmatpush1.bf16.xpose.msra.mxu0 0
  %955 = vmatprep.subr.bf16.mxu0 0
  %956 = vmatpush1.bf16.xpose.msra.mxu0 0
  %957 = vmatprep.subr.bf16.mxu0 0
  %958 = vmatpush1.bf16.xpose.msra.mxu0 0
  %959 = vmatprep.subr.bf16.mxu0 0
  %960 = vmatpush1.bf16.xpose.msra.mxu0 0
  %961 = vmatprep.subr.bf16.mxu0 0
  %962 = vmatpush1.bf16.xpose.msra.mxu0 0
  %963 = vmatprep.subr.bf16.mxu0 0
  %964 = vmatpush1.bf16.xpose.msra.mxu0 0
  %965 = vmatprep.subr.bf16.mxu0 0
  %966 = vmatpush1.bf16.xpose.msra.mxu0 0
  %967 = vmatprep.subr.bf16.mxu0 0
  %968 = vmatpush1.bf16.xpose.msra.mxu0 0
  %969 = vmatprep.subr.bf16.mxu0 0
  %970 = vmatpush1.bf16.xpose.msra.mxu0 0
  %971 = vmatprep.subr.bf16.mxu0 0
  %972 = vmatpush1.bf16.xpose.msra.mxu0 0
  %973 = vmatprep.subr.bf16.mxu0 0
  %974 = vmatpush1.bf16.xpose.msra.mxu0 0
  %975 = vmatprep.subr.bf16.mxu0 0
  %976 = vmatpush1.bf16.xpose.msra.mxu0 0
  %977 = vmatprep.subr.bf16.mxu0 0
  %978 = vmatpush1.bf16.xpose.msra.mxu0 0
  %979 = vmatprep.subr.bf16.mxu0 0
  %980 = vmatpush1.bf16.xpose.msra.mxu0 0
  %981 = vmatprep.subr.bf16.mxu0 0
  %982 = vmatpush1.bf16.xpose.msra.mxu0 0
  %983 = vmatprep.mubr.bf16.mxu0 0
  %984 = vmatmul.mubr.bf16.gmra.mrb[0].mxu0 %v946
  %v985 = vpop.f32.mrb[0].mxu0
  %v986 = vadd.f32 0.0, %v985
  %v987 = vpop.f32.mrb[0].mxu0
  %v988 = vpop.f32.mrb[0].mxu0
  %v989 = vadd.f32 0.0, %v988
  %v990 = vpop.f32.mrb[0].mxu0
  %991 = vdwg.mxu0
  %v994 = vunpack.c.l.b16 %v930
  %v995 = vunpack.c.l.b16 %v931
  %v996 = vpack.c.b16 %v995, %v994
  %997 = vrot.lane.b32.xlu0 %v996, 104
  %v998 = vpop.permute.xlu0 %997
  %999 = vrot.lane.b32.xlu0 %v996, 40
  %v1000 = vpop.permute.xlu0 %999
  %v1002 = vsel %vm24, %v998, 0
  %v1005 = vsel %vm24, %v1000, 0
  %1007 = vmatprep.subr.bf16.mxu0 0
  %1008 = vmatpush1.bf16.xpose.msra.mxu0 %v1005
  %1009 = vmatprep.subr.bf16.mxu0 0
  %1010 = vmatpush1.bf16.xpose.msra.mxu0 0
  %1011 = vmatprep.subr.bf16.mxu0 0
  %1012 = vmatpush1.bf16.xpose.msra.mxu0 0
  %1013 = vmatprep.subr.bf16.mxu0 0
  %1014 = vmatpush1.bf16.xpose.msra.mxu0 0
  %1015 = vmatprep.subr.bf16.mxu0 0
  %1016 = vmatpush1.bf16.xpose.msra.mxu0 0
  %1017 = vmatprep.subr.bf16.mxu0 0
  %1018 = vmatpush1.bf16.xpose.msra.mxu0 0
  %1019 = vmatprep.subr.bf16.mxu0 0
  %1020 = vmatpush1.bf16.xpose.msra.mxu0 0
  %1021 = vmatprep.subr.bf16.mxu0 0
  %1022 = vmatpush1.bf16.xpose.msra.mxu0 0
  %1023 = vmatprep.subr.bf16.mxu0 0
  %1024 = vmatpush1.bf16.xpose.msra.mxu0 0
  %1025 = vmatprep.subr.bf16.mxu0 0
  %1026 = vmatpush1.bf16.xpose.msra.mxu0 0
  %1027 = vmatprep.subr.bf16.mxu0 0
  %1028 = vmatpush1.bf16.xpose.msra.mxu0 0
  %1029 = vmatprep.subr.bf16.mxu0 0
  %1030 = vmatpush1.bf16.xpose.msra.mxu0 0
  %1031 = vmatprep.subr.bf16.mxu0 0
  %1032 = vmatpush1.bf16.xpose.msra.mxu0 0
  %1033 = vmatprep.subr.bf16.mxu0 0
  %1034 = vmatpush1.bf16.xpose.msra.mxu0 0
  %1035 = vmatprep.subr.bf16.mxu0 0
  %1036 = vmatpush1.bf16.xpose.msra.mxu0 0
  %1037 = vmatprep.subr.bf16.mxu0 0
  %1038 = vmatpush1.bf16.xpose.msra.mxu0 0
  %1039 = vmatprep.mubr.bf16.mxu0 0
  %1040 = vmatmul.mubr.bf16.gmra.mrb[0].mxu0 %v1002
  %v1041 = vpop.f32.mrb[0].mxu0
  %v1042 = vadd.f32 0.0, %v1041
  %v1043 = vpop.f32.mrb[0].mxu0
  %v1044 = vpop.f32.mrb[0].mxu0
  %v1045 = vadd.f32 0.0, %v1044
  %v1046 = vpop.f32.mrb[0].mxu0
  %1047 = vdwg.mxu0
  %v1048 = vsel %vm126, %v986, -inf
  %1049 = vmax.xlane.f32.xlu0 %v1048
  %v1050 = vpop.xlane.xlu0 %1049
  %v1051 = vsel %vm130, %v989, -inf
  %1052 = vmax.xlane.f32.xlu0 %v1051
  %v1053 = vpop.xlane.xlu0 %1052
  %v1054 = vsel %vm126, %v1042, -inf
  %1055 = vmax.xlane.f32.xlu0 %v1054
  %v1056 = vpop.xlane.xlu0 %1055
  %v1057 = vsel %vm130, %v1045, -inf
  %1058 = vmax.xlane.f32.xlu0 %v1057
  %v1059 = vpop.xlane.xlu0 %1058
  %v1060 = vsub.f32 %v986, %v1050
  %v1061 = vsub.f32 %v989, %v1053
  %v1062 = vsub.f32 %v1042, %v1056
  %v1063 = vsub.f32 %v1045, %v1059
  %v1064 = vmul.f32 %v1060, 1.442695
  %v1065 = vpow.pop %v1064
  %v1066 = vmul.f32 %v1061, 1.442695
  %v1067 = vpow.pop %v1066
  %v1068 = vmul.f32 %v1062, 1.442695
  %v1069 = vpow.pop %v1068
  %v1070 = vmul.f32 %v1063, 1.442695
  %v1071 = vpow.pop %v1070
  %v1072 = vsel %vm126, %v1065, 0.0
  %1073 = vadd.xlane.f32.xlu0 %v1072
  %v1074 = vpop.xlane.xlu0 %1073
  %v1075 = vsel %vm130, %v1067, 0.0
  %1076 = vadd.xlane.f32.xlu0 %v1075
  %v1077 = vpop.xlane.xlu0 %1076
  %v1078 = vsel %vm126, %v1069, 0.0
  %1079 = vadd.xlane.f32.xlu0 %v1078
  %v1080 = vpop.xlane.xlu0 %1079
  %v1081 = vsel %vm130, %v1071, 0.0
  %1082 = vadd.xlane.f32.xlu0 %v1081
  %v1083 = vpop.xlane.xlu0 %1082
  %v1084 = vrcp.pop %v1074
  %v1085 = vrcp.pop %v1077
  %v1086 = vrcp.pop %v1080
  %v1087 = vrcp.pop %v1083
  %v1088 = vmul.f32 %v1065, %v1084
  %v1089 = vmul.f32 %v1067, %v1085
  %v1090 = vmul.f32 %v1069, %v1086
  %v1091 = vmul.f32 %v1071, %v1087
  %v1092 = vpack.c.bf16 %v1089, %v1088
  %v1093 = vpack.c.bf16 %v1091, %v1090
  %v1096 = vunpack.c.l.b16 %v932
  %v1097 = vunpack.c.l.b16 %v933
  %v1098 = vpack.c.b16 %v1097, %v1096
  %1099 = vrot.lane.b32.xlu0 %v1098, 104
  %v1100 = vpop.permute.xlu0 %1099
  %v1102 = vsel %vm126, %v1092, 0
  %v1105 = vand.u32 %v1100, %v185
  %1107 = vmatprep.subr.bf16.mxu0 0
  %1108 = vmatpush1.bf16.msra.mxu0 %v1105
  %1109 = vmatprep.subr.bf16.mxu0 0
  %1110 = vmatpush1.bf16.msra.mxu0 0
  %1111 = vmatprep.subr.bf16.mxu0 0
  %1112 = vmatpush1.bf16.msra.mxu0 0
  %1113 = vmatprep.subr.bf16.mxu0 0
  %1114 = vmatpush1.bf16.msra.mxu0 0
  %1115 = vmatprep.subr.bf16.mxu0 0
  %1116 = vmatpush1.bf16.msra.mxu0 0
  %1117 = vmatprep.subr.bf16.mxu0 0
  %1118 = vmatpush1.bf16.msra.mxu0 0
  %1119 = vmatprep.subr.bf16.mxu0 0
  %1120 = vmatpush1.bf16.msra.mxu0 0
  %1121 = vmatprep.subr.bf16.mxu0 0
  %1122 = vmatpush1.bf16.msra.mxu0 0
  %1123 = vmatprep.subr.bf16.mxu0 0
  %1124 = vmatpush1.bf16.msra.mxu0 0
  %1125 = vmatprep.subr.bf16.mxu0 0
  %1126 = vmatpush1.bf16.msra.mxu0 0
  %1127 = vmatprep.subr.bf16.mxu0 0
  %1128 = vmatpush1.bf16.msra.mxu0 0
  %1129 = vmatprep.subr.bf16.mxu0 0
  %1130 = vmatpush1.bf16.msra.mxu0 0
  %1131 = vmatprep.subr.bf16.mxu0 0
  %1132 = vmatpush1.bf16.msra.mxu0 0
  %1133 = vmatprep.subr.bf16.mxu0 0
  %1134 = vmatpush1.bf16.msra.mxu0 0
  %1135 = vmatprep.subr.bf16.mxu0 0
  %1136 = vmatpush1.bf16.msra.mxu0 0
  %1137 = vmatprep.subr.bf16.mxu0 0
  %1138 = vmatpush1.bf16.msra.mxu0 0
  %1139 = vmatprep.mubr.bf16.mxu0 0
  %1140 = vmatmul.mubr.bf16.gmra.mrb[0].mxu0 %v1102
  %v1141 = vpop.f32.mrb[0].mxu0
  %v1142 = vadd.f32 0.0, %v1141
  %v1143 = vpop.f32.mrb[0].mxu0
  %v1144 = vpop.f32.mrb[0].mxu0
  %v1145 = vadd.f32 0.0, %v1144
  %v1146 = vpop.f32.mrb[0].mxu0
  %1147 = vdwg.mxu0
  %v1150 = vunpack.c.l.b16 %v934
  %v1151 = vunpack.c.l.b16 %v935
  %v1152 = vpack.c.b16 %v1151, %v1150
  %1153 = vrot.lane.b32.xlu0 %v1152, 104
  %v1154 = vpop.permute.xlu0 %1153
  %v1156 = vsel %vm126, %v1093, 0
  %v1159 = vand.u32 %v1154, %v185
  %1161 = vmatprep.subr.bf16.mxu0 0
  %1162 = vmatpush1.bf16.msra.mxu0 %v1159
  %1163 = vmatprep.subr.bf16.mxu0 0
  %1164 = vmatpush1.bf16.msra.mxu0 0
  %1165 = vmatprep.subr.bf16.mxu0 0
  %1166 = vmatpush1.bf16.msra.mxu0 0
  %1167 = vmatprep.subr.bf16.mxu0 0
  %1168 = vmatpush1.bf16.msra.mxu0 0
  %1169 = vmatprep.subr.bf16.mxu0 0
  %1170 = vmatpush1.bf16.msra.mxu0 0
  %1171 = vmatprep.subr.bf16.mxu0 0
  %1172 = vmatpush1.bf16.msra.mxu0 0
  %1173 = vmatprep.subr.bf16.mxu0 0
  %1174 = vmatpush1.bf16.msra.mxu0 0
  %1175 = vmatprep.subr.bf16.mxu0 0
  %1176 = vmatpush1.bf16.msra.mxu0 0
  %1177 = vmatprep.subr.bf16.mxu0 0
  %1178 = vmatpush1.bf16.msra.mxu0 0
  %1179 = vmatprep.subr.bf16.mxu0 0
  %1180 = vmatpush1.bf16.msra.mxu0 0
  %1181 = vmatprep.subr.bf16.mxu0 0
  %1182 = vmatpush1.bf16.msra.mxu0 0
  %1183 = vmatprep.subr.bf16.mxu0 0
  %1184 = vmatpush1.bf16.msra.mxu0 0
  %1185 = vmatprep.subr.bf16.mxu0 0
  %1186 = vmatpush1.bf16.msra.mxu0 0
  %1187 = vmatprep.subr.bf16.mxu0 0
  %1188 = vmatpush1.bf16.msra.mxu0 0
  %1189 = vmatprep.subr.bf16.mxu0 0
  %1190 = vmatpush1.bf16.msra.mxu0 0
  %1191 = vmatprep.subr.bf16.mxu0 0
  %1192 = vmatpush1.bf16.msra.mxu0 0
  %1193 = vmatprep.mubr.bf16.mxu0 0
  %1194 = vmatmul.mubr.bf16.gmra.mrb[0].mxu0 %v1156
  %v1195 = vpop.f32.mrb[0].mxu0
  %v1196 = vadd.f32 0.0, %v1195
  %v1197 = vpop.f32.mrb[0].mxu0
  %v1198 = vpop.f32.mrb[0].mxu0
  %v1199 = vadd.f32 0.0, %v1198
  %v1200 = vpop.f32.mrb[0].mxu0
  %1201 = vdwg.mxu0
  %v1202 = vpack.c.bf16 %v1145, %v1142
  %v1203 = vpack.c.bf16 %v1199, %v1196
  %v1206 = vunpack.c.l.b16 %v1202
  %v1207 = vunpack.c.h.b16 %v1202
  %v1208 = vunpack.c.l.b16 %v1203
  %v1209 = vunpack.c.h.b16 %v1203
  %v1210 = vpack.c.b16 %v1206, %v1206
  %v1211 = vpack.c.b16 %v1207, %v1207
  %v1212 = vpack.c.b16 %v1208, %v1208
  %v1213 = vpack.c.b16 %v1209, %v1209
  %1214 = vrot.lane.b32.xlu0 %v1210, 24
  %v1215 = vpop.permute.xlu0 %1214
  %1216 = vrot.lane.b32.xlu0 %v1211, 24
  %v1217 = vpop.permute.xlu0 %1216
  %1218 = vrot.lane.b32.xlu0 %v1212, 24
  %v1219 = vpop.permute.xlu0 %1218
  %1220 = vrot.lane.b32.xlu0 %v1213, 24
  %v1221 = vpop.permute.xlu0 %1220
  %vm1226 = vcmask 257216
  %1227 = vst.msk [vmem:[%s1] sm:$0xf] %vm1226, %v1215
  %vm1228 = vcmask 254144
  %vm1229 = vmand %vm1228, %vm301
  %v1230 = vld [vmem:[%s1 + $0x4] sm:$0x1]
  %v1231 = vsel %vm1229, %v1217, %v1230
  %1232 = vst [vmem:[%s1 + $0x4] sm:$0x1] %v1231
  %1233 = vst.msk [vmem:[%s1 + $0x8] sm:$0xf] %vm1226, %v1219
  %v1234 = vld [vmem:[%s1 + $0xc] sm:$0x1]
  %v1235 = vsel %vm1229, %v1221, %v1234
  %1236 = vst [vmem:[%s1 + $0xc] sm:$0x1] %v1235
  %v1237 = vld [vmem:[%s0] sm:$0xf]
  %v1238 = vld [vmem:[%s0 + $0x8] sm:$0x1]
  %v1239 = vld [vmem:[%s0 + $0x10] sm:$0xf]
  %v1240 = vld [vmem:[%s0 + $0x18] sm:$0x1]
  %v1241 = vld [vmem:[%s0 + $0x4] sm:$0xf]
  %v1242 = vld [vmem:[%s0 + $0xc] sm:$0x1]
  %v1243 = vld [vmem:[%s0 + $0x14] sm:$0xf]
  %v1244 = vld [vmem:[%s0 + $0x1c] sm:$0x1]
  %v1247 = vunpack.c.l.b16 %v1237
  %v1248 = vunpack.c.l.b16 %v1238
  %v1249 = vpack.c.b16 %v1248, %v1247
  %1250 = vrot.lane.b32.xlu0 %v1249, 96
  %v1251 = vpop.permute.xlu0 %1250
  %1252 = vrot.lane.b32.xlu0 %v1249, 32
  %v1253 = vpop.permute.xlu0 %1252
  %v1255 = vsel %vm24, %v1251, 0
  %v1258 = vsel %vm24, %v1253, 0
  %1260 = vmatprep.subr.bf16.mxu0 0
  %1261 = vmatpush1.bf16.xpose.msra.mxu0 %v1258
  %1262 = vmatprep.subr.bf16.mxu0 0
  %1263 = vmatpush1.bf16.xpose.msra.mxu0 0
  %1264 = vmatprep.subr.bf16.mxu0 0
  %1265 = vmatpush1.bf16.xpose.msra.mxu0 0
  %1266 = vmatprep.subr.bf16.mxu0 0
  %1267 = vmatpush1.bf16.xpose.msra.mxu0 0
  %1268 = vmatprep.subr.bf16.mxu0 0
  %1269 = vmatpush1.bf16.xpose.msra.mxu0 0
  %1270 = vmatprep.subr.bf16.mxu0 0
  %1271 = vmatpush1.bf16.xpose.msra.mxu0 0
  %1272 = vmatprep.subr.bf16.mxu0 0
  %1273 = vmatpush1.bf16.xpose.msra.mxu0 0
  %1274 = vmatprep.subr.bf16.mxu0 0
  %1275 = vmatpush1.bf16.xpose.msra.mxu0 0
  %1276 = vmatprep.subr.bf16.mxu0 0
  %1277 = vmatpush1.bf16.xpose.msra.mxu0 0
  %1278 = vmatprep.subr.bf16.mxu0 0
  %1279 = vmatpush1.bf16.xpose.msra.mxu0 0
  %1280 = vmatprep.subr.bf16.mxu0 0
  %1281 = vmatpush1.bf16.xpose.msra.mxu0 0
  %1282 = vmatprep.subr.bf16.mxu0 0
  %1283 = vmatpush1.bf16.xpose.msra.mxu0 0
  %1284 = vmatprep.subr.bf16.mxu0 0
  %1285 = vmatpush1.bf16.xpose.msra.mxu0 0
  %1286 = vmatprep.subr.bf16.mxu0 0
  %1287 = vmatpush1.bf16.xpose.msra.mxu0 0
  %1288 = vmatprep.subr.bf16.mxu0 0
  %1289 = vmatpush1.bf16.xpose.msra.mxu0 0
  %1290 = vmatprep.subr.bf16.mxu0 0
  %1291 = vmatpush1.bf16.xpose.msra.mxu0 0
  %1292 = vmatprep.mubr.bf16.mxu0 0
  %1293 = vmatmul.mubr.bf16.gmra.mrb[0].mxu0 %v1255
  %v1294 = vpop.f32.mrb[0].mxu0
  %v1295 = vadd.f32 0.0, %v1294
  %v1296 = vpop.f32.mrb[0].mxu0
  %v1297 = vpop.f32.mrb[0].mxu0
  %v1298 = vadd.f32 0.0, %v1297
  %v1299 = vpop.f32.mrb[0].mxu0
  %1300 = vdwg.mxu0
  %v1303 = vunpack.c.l.b16 %v1239
  %v1304 = vunpack.c.l.b16 %v1240
  %v1305 = vpack.c.b16 %v1304, %v1303
  %1306 = vrot.lane.b32.xlu0 %v1305, 96
  %v1307 = vpop.permute.xlu0 %1306
  %1308 = vrot.lane.b32.xlu0 %v1305, 32
  %v1309 = vpop.permute.xlu0 %1308
  %v1311 = vsel %vm24, %v1307, 0
  %v1314 = vsel %vm24, %v1309, 0
  %1316 = vmatprep.subr.bf16.mxu0 0
  %1317 = vmatpush1.bf16.xpose.msra.mxu0 %v1314
  %1318 = vmatprep.subr.bf16.mxu0 0
  %1319 = vmatpush1.bf16.xpose.msra.mxu0 0
  %1320 = vmatprep.subr.bf16.mxu0 0
  %1321 = vmatpush1.bf16.xpose.msra.mxu0 0
  %1322 = vmatprep.subr.bf16.mxu0 0
  %1323 = vmatpush1.bf16.xpose.msra.mxu0 0
  %1324 = vmatprep.subr.bf16.mxu0 0
  %1325 = vmatpush1.bf16.xpose.msra.mxu0 0
  %1326 = vmatprep.subr.bf16.mxu0 0
  %1327 = vmatpush1.bf16.xpose.msra.mxu0 0
  %1328 = vmatprep.subr.bf16.mxu0 0
  %1329 = vmatpush1.bf16.xpose.msra.mxu0 0
  %1330 = vmatprep.subr.bf16.mxu0 0
  %1331 = vmatpush1.bf16.xpose.msra.mxu0 0
  %1332 = vmatprep.subr.bf16.mxu0 0
  %1333 = vmatpush1.bf16.xpose.msra.mxu0 0
  %1334 = vmatprep.subr.bf16.mxu0 0
  %1335 = vmatpush1.bf16.xpose.msra.mxu0 0
  %1336 = vmatprep.subr.bf16.mxu0 0
  %1337 = vmatpush1.bf16.xpose.msra.mxu0 0
  %1338 = vmatprep.subr.bf16.mxu0 0
  %1339 = vmatpush1.bf16.xpose.msra.mxu0 0
  %1340 = vmatprep.subr.bf16.mxu0 0
  %1341 = vmatpush1.bf16.xpose.msra.mxu0 0
  %1342 = vmatprep.subr.bf16.mxu0 0
  %1343 = vmatpush1.bf16.xpose.msra.mxu0 0
  %1344 = vmatprep.subr.bf16.mxu0 0
  %1345 = vmatpush1.bf16.xpose.msra.mxu0 0
  %1346 = vmatprep.subr.bf16.mxu0 0
  %1347 = vmatpush1.bf16.xpose.msra.mxu0 0
  %1348 = vmatprep.mubr.bf16.mxu0 0
  %1349 = vmatmul.mubr.bf16.gmra.mrb[0].mxu0 %v1311
  %v1350 = vpop.f32.mrb[0].mxu0
  %v1351 = vadd.f32 0.0, %v1350
  %v1352 = vpop.f32.mrb[0].mxu0
  %v1353 = vpop.f32.mrb[0].mxu0
  %v1354 = vadd.f32 0.0, %v1353
  %v1355 = vpop.f32.mrb[0].mxu0
  %1356 = vdwg.mxu0
  %v1357 = vsel %vm126, %v1295, -inf
  %1358 = vmax.xlane.f32.xlu0 %v1357
  %v1359 = vpop.xlane.xlu0 %1358
  %v1360 = vsel %vm130, %v1298, -inf
  %1361 = vmax.xlane.f32.xlu0 %v1360
  %v1362 = vpop.xlane.xlu0 %1361
  %v1363 = vsel %vm126, %v1351, -inf
  %1364 = vmax.xlane.f32.xlu0 %v1363
  %v1365 = vpop.xlane.xlu0 %1364
  %v1366 = vsel %vm130, %v1354, -inf
  %1367 = vmax.xlane.f32.xlu0 %v1366
  %v1368 = vpop.xlane.xlu0 %1367
  %v1369 = vsub.f32 %v1295, %v1359
  %v1370 = vsub.f32 %v1298, %v1362
  %v1371 = vsub.f32 %v1351, %v1365
  %v1372 = vsub.f32 %v1354, %v1368
  %v1373 = vmul.f32 %v1369, 1.442695
  %v1374 = vpow.pop %v1373
  %v1375 = vmul.f32 %v1370, 1.442695
  %v1376 = vpow.pop %v1375
  %v1377 = vmul.f32 %v1371, 1.442695
  %v1378 = vpow.pop %v1377
  %v1379 = vmul.f32 %v1372, 1.442695
  %v1380 = vpow.pop %v1379
  %v1381 = vsel %vm126, %v1374, 0.0
  %1382 = vadd.xlane.f32.xlu0 %v1381
  %v1383 = vpop.xlane.xlu0 %1382
  %v1384 = vsel %vm130, %v1376, 0.0
  %1385 = vadd.xlane.f32.xlu0 %v1384
  %v1386 = vpop.xlane.xlu0 %1385
  %v1387 = vsel %vm126, %v1378, 0.0
  %1388 = vadd.xlane.f32.xlu0 %v1387
  %v1389 = vpop.xlane.xlu0 %1388
  %v1390 = vsel %vm130, %v1380, 0.0
  %1391 = vadd.xlane.f32.xlu0 %v1390
  %v1392 = vpop.xlane.xlu0 %1391
  %v1393 = vrcp.pop %v1383
  %v1394 = vrcp.pop %v1386
  %v1395 = vrcp.pop %v1389
  %v1396 = vrcp.pop %v1392
  %v1397 = vmul.f32 %v1374, %v1393
  %v1398 = vmul.f32 %v1376, %v1394
  %v1399 = vmul.f32 %v1378, %v1395
  %v1400 = vmul.f32 %v1380, %v1396
  %v1401 = vpack.c.bf16 %v1398, %v1397
  %v1402 = vpack.c.bf16 %v1400, %v1399
  %v1405 = vunpack.c.l.b16 %v1241
  %v1406 = vunpack.c.l.b16 %v1242
  %v1407 = vpack.c.b16 %v1406, %v1405
  %1408 = vrot.lane.b32.xlu0 %v1407, 96
  %v1409 = vpop.permute.xlu0 %1408
  %v1411 = vsel %vm126, %v1401, 0
  %v1414 = vand.u32 %v1409, %v185
  %1416 = vmatprep.subr.bf16.mxu0 0
  %1417 = vmatpush1.bf16.msra.mxu0 %v1414
  %1418 = vmatprep.subr.bf16.mxu0 0
  %1419 = vmatpush1.bf16.msra.mxu0 0
  %1420 = vmatprep.subr.bf16.mxu0 0
  %1421 = vmatpush1.bf16.msra.mxu0 0
  %1422 = vmatprep.subr.bf16.mxu0 0
  %1423 = vmatpush1.bf16.msra.mxu0 0
  %1424 = vmatprep.subr.bf16.mxu0 0
  %1425 = vmatpush1.bf16.msra.mxu0 0
  %1426 = vmatprep.subr.bf16.mxu0 0
  %1427 = vmatpush1.bf16.msra.mxu0 0
  %1428 = vmatprep.subr.bf16.mxu0 0
  %1429 = vmatpush1.bf16.msra.mxu0 0
  %1430 = vmatprep.subr.bf16.mxu0 0
  %1431 = vmatpush1.bf16.msra.mxu0 0
  %1432 = vmatprep.subr.bf16.mxu0 0
  %1433 = vmatpush1.bf16.msra.mxu0 0
  %1434 = vmatprep.subr.bf16.mxu0 0
  %1435 = vmatpush1.bf16.msra.mxu0 0
  %1436 = vmatprep.subr.bf16.mxu0 0
  %1437 = vmatpush1.bf16.msra.mxu0 0
  %1438 = vmatprep.subr.bf16.mxu0 0
  %1439 = vmatpush1.bf16.msra.mxu0 0
  %1440 = vmatprep.subr.bf16.mxu0 0
  %1441 = vmatpush1.bf16.msra.mxu0 0
  %1442 = vmatprep.subr.bf16.mxu0 0
  %1443 = vmatpush1.bf16.msra.mxu0 0
  %1444 = vmatprep.subr.bf16.mxu0 0
  %1445 = vmatpush1.bf16.msra.mxu0 0
  %1446 = vmatprep.subr.bf16.mxu0 0
  %1447 = vmatpush1.bf16.msra.mxu0 0
  %1448 = vmatprep.mubr.bf16.mxu0 0
  %1449 = vmatmul.mubr.bf16.gmra.mrb[0].mxu0 %v1411
  %v1450 = vpop.f32.mrb[0].mxu0
  %v1451 = vadd.f32 0.0, %v1450
  %v1452 = vpop.f32.mrb[0].mxu0
  %v1453 = vpop.f32.mrb[0].mxu0
  %v1454 = vadd.f32 0.0, %v1453
  %v1455 = vpop.f32.mrb[0].mxu0
  %1456 = vdwg.mxu0
  %v1459 = vunpack.c.l.b16 %v1243
  %v1460 = vunpack.c.l.b16 %v1244
  %v1461 = vpack.c.b16 %v1460, %v1459
  %1462 = vrot.lane.b32.xlu0 %v1461, 96
  %v1463 = vpop.permute.xlu0 %1462
  %v1465 = vsel %vm126, %v1402, 0
  %v1468 = vand.u32 %v1463, %v185
  %1470 = vmatprep.subr.bf16.mxu0 0
  %1471 = vmatpush1.bf16.msra.mxu0 %v1468
  %1472 = vmatprep.subr.bf16.mxu0 0
  %1473 = vmatpush1.bf16.msra.mxu0 0
  %1474 = vmatprep.subr.bf16.mxu0 0
  %1475 = vmatpush1.bf16.msra.mxu0 0
  %1476 = vmatprep.subr.bf16.mxu0 0
  %1477 = vmatpush1.bf16.msra.mxu0 0
  %1478 = vmatprep.subr.bf16.mxu0 0
  %1479 = vmatpush1.bf16.msra.mxu0 0
  %1480 = vmatprep.subr.bf16.mxu0 0
  %1481 = vmatpush1.bf16.msra.mxu0 0
  %1482 = vmatprep.subr.bf16.mxu0 0
  %1483 = vmatpush1.bf16.msra.mxu0 0
  %1484 = vmatprep.subr.bf16.mxu0 0
  %1485 = vmatpush1.bf16.msra.mxu0 0
  %1486 = vmatprep.subr.bf16.mxu0 0
  %1487 = vmatpush1.bf16.msra.mxu0 0
  %1488 = vmatprep.subr.bf16.mxu0 0
  %1489 = vmatpush1.bf16.msra.mxu0 0
  %1490 = vmatprep.subr.bf16.mxu0 0
  %1491 = vmatpush1.bf16.msra.mxu0 0
  %1492 = vmatprep.subr.bf16.mxu0 0
  %1493 = vmatpush1.bf16.msra.mxu0 0
  %1494 = vmatprep.subr.bf16.mxu0 0
  %1495 = vmatpush1.bf16.msra.mxu0 0
  %1496 = vmatprep.subr.bf16.mxu0 0
  %1497 = vmatpush1.bf16.msra.mxu0 0
  %1498 = vmatprep.subr.bf16.mxu0 0
  %1499 = vmatpush1.bf16.msra.mxu0 0
  %1500 = vmatprep.subr.bf16.mxu0 0
  %1501 = vmatpush1.bf16.msra.mxu0 0
  %1502 = vmatprep.mubr.bf16.mxu0 0
  %1503 = vmatmul.mubr.bf16.gmra.mrb[0].mxu0 %v1465
  %v1504 = vpop.f32.mrb[0].mxu0
  %v1505 = vadd.f32 0.0, %v1504
  %v1506 = vpop.f32.mrb[0].mxu0
  %v1507 = vpop.f32.mrb[0].mxu0
  %v1508 = vadd.f32 0.0, %v1507
  %v1509 = vpop.f32.mrb[0].mxu0
  %1510 = vdwg.mxu0
  %v1511 = vpack.c.bf16 %v1454, %v1451
  %v1512 = vpack.c.bf16 %v1508, %v1505
  %v1515 = vunpack.c.l.b16 %v1511
  %v1516 = vunpack.c.h.b16 %v1511
  %v1517 = vunpack.c.l.b16 %v1512
  %v1518 = vunpack.c.h.b16 %v1512
  %v1519 = vpack.c.b16 %v1515, %v1515
  %v1520 = vpack.c.b16 %v1516, %v1516
  %v1521 = vpack.c.b16 %v1517, %v1517
  %v1522 = vpack.c.b16 %v1518, %v1518
  %1523 = vrot.lane.b32.xlu0 %v1519, 32
  %v1524 = vpop.permute.xlu0 %1523
  %1525 = vrot.lane.b32.xlu0 %v1520, 32
  %v1526 = vpop.permute.xlu0 %1525
  %1527 = vrot.lane.b32.xlu0 %v1521, 32
  %v1528 = vpop.permute.xlu0 %1527
  %1529 = vrot.lane.b32.xlu0 %v1522, 32
  %v1530 = vpop.permute.xlu0 %1529
  %vm1535 = vcmask 322816
  %1536 = vst.msk [vmem:[%s1] sm:$0xf] %vm1535, %v1524
  %vm1537 = vcmask 319744
  %vm1538 = vmand %vm1537, %vm301
  %v1539 = vld [vmem:[%s1 + $0x4] sm:$0x1]
  %v1540 = vsel %vm1538, %v1526, %v1539
  %1541 = vst [vmem:[%s1 + $0x4] sm:$0x1] %v1540
  %1542 = vst.msk [vmem:[%s1 + $0x8] sm:$0xf] %vm1535, %v1528
  %v1543 = vld [vmem:[%s1 + $0xc] sm:$0x1]
  %v1544 = vsel %vm1538, %v1530, %v1543
  %1545 = vst [vmem:[%s1 + $0xc] sm:$0x1] %v1544
  %v1546 = vld [vmem:[%s0] sm:$0xf]
  %v1547 = vld [vmem:[%s0 + $0x8] sm:$0x1]
  %v1548 = vld [vmem:[%s0 + $0x10] sm:$0xf]
  %v1549 = vld [vmem:[%s0 + $0x18] sm:$0x1]
  %v1550 = vld [vmem:[%s0 + $0x4] sm:$0xf]
  %v1551 = vld [vmem:[%s0 + $0xc] sm:$0x1]
  %v1552 = vld [vmem:[%s0 + $0x14] sm:$0xf]
  %v1553 = vld [vmem:[%s0 + $0x1c] sm:$0x1]
  %v1556 = vunpack.c.l.b16 %v1546
  %v1557 = vunpack.c.l.b16 %v1547
  %v1558 = vpack.c.b16 %v1557, %v1556
  %1559 = vrot.lane.b32.xlu0 %v1558, 88
  %v1560 = vpop.permute.xlu0 %1559
  %1561 = vrot.lane.b32.xlu0 %v1558, 24
  %v1562 = vpop.permute.xlu0 %1561
  %v1564 = vsel %vm24, %v1560, 0
  %v1567 = vsel %vm24, %v1562, 0
  %1569 = vmatprep.subr.bf16.mxu0 0
  %1570 = vmatpush1.bf16.xpose.msra.mxu0 %v1567
  %1571 = vmatprep.subr.bf16.mxu0 0
  %1572 = vmatpush1.bf16.xpose.msra.mxu0 0
  %1573 = vmatprep.subr.bf16.mxu0 0
  %1574 = vmatpush1.bf16.xpose.msra.mxu0 0
  %1575 = vmatprep.subr.bf16.mxu0 0
  %1576 = vmatpush1.bf16.xpose.msra.mxu0 0
  %1577 = vmatprep.subr.bf16.mxu0 0
  %1578 = vmatpush1.bf16.xpose.msra.mxu0 0
  %1579 = vmatprep.subr.bf16.mxu0 0
  %1580 = vmatpush1.bf16.xpose.msra.mxu0 0
  %1581 = vmatprep.subr.bf16.mxu0 0
  %1582 = vmatpush1.bf16.xpose.msra.mxu0 0
  %1583 = vmatprep.subr.bf16.mxu0 0
  %1584 = vmatpush1.bf16.xpose.msra.mxu0 0
  %1585 = vmatprep.subr.bf16.mxu0 0
  %1586 = vmatpush1.bf16.xpose.msra.mxu0 0
  %1587 = vmatprep.subr.bf16.mxu0 0
  %1588 = vmatpush1.bf16.xpose.msra.mxu0 0
  %1589 = vmatprep.subr.bf16.mxu0 0
  %1590 = vmatpush1.bf16.xpose.msra.mxu0 0
  %1591 = vmatprep.subr.bf16.mxu0 0
  %1592 = vmatpush1.bf16.xpose.msra.mxu0 0
  %1593 = vmatprep.subr.bf16.mxu0 0
  %1594 = vmatpush1.bf16.xpose.msra.mxu0 0
  %1595 = vmatprep.subr.bf16.mxu0 0
  %1596 = vmatpush1.bf16.xpose.msra.mxu0 0
  %1597 = vmatprep.subr.bf16.mxu0 0
  %1598 = vmatpush1.bf16.xpose.msra.mxu0 0
  %1599 = vmatprep.subr.bf16.mxu0 0
  %1600 = vmatpush1.bf16.xpose.msra.mxu0 0
  %1601 = vmatprep.mubr.bf16.mxu0 0
  %1602 = vmatmul.mubr.bf16.gmra.mrb[0].mxu0 %v1564
  %v1603 = vpop.f32.mrb[0].mxu0
  %v1604 = vadd.f32 0.0, %v1603
  %v1605 = vpop.f32.mrb[0].mxu0
  %v1606 = vpop.f32.mrb[0].mxu0
  %v1607 = vadd.f32 0.0, %v1606
  %v1608 = vpop.f32.mrb[0].mxu0
  %1609 = vdwg.mxu0
  %v1612 = vunpack.c.l.b16 %v1548
  %v1613 = vunpack.c.l.b16 %v1549
  %v1614 = vpack.c.b16 %v1613, %v1612
  %1615 = vrot.lane.b32.xlu0 %v1614, 88
  %v1616 = vpop.permute.xlu0 %1615
  %1617 = vrot.lane.b32.xlu0 %v1614, 24
  %v1618 = vpop.permute.xlu0 %1617
  %v1620 = vsel %vm24, %v1616, 0
  %v1623 = vsel %vm24, %v1618, 0
  %1625 = vmatprep.subr.bf16.mxu0 0
  %1626 = vmatpush1.bf16.xpose.msra.mxu0 %v1623
  %1627 = vmatprep.subr.bf16.mxu0 0
  %1628 = vmatpush1.bf16.xpose.msra.mxu0 0
  %1629 = vmatprep.subr.bf16.mxu0 0
  %1630 = vmatpush1.bf16.xpose.msra.mxu0 0
  %1631 = vmatprep.subr.bf16.mxu0 0
  %1632 = vmatpush1.bf16.xpose.msra.mxu0 0
  %1633 = vmatprep.subr.bf16.mxu0 0
  %1634 = vmatpush1.bf16.xpose.msra.mxu0 0
  %1635 = vmatprep.subr.bf16.mxu0 0
  %1636 = vmatpush1.bf16.xpose.msra.mxu0 0
  %1637 = vmatprep.subr.bf16.mxu0 0
  %1638 = vmatpush1.bf16.xpose.msra.mxu0 0
  %1639 = vmatprep.subr.bf16.mxu0 0
  %1640 = vmatpush1.bf16.xpose.msra.mxu0 0
  %1641 = vmatprep.subr.bf16.mxu0 0
  %1642 = vmatpush1.bf16.xpose.msra.mxu0 0
  %1643 = vmatprep.subr.bf16.mxu0 0
  %1644 = vmatpush1.bf16.xpose.msra.mxu0 0
  %1645 = vmatprep.subr.bf16.mxu0 0
  %1646 = vmatpush1.bf16.xpose.msra.mxu0 0
  %1647 = vmatprep.subr.bf16.mxu0 0
  %1648 = vmatpush1.bf16.xpose.msra.mxu0 0
  %1649 = vmatprep.subr.bf16.mxu0 0
  %1650 = vmatpush1.bf16.xpose.msra.mxu0 0
  %1651 = vmatprep.subr.bf16.mxu0 0
  %1652 = vmatpush1.bf16.xpose.msra.mxu0 0
  %1653 = vmatprep.subr.bf16.mxu0 0
  %1654 = vmatpush1.bf16.xpose.msra.mxu0 0
  %1655 = vmatprep.subr.bf16.mxu0 0
  %1656 = vmatpush1.bf16.xpose.msra.mxu0 0
  %1657 = vmatprep.mubr.bf16.mxu0 0
  %1658 = vmatmul.mubr.bf16.gmra.mrb[0].mxu0 %v1620
  %v1659 = vpop.f32.mrb[0].mxu0
  %v1660 = vadd.f32 0.0, %v1659
  %v1661 = vpop.f32.mrb[0].mxu0
  %v1662 = vpop.f32.mrb[0].mxu0
  %v1663 = vadd.f32 0.0, %v1662
  %v1664 = vpop.f32.mrb[0].mxu0
  %1665 = vdwg.mxu0
  %v1666 = vsel %vm126, %v1604, -inf
  %1667 = vmax.xlane.f32.xlu0 %v1666
  %v1668 = vpop.xlane.xlu0 %1667
  %v1669 = vsel %vm130, %v1607, -inf
  %1670 = vmax.xlane.f32.xlu0 %v1669
  %v1671 = vpop.xlane.xlu0 %1670
  %v1672 = vsel %vm126, %v1660, -inf
  %1673 = vmax.xlane.f32.xlu0 %v1672
  %v1674 = vpop.xlane.xlu0 %1673
  %v1675 = vsel %vm130, %v1663, -inf
  %1676 = vmax.xlane.f32.xlu0 %v1675
  %v1677 = vpop.xlane.xlu0 %1676
  %v1678 = vsub.f32 %v1604, %v1668
  %v1679 = vsub.f32 %v1607, %v1671
  %v1680 = vsub.f32 %v1660, %v1674
  %v1681 = vsub.f32 %v1663, %v1677
  %v1682 = vmul.f32 %v1678, 1.442695
  %v1683 = vpow.pop %v1682
  %v1684 = vmul.f32 %v1679, 1.442695
  %v1685 = vpow.pop %v1684
  %v1686 = vmul.f32 %v1680, 1.442695
  %v1687 = vpow.pop %v1686
  %v1688 = vmul.f32 %v1681, 1.442695
  %v1689 = vpow.pop %v1688
  %v1690 = vsel %vm126, %v1683, 0.0
  %1691 = vadd.xlane.f32.xlu0 %v1690
  %v1692 = vpop.xlane.xlu0 %1691
  %v1693 = vsel %vm130, %v1685, 0.0
  %1694 = vadd.xlane.f32.xlu0 %v1693
  %v1695 = vpop.xlane.xlu0 %1694
  %v1696 = vsel %vm126, %v1687, 0.0
  %1697 = vadd.xlane.f32.xlu0 %v1696
  %v1698 = vpop.xlane.xlu0 %1697
  %v1699 = vsel %vm130, %v1689, 0.0
  %1700 = vadd.xlane.f32.xlu0 %v1699
  %v1701 = vpop.xlane.xlu0 %1700
  %v1702 = vrcp.pop %v1692
  %v1703 = vrcp.pop %v1695
  %v1704 = vrcp.pop %v1698
  %v1705 = vrcp.pop %v1701
  %v1706 = vmul.f32 %v1683, %v1702
  %v1707 = vmul.f32 %v1685, %v1703
  %v1708 = vmul.f32 %v1687, %v1704
  %v1709 = vmul.f32 %v1689, %v1705
  %v1710 = vpack.c.bf16 %v1707, %v1706
  %v1711 = vpack.c.bf16 %v1709, %v1708
  %v1714 = vunpack.c.l.b16 %v1550
  %v1715 = vunpack.c.l.b16 %v1551
  %v1716 = vpack.c.b16 %v1715, %v1714
  %1717 = vrot.lane.b32.xlu0 %v1716, 88
  %v1718 = vpop.permute.xlu0 %1717
  %v1720 = vsel %vm126, %v1710, 0
  %v1723 = vand.u32 %v1718, %v185
  %1725 = vmatprep.subr.bf16.mxu0 0
  %1726 = vmatpush1.bf16.msra.mxu0 %v1723
  %1727 = vmatprep.subr.bf16.mxu0 0
  %1728 = vmatpush1.bf16.msra.mxu0 0
  %1729 = vmatprep.subr.bf16.mxu0 0
  %1730 = vmatpush1.bf16.msra.mxu0 0
  %1731 = vmatprep.subr.bf16.mxu0 0
  %1732 = vmatpush1.bf16.msra.mxu0 0
  %1733 = vmatprep.subr.bf16.mxu0 0
  %1734 = vmatpush1.bf16.msra.mxu0 0
  %1735 = vmatprep.subr.bf16.mxu0 0
  %1736 = vmatpush1.bf16.msra.mxu0 0
  %1737 = vmatprep.subr.bf16.mxu0 0
  %1738 = vmatpush1.bf16.msra.mxu0 0
  %1739 = vmatprep.subr.bf16.mxu0 0
  %1740 = vmatpush1.bf16.msra.mxu0 0
  %1741 = vmatprep.subr.bf16.mxu0 0
  %1742 = vmatpush1.bf16.msra.mxu0 0
  %1743 = vmatprep.subr.bf16.mxu0 0
  %1744 = vmatpush1.bf16.msra.mxu0 0
  %1745 = vmatprep.subr.bf16.mxu0 0
  %1746 = vmatpush1.bf16.msra.mxu0 0
  %1747 = vmatprep.subr.bf16.mxu0 0
  %1748 = vmatpush1.bf16.msra.mxu0 0
  %1749 = vmatprep.subr.bf16.mxu0 0
  %1750 = vmatpush1.bf16.msra.mxu0 0
  %1751 = vmatprep.subr.bf16.mxu0 0
  %1752 = vmatpush1.bf16.msra.mxu0 0
  %1753 = vmatprep.subr.bf16.mxu0 0
  %1754 = vmatpush1.bf16.msra.mxu0 0
  %1755 = vmatprep.subr.bf16.mxu0 0
  %1756 = vmatpush1.bf16.msra.mxu0 0
  %1757 = vmatprep.mubr.bf16.mxu0 0
  %1758 = vmatmul.mubr.bf16.gmra.mrb[0].mxu0 %v1720
  %v1759 = vpop.f32.mrb[0].mxu0
  %v1760 = vadd.f32 0.0, %v1759
  %v1761 = vpop.f32.mrb[0].mxu0
  %v1762 = vpop.f32.mrb[0].mxu0
  %v1763 = vadd.f32 0.0, %v1762
  %v1764 = vpop.f32.mrb[0].mxu0
  %1765 = vdwg.mxu0
  %v1768 = vunpack.c.l.b16 %v1552
  %v1769 = vunpack.c.l.b16 %v1553
  %v1770 = vpack.c.b16 %v1769, %v1768
  %1771 = vrot.lane.b32.xlu0 %v1770, 88
  %v1772 = vpop.permute.xlu0 %1771
  %v1774 = vsel %vm126, %v1711, 0
  %v1777 = vand.u32 %v1772, %v185
  %1779 = vmatprep.subr.bf16.mxu0 0
  %1780 = vmatpush1.bf16.msra.mxu0 %v1777
  %1781 = vmatprep.subr.bf16.mxu0 0
  %1782 = vmatpush1.bf16.msra.mxu0 0
  %1783 = vmatprep.subr.bf16.mxu0 0
  %1784 = vmatpush1.bf16.msra.mxu0 0
  %1785 = vmatprep.subr.bf16.mxu0 0
  %1786 = vmatpush1.bf16.msra.mxu0 0
  %1787 = vmatprep.subr.bf16.mxu0 0
  %1788 = vmatpush1.bf16.msra.mxu0 0
  %1789 = vmatprep.subr.bf16.mxu0 0
  %1790 = vmatpush1.bf16.msra.mxu0 0
  %1791 = vmatprep.subr.bf16.mxu0 0
  %1792 = vmatpush1.bf16.msra.mxu0 0
  %1793 = vmatprep.subr.bf16.mxu0 0
  %1794 = vmatpush1.bf16.msra.mxu0 0
  %1795 = vmatprep.subr.bf16.mxu0 0
  %1796 = vmatpush1.bf16.msra.mxu0 0
  %1797 = vmatprep.subr.bf16.mxu0 0
  %1798 = vmatpush1.bf16.msra.mxu0 0
  %1799 = vmatprep.subr.bf16.mxu0 0
  %1800 = vmatpush1.bf16.msra.mxu0 0
  %1801 = vmatprep.subr.bf16.mxu0 0
  %1802 = vmatpush1.bf16.msra.mxu0 0
  %1803 = vmatprep.subr.bf16.mxu0 0
  %1804 = vmatpush1.bf16.msra.mxu0 0
  %1805 = vmatprep.subr.bf16.mxu0 0
  %1806 = vmatpush1.bf16.msra.mxu0 0
  %1807 = vmatprep.subr.bf16.mxu0 0
  %1808 = vmatpush1.bf16.msra.mxu0 0
  %1809 = vmatprep.subr.bf16.mxu0 0
  %1810 = vmatpush1.bf16.msra.mxu0 0
  %1811 = vmatprep.mubr.bf16.mxu0 0
  %1812 = vmatmul.mubr.bf16.gmra.mrb[0].mxu0 %v1774
  %v1813 = vpop.f32.mrb[0].mxu0
  %v1814 = vadd.f32 0.0, %v1813
  %v1815 = vpop.f32.mrb[0].mxu0
  %v1816 = vpop.f32.mrb[0].mxu0
  %v1817 = vadd.f32 0.0, %v1816
  %v1818 = vpop.f32.mrb[0].mxu0
  %1819 = vdwg.mxu0
  %v1820 = vpack.c.bf16 %v1763, %v1760
  %v1821 = vpack.c.bf16 %v1817, %v1814
  %v1824 = vunpack.c.l.b16 %v1820
  %v1825 = vunpack.c.h.b16 %v1820
  %v1826 = vunpack.c.l.b16 %v1821
  %v1827 = vunpack.c.h.b16 %v1821
  %v1828 = vpack.c.b16 %v1824, %v1824
  %v1829 = vpack.c.b16 %v1825, %v1825
  %v1830 = vpack.c.b16 %v1826, %v1826
  %v1831 = vpack.c.b16 %v1827, %v1827
  %1832 = vrot.lane.b32.xlu0 %v1828, 40
  %v1833 = vpop.permute.xlu0 %1832
  %1834 = vrot.lane.b32.xlu0 %v1829, 40
  %v1835 = vpop.permute.xlu0 %1834
  %1836 = vrot.lane.b32.xlu0 %v1830, 40
  %v1837 = vpop.permute.xlu0 %1836
  %1838 = vrot.lane.b32.xlu0 %v1831, 40
  %v1839 = vpop.permute.xlu0 %1838
  %vm1844 = vcmask 388416
  %1845 = vst.msk [vmem:[%s1] sm:$0xf] %vm1844, %v1833
  %vm1846 = vcmask 385344
  %vm1847 = vmand %vm1846, %vm301
  %v1848 = vld [vmem:[%s1 + $0x4] sm:$0x1]
  %v1849 = vsel %vm1847, %v1835, %v1848
  %1850 = vst [vmem:[%s1 + $0x4] sm:$0x1] %v1849
  %1851 = vst.msk [vmem:[%s1 + $0x8] sm:$0xf] %vm1844, %v1837
  %v1852 = vld [vmem:[%s1 + $0xc] sm:$0x1]
  %v1853 = vsel %vm1847, %v1839, %v1852
  %1854 = vst [vmem:[%s1 + $0xc] sm:$0x1] %v1853
  %v1855 = vld [vmem:[%s0] sm:$0xf]
  %v1856 = vld [vmem:[%s0 + $0x8] sm:$0x1]
  %v1857 = vld [vmem:[%s0 + $0x10] sm:$0xf]
  %v1858 = vld [vmem:[%s0 + $0x18] sm:$0x1]
  %v1859 = vld [vmem:[%s0 + $0x4] sm:$0xf]
  %v1860 = vld [vmem:[%s0 + $0xc] sm:$0x1]
  %v1861 = vld [vmem:[%s0 + $0x14] sm:$0xf]
  %v1862 = vld [vmem:[%s0 + $0x1c] sm:$0x1]
  %v1865 = vunpack.c.l.b16 %v1855
  %v1866 = vunpack.c.l.b16 %v1856
  %v1867 = vpack.c.b16 %v1866, %v1865
  %1868 = vrot.lane.b32.xlu0 %v1867, 80
  %v1869 = vpop.permute.xlu0 %1868
  %1870 = vrot.lane.b32.xlu0 %v1867, 16
  %v1871 = vpop.permute.xlu0 %1870
  %v1873 = vsel %vm24, %v1869, 0
  %v1876 = vsel %vm24, %v1871, 0
  %1878 = vmatprep.subr.bf16.mxu0 0
  %1879 = vmatpush1.bf16.xpose.msra.mxu0 %v1876
  %1880 = vmatprep.subr.bf16.mxu0 0
  %1881 = vmatpush1.bf16.xpose.msra.mxu0 0
  %1882 = vmatprep.subr.bf16.mxu0 0
  %1883 = vmatpush1.bf16.xpose.msra.mxu0 0
  %1884 = vmatprep.subr.bf16.mxu0 0
  %1885 = vmatpush1.bf16.xpose.msra.mxu0 0
  %1886 = vmatprep.subr.bf16.mxu0 0
  %1887 = vmatpush1.bf16.xpose.msra.mxu0 0
  %1888 = vmatprep.subr.bf16.mxu0 0
  %1889 = vmatpush1.bf16.xpose.msra.mxu0 0
  %1890 = vmatprep.subr.bf16.mxu0 0
  %1891 = vmatpush1.bf16.xpose.msra.mxu0 0
  %1892 = vmatprep.subr.bf16.mxu0 0
  %1893 = vmatpush1.bf16.xpose.msra.mxu0 0
  %1894 = vmatprep.subr.bf16.mxu0 0
  %1895 = vmatpush1.bf16.xpose.msra.mxu0 0
  %1896 = vmatprep.subr.bf16.mxu0 0
  %1897 = vmatpush1.bf16.xpose.msra.mxu0 0
  %1898 = vmatprep.subr.bf16.mxu0 0
  %1899 = vmatpush1.bf16.xpose.msra.mxu0 0
  %1900 = vmatprep.subr.bf16.mxu0 0
  %1901 = vmatpush1.bf16.xpose.msra.mxu0 0
  %1902 = vmatprep.subr.bf16.mxu0 0
  %1903 = vmatpush1.bf16.xpose.msra.mxu0 0
  %1904 = vmatprep.subr.bf16.mxu0 0
  %1905 = vmatpush1.bf16.xpose.msra.mxu0 0
  %1906 = vmatprep.subr.bf16.mxu0 0
  %1907 = vmatpush1.bf16.xpose.msra.mxu0 0
  %1908 = vmatprep.subr.bf16.mxu0 0
  %1909 = vmatpush1.bf16.xpose.msra.mxu0 0
  %1910 = vmatprep.mubr.bf16.mxu0 0
  %1911 = vmatmul.mubr.bf16.gmra.mrb[0].mxu0 %v1873
  %v1912 = vpop.f32.mrb[0].mxu0
  %v1913 = vadd.f32 0.0, %v1912
  %v1914 = vpop.f32.mrb[0].mxu0
  %v1915 = vpop.f32.mrb[0].mxu0
  %v1916 = vadd.f32 0.0, %v1915
  %v1917 = vpop.f32.mrb[0].mxu0
  %1918 = vdwg.mxu0
  %v1921 = vunpack.c.l.b16 %v1857
  %v1922 = vunpack.c.l.b16 %v1858
  %v1923 = vpack.c.b16 %v1922, %v1921
  %1924 = vrot.lane.b32.xlu0 %v1923, 80
  %v1925 = vpop.permute.xlu0 %1924
  %1926 = vrot.lane.b32.xlu0 %v1923, 16
  %v1927 = vpop.permute.xlu0 %1926
  %v1929 = vsel %vm24, %v1925, 0
  %v1932 = vsel %vm24, %v1927, 0
  %1934 = vmatprep.subr.bf16.mxu0 0
  %1935 = vmatpush1.bf16.xpose.msra.mxu0 %v1932
  %1936 = vmatprep.subr.bf16.mxu0 0
  %1937 = vmatpush1.bf16.xpose.msra.mxu0 0
  %1938 = vmatprep.subr.bf16.mxu0 0
  %1939 = vmatpush1.bf16.xpose.msra.mxu0 0
  %1940 = vmatprep.subr.bf16.mxu0 0
  %1941 = vmatpush1.bf16.xpose.msra.mxu0 0
  %1942 = vmatprep.subr.bf16.mxu0 0
  %1943 = vmatpush1.bf16.xpose.msra.mxu0 0
  %1944 = vmatprep.subr.bf16.mxu0 0
  %1945 = vmatpush1.bf16.xpose.msra.mxu0 0
  %1946 = vmatprep.subr.bf16.mxu0 0
  %1947 = vmatpush1.bf16.xpose.msra.mxu0 0
  %1948 = vmatprep.subr.bf16.mxu0 0
  %1949 = vmatpush1.bf16.xpose.msra.mxu0 0
  %1950 = vmatprep.subr.bf16.mxu0 0
  %1951 = vmatpush1.bf16.xpose.msra.mxu0 0
  %1952 = vmatprep.subr.bf16.mxu0 0
  %1953 = vmatpush1.bf16.xpose.msra.mxu0 0
  %1954 = vmatprep.subr.bf16.mxu0 0
  %1955 = vmatpush1.bf16.xpose.msra.mxu0 0
  %1956 = vmatprep.subr.bf16.mxu0 0
  %1957 = vmatpush1.bf16.xpose.msra.mxu0 0
  %1958 = vmatprep.subr.bf16.mxu0 0
  %1959 = vmatpush1.bf16.xpose.msra.mxu0 0
  %1960 = vmatprep.subr.bf16.mxu0 0
  %1961 = vmatpush1.bf16.xpose.msra.mxu0 0
  %1962 = vmatprep.subr.bf16.mxu0 0
  %1963 = vmatpush1.bf16.xpose.msra.mxu0 0
  %1964 = vmatprep.subr.bf16.mxu0 0
  %1965 = vmatpush1.bf16.xpose.msra.mxu0 0
  %1966 = vmatprep.mubr.bf16.mxu0 0
  %1967 = vmatmul.mubr.bf16.gmra.mrb[0].mxu0 %v1929
  %v1968 = vpop.f32.mrb[0].mxu0
  %v1969 = vadd.f32 0.0, %v1968
  %v1970 = vpop.f32.mrb[0].mxu0
  %v1971 = vpop.f32.mrb[0].mxu0
  %v1972 = vadd.f32 0.0, %v1971
  %v1973 = vpop.f32.mrb[0].mxu0
  %1974 = vdwg.mxu0
  %v1975 = vsel %vm126, %v1913, -inf
  %1976 = vmax.xlane.f32.xlu0 %v1975
  %v1977 = vpop.xlane.xlu0 %1976
  %v1978 = vsel %vm130, %v1916, -inf
  %1979 = vmax.xlane.f32.xlu0 %v1978
  %v1980 = vpop.xlane.xlu0 %1979
  %v1981 = vsel %vm126, %v1969, -inf
  %1982 = vmax.xlane.f32.xlu0 %v1981
  %v1983 = vpop.xlane.xlu0 %1982
  %v1984 = vsel %vm130, %v1972, -inf
  %1985 = vmax.xlane.f32.xlu0 %v1984
  %v1986 = vpop.xlane.xlu0 %1985
  %v1987 = vsub.f32 %v1913, %v1977
  %v1988 = vsub.f32 %v1916, %v1980
  %v1989 = vsub.f32 %v1969, %v1983
  %v1990 = vsub.f32 %v1972, %v1986
  %v1991 = vmul.f32 %v1987, 1.442695
  %v1992 = vpow.pop %v1991
  %v1993 = vmul.f32 %v1988, 1.442695
  %v1994 = vpow.pop %v1993
  %v1995 = vmul.f32 %v1989, 1.442695
  %v1996 = vpow.pop %v1995
  %v1997 = vmul.f32 %v1990, 1.442695
  %v1998 = vpow.pop %v1997
  %v1999 = vsel %vm126, %v1992, 0.0
  %2000 = vadd.xlane.f32.xlu0 %v1999
  %v2001 = vpop.xlane.xlu0 %2000
  %v2002 = vsel %vm130, %v1994, 0.0
  %2003 = vadd.xlane.f32.xlu0 %v2002
  %v2004 = vpop.xlane.xlu0 %2003
  %v2005 = vsel %vm126, %v1996, 0.0
  %2006 = vadd.xlane.f32.xlu0 %v2005
  %v2007 = vpop.xlane.xlu0 %2006
  %v2008 = vsel %vm130, %v1998, 0.0
  %2009 = vadd.xlane.f32.xlu0 %v2008
  %v2010 = vpop.xlane.xlu0 %2009
  %v2011 = vrcp.pop %v2001
  %v2012 = vrcp.pop %v2004
  %v2013 = vrcp.pop %v2007
  %v2014 = vrcp.pop %v2010
  %v2015 = vmul.f32 %v1992, %v2011
  %v2016 = vmul.f32 %v1994, %v2012
  %v2017 = vmul.f32 %v1996, %v2013
  %v2018 = vmul.f32 %v1998, %v2014
  %v2019 = vpack.c.bf16 %v2016, %v2015
  %v2020 = vpack.c.bf16 %v2018, %v2017
  %v2023 = vunpack.c.l.b16 %v1859
  %v2024 = vunpack.c.l.b16 %v1860
  %v2025 = vpack.c.b16 %v2024, %v2023
  %2026 = vrot.lane.b32.xlu0 %v2025, 80
  %v2027 = vpop.permute.xlu0 %2026
  %v2029 = vsel %vm126, %v2019, 0
  %v2032 = vand.u32 %v2027, %v185
  %2034 = vmatprep.subr.bf16.mxu0 0
  %2035 = vmatpush1.bf16.msra.mxu0 %v2032
  %2036 = vmatprep.subr.bf16.mxu0 0
  %2037 = vmatpush1.bf16.msra.mxu0 0
  %2038 = vmatprep.subr.bf16.mxu0 0
  %2039 = vmatpush1.bf16.msra.mxu0 0
  %2040 = vmatprep.subr.bf16.mxu0 0
  %2041 = vmatpush1.bf16.msra.mxu0 0
  %2042 = vmatprep.subr.bf16.mxu0 0
  %2043 = vmatpush1.bf16.msra.mxu0 0
  %2044 = vmatprep.subr.bf16.mxu0 0
  %2045 = vmatpush1.bf16.msra.mxu0 0
  %2046 = vmatprep.subr.bf16.mxu0 0
  %2047 = vmatpush1.bf16.msra.mxu0 0
  %2048 = vmatprep.subr.bf16.mxu0 0
  %2049 = vmatpush1.bf16.msra.mxu0 0
  %2050 = vmatprep.subr.bf16.mxu0 0
  %2051 = vmatpush1.bf16.msra.mxu0 0
  %2052 = vmatprep.subr.bf16.mxu0 0
  %2053 = vmatpush1.bf16.msra.mxu0 0
  %2054 = vmatprep.subr.bf16.mxu0 0
  %2055 = vmatpush1.bf16.msra.mxu0 0
  %2056 = vmatprep.subr.bf16.mxu0 0
  %2057 = vmatpush1.bf16.msra.mxu0 0
  %2058 = vmatprep.subr.bf16.mxu0 0
  %2059 = vmatpush1.bf16.msra.mxu0 0
  %2060 = vmatprep.subr.bf16.mxu0 0
  %2061 = vmatpush1.bf16.msra.mxu0 0
  %2062 = vmatprep.subr.bf16.mxu0 0
  %2063 = vmatpush1.bf16.msra.mxu0 0
  %2064 = vmatprep.subr.bf16.mxu0 0
  %2065 = vmatpush1.bf16.msra.mxu0 0
  %2066 = vmatprep.mubr.bf16.mxu0 0
  %2067 = vmatmul.mubr.bf16.gmra.mrb[0].mxu0 %v2029
  %v2068 = vpop.f32.mrb[0].mxu0
  %v2069 = vadd.f32 0.0, %v2068
  %v2070 = vpop.f32.mrb[0].mxu0
  %v2071 = vpop.f32.mrb[0].mxu0
  %v2072 = vadd.f32 0.0, %v2071
  %v2073 = vpop.f32.mrb[0].mxu0
  %2074 = vdwg.mxu0
  %v2077 = vunpack.c.l.b16 %v1861
  %v2078 = vunpack.c.l.b16 %v1862
  %v2079 = vpack.c.b16 %v2078, %v2077
  %2080 = vrot.lane.b32.xlu0 %v2079, 80
  %v2081 = vpop.permute.xlu0 %2080
  %v2083 = vsel %vm126, %v2020, 0
  %v2086 = vand.u32 %v2081, %v185
  %2088 = vmatprep.subr.bf16.mxu0 0
  %2089 = vmatpush1.bf16.msra.mxu0 %v2086
  %2090 = vmatprep.subr.bf16.mxu0 0
  %2091 = vmatpush1.bf16.msra.mxu0 0
  %2092 = vmatprep.subr.bf16.mxu0 0
  %2093 = vmatpush1.bf16.msra.mxu0 0
  %2094 = vmatprep.subr.bf16.mxu0 0
  %2095 = vmatpush1.bf16.msra.mxu0 0
  %2096 = vmatprep.subr.bf16.mxu0 0
  %2097 = vmatpush1.bf16.msra.mxu0 0
  %2098 = vmatprep.subr.bf16.mxu0 0
  %2099 = vmatpush1.bf16.msra.mxu0 0
  %2100 = vmatprep.subr.bf16.mxu0 0
  %2101 = vmatpush1.bf16.msra.mxu0 0
  %2102 = vmatprep.subr.bf16.mxu0 0
  %2103 = vmatpush1.bf16.msra.mxu0 0
  %2104 = vmatprep.subr.bf16.mxu0 0
  %2105 = vmatpush1.bf16.msra.mxu0 0
  %2106 = vmatprep.subr.bf16.mxu0 0
  %2107 = vmatpush1.bf16.msra.mxu0 0
  %2108 = vmatprep.subr.bf16.mxu0 0
  %2109 = vmatpush1.bf16.msra.mxu0 0
  %2110 = vmatprep.subr.bf16.mxu0 0
  %2111 = vmatpush1.bf16.msra.mxu0 0
  %2112 = vmatprep.subr.bf16.mxu0 0
  %2113 = vmatpush1.bf16.msra.mxu0 0
  %2114 = vmatprep.subr.bf16.mxu0 0
  %2115 = vmatpush1.bf16.msra.mxu0 0
  %2116 = vmatprep.subr.bf16.mxu0 0
  %2117 = vmatpush1.bf16.msra.mxu0 0
  %2118 = vmatprep.subr.bf16.mxu0 0
  %2119 = vmatpush1.bf16.msra.mxu0 0
  %2120 = vmatprep.mubr.bf16.mxu0 0
  %2121 = vmatmul.mubr.bf16.gmra.mrb[0].mxu0 %v2083
  %v2122 = vpop.f32.mrb[0].mxu0
  %v2123 = vadd.f32 0.0, %v2122
  %v2124 = vpop.f32.mrb[0].mxu0
  %v2125 = vpop.f32.mrb[0].mxu0
  %v2126 = vadd.f32 0.0, %v2125
  %v2127 = vpop.f32.mrb[0].mxu0
  %2128 = vdwg.mxu0
  %v2129 = vpack.c.bf16 %v2072, %v2069
  %v2130 = vpack.c.bf16 %v2126, %v2123
  %v2133 = vunpack.c.l.b16 %v2129
  %v2134 = vunpack.c.h.b16 %v2129
  %v2135 = vunpack.c.l.b16 %v2130
  %v2136 = vunpack.c.h.b16 %v2130
  %v2137 = vpack.c.b16 %v2133, %v2133
  %v2138 = vpack.c.b16 %v2134, %v2134
  %v2139 = vpack.c.b16 %v2135, %v2135
  %v2140 = vpack.c.b16 %v2136, %v2136
  %2141 = vrot.lane.b32.xlu0 %v2137, 48
  %v2142 = vpop.permute.xlu0 %2141
  %2143 = vrot.lane.b32.xlu0 %v2138, 48
  %v2144 = vpop.permute.xlu0 %2143
  %2145 = vrot.lane.b32.xlu0 %v2139, 48
  %v2146 = vpop.permute.xlu0 %2145
  %2147 = vrot.lane.b32.xlu0 %v2140, 48
  %v2148 = vpop.permute.xlu0 %2147
  %vm2153 = vcmask 454016
  %2154 = vst.msk [vmem:[%s1] sm:$0xf] %vm2153, %v2142
  %vm2155 = vcmask 450944
  %vm2156 = vmand %vm2155, %vm301
  %v2157 = vld [vmem:[%s1 + $0x4] sm:$0x1]
  %v2158 = vsel %vm2156, %v2144, %v2157
  %2159 = vst [vmem:[%s1 + $0x4] sm:$0x1] %v2158
  %2160 = vst.msk [vmem:[%s1 + $0x8] sm:$0xf] %vm2153, %v2146
  %v2161 = vld [vmem:[%s1 + $0xc] sm:$0x1]
  %v2162 = vsel %vm2156, %v2148, %v2161
  %2163 = vst [vmem:[%s1 + $0xc] sm:$0x1] %v2162
  %v2164 = vld [vmem:[%s0] sm:$0xf]
  %v2165 = vld [vmem:[%s0 + $0x8] sm:$0x1]
  %v2166 = vld [vmem:[%s0 + $0x10] sm:$0xf]
  %v2167 = vld [vmem:[%s0 + $0x18] sm:$0x1]
  %v2168 = vld [vmem:[%s0 + $0x4] sm:$0xf]
  %v2169 = vld [vmem:[%s0 + $0xc] sm:$0x1]
  %v2170 = vld [vmem:[%s0 + $0x14] sm:$0xf]
  %v2171 = vld [vmem:[%s0 + $0x1c] sm:$0x1]
  %v2174 = vunpack.c.l.b16 %v2164
  %v2175 = vunpack.c.l.b16 %v2165
  %v2176 = vpack.c.b16 %v2175, %v2174
  %2177 = vrot.lane.b32.xlu0 %v2176, 72
  %v2178 = vpop.permute.xlu0 %2177
  %2179 = vrot.lane.b32.xlu0 %v2176, 8
  %v2180 = vpop.permute.xlu0 %2179
  %v2182 = vsel %vm24, %v2178, 0
  %v2185 = vsel %vm24, %v2180, 0
  %2187 = vmatprep.subr.bf16.mxu0 0
  %2188 = vmatpush1.bf16.xpose.msra.mxu0 %v2185
  %2189 = vmatprep.subr.bf16.mxu0 0
  %2190 = vmatpush1.bf16.xpose.msra.mxu0 0
  %2191 = vmatprep.subr.bf16.mxu0 0
  %2192 = vmatpush1.bf16.xpose.msra.mxu0 0
  %2193 = vmatprep.subr.bf16.mxu0 0
  %2194 = vmatpush1.bf16.xpose.msra.mxu0 0
  %2195 = vmatprep.subr.bf16.mxu0 0
  %2196 = vmatpush1.bf16.xpose.msra.mxu0 0
  %2197 = vmatprep.subr.bf16.mxu0 0
  %2198 = vmatpush1.bf16.xpose.msra.mxu0 0
  %2199 = vmatprep.subr.bf16.mxu0 0
  %2200 = vmatpush1.bf16.xpose.msra.mxu0 0
  %2201 = vmatprep.subr.bf16.mxu0 0
  %2202 = vmatpush1.bf16.xpose.msra.mxu0 0
  %2203 = vmatprep.subr.bf16.mxu0 0
  %2204 = vmatpush1.bf16.xpose.msra.mxu0 0
  %2205 = vmatprep.subr.bf16.mxu0 0
  %2206 = vmatpush1.bf16.xpose.msra.mxu0 0
  %2207 = vmatprep.subr.bf16.mxu0 0
  %2208 = vmatpush1.bf16.xpose.msra.mxu0 0
  %2209 = vmatprep.subr.bf16.mxu0 0
  %2210 = vmatpush1.bf16.xpose.msra.mxu0 0
  %2211 = vmatprep.subr.bf16.mxu0 0
  %2212 = vmatpush1.bf16.xpose.msra.mxu0 0
  %2213 = vmatprep.subr.bf16.mxu0 0
  %2214 = vmatpush1.bf16.xpose.msra.mxu0 0
  %2215 = vmatprep.subr.bf16.mxu0 0
  %2216 = vmatpush1.bf16.xpose.msra.mxu0 0
  %2217 = vmatprep.subr.bf16.mxu0 0
  %2218 = vmatpush1.bf16.xpose.msra.mxu0 0
  %2219 = vmatprep.mubr.bf16.mxu0 0
  %2220 = vmatmul.mubr.bf16.gmra.mrb[0].mxu0 %v2182
  %v2221 = vpop.f32.mrb[0].mxu0
  %v2222 = vadd.f32 0.0, %v2221
  %v2223 = vpop.f32.mrb[0].mxu0
  %v2224 = vpop.f32.mrb[0].mxu0
  %v2225 = vadd.f32 0.0, %v2224
  %v2226 = vpop.f32.mrb[0].mxu0
  %2227 = vdwg.mxu0
  %v2230 = vunpack.c.l.b16 %v2166
  %v2231 = vunpack.c.l.b16 %v2167
  %v2232 = vpack.c.b16 %v2231, %v2230
  %2233 = vrot.lane.b32.xlu0 %v2232, 72
  %v2234 = vpop.permute.xlu0 %2233
  %2235 = vrot.lane.b32.xlu0 %v2232, 8
  %v2236 = vpop.permute.xlu0 %2235
  %v2238 = vsel %vm24, %v2234, 0
  %v2241 = vsel %vm24, %v2236, 0
  %2243 = vmatprep.subr.bf16.mxu0 0
  %2244 = vmatpush1.bf16.xpose.msra.mxu0 %v2241
  %2245 = vmatprep.subr.bf16.mxu0 0
  %2246 = vmatpush1.bf16.xpose.msra.mxu0 0
  %2247 = vmatprep.subr.bf16.mxu0 0
  %2248 = vmatpush1.bf16.xpose.msra.mxu0 0
  %2249 = vmatprep.subr.bf16.mxu0 0
  %2250 = vmatpush1.bf16.xpose.msra.mxu0 0
  %2251 = vmatprep.subr.bf16.mxu0 0
  %2252 = vmatpush1.bf16.xpose.msra.mxu0 0
  %2253 = vmatprep.subr.bf16.mxu0 0
  %2254 = vmatpush1.bf16.xpose.msra.mxu0 0
  %2255 = vmatprep.subr.bf16.mxu0 0
  %2256 = vmatpush1.bf16.xpose.msra.mxu0 0
  %2257 = vmatprep.subr.bf16.mxu0 0
  %2258 = vmatpush1.bf16.xpose.msra.mxu0 0
  %2259 = vmatprep.subr.bf16.mxu0 0
  %2260 = vmatpush1.bf16.xpose.msra.mxu0 0
  %2261 = vmatprep.subr.bf16.mxu0 0
  %2262 = vmatpush1.bf16.xpose.msra.mxu0 0
  %2263 = vmatprep.subr.bf16.mxu0 0
  %2264 = vmatpush1.bf16.xpose.msra.mxu0 0
  %2265 = vmatprep.subr.bf16.mxu0 0
  %2266 = vmatpush1.bf16.xpose.msra.mxu0 0
  %2267 = vmatprep.subr.bf16.mxu0 0
  %2268 = vmatpush1.bf16.xpose.msra.mxu0 0
  %2269 = vmatprep.subr.bf16.mxu0 0
  %2270 = vmatpush1.bf16.xpose.msra.mxu0 0
  %2271 = vmatprep.subr.bf16.mxu0 0
  %2272 = vmatpush1.bf16.xpose.msra.mxu0 0
  %2273 = vmatprep.subr.bf16.mxu0 0
  %2274 = vmatpush1.bf16.xpose.msra.mxu0 0
  %2275 = vmatprep.mubr.bf16.mxu0 0
  %2276 = vmatmul.mubr.bf16.gmra.mrb[0].mxu0 %v2238
  %v2277 = vpop.f32.mrb[0].mxu0
  %v2278 = vadd.f32 0.0, %v2277
  %v2279 = vpop.f32.mrb[0].mxu0
  %v2280 = vpop.f32.mrb[0].mxu0
  %v2281 = vadd.f32 0.0, %v2280
  %v2282 = vpop.f32.mrb[0].mxu0
  %2283 = vdwg.mxu0
  %v2284 = vsel %vm126, %v2222, -inf
  %2285 = vmax.xlane.f32.xlu0 %v2284
  %v2286 = vpop.xlane.xlu0 %2285
  %v2287 = vsel %vm130, %v2225, -inf
  %2288 = vmax.xlane.f32.xlu0 %v2287
  %v2289 = vpop.xlane.xlu0 %2288
  %v2290 = vsel %vm126, %v2278, -inf
  %2291 = vmax.xlane.f32.xlu0 %v2290
  %v2292 = vpop.xlane.xlu0 %2291
  %v2293 = vsel %vm130, %v2281, -inf
  %2294 = vmax.xlane.f32.xlu0 %v2293
  %v2295 = vpop.xlane.xlu0 %2294
  %v2296 = vsub.f32 %v2222, %v2286
  %v2297 = vsub.f32 %v2225, %v2289
  %v2298 = vsub.f32 %v2278, %v2292
  %v2299 = vsub.f32 %v2281, %v2295
  %v2300 = vmul.f32 %v2296, 1.442695
  %v2301 = vpow.pop %v2300
  %v2302 = vmul.f32 %v2297, 1.442695
  %v2303 = vpow.pop %v2302
  %v2304 = vmul.f32 %v2298, 1.442695
  %v2305 = vpow.pop %v2304
  %v2306 = vmul.f32 %v2299, 1.442695
  %v2307 = vpow.pop %v2306
  %v2308 = vsel %vm126, %v2301, 0.0
  %2309 = vadd.xlane.f32.xlu0 %v2308
  %v2310 = vpop.xlane.xlu0 %2309
  %v2311 = vsel %vm130, %v2303, 0.0
  %2312 = vadd.xlane.f32.xlu0 %v2311
  %v2313 = vpop.xlane.xlu0 %2312
  %v2314 = vsel %vm126, %v2305, 0.0
  %2315 = vadd.xlane.f32.xlu0 %v2314
  %v2316 = vpop.xlane.xlu0 %2315
  %v2317 = vsel %vm130, %v2307, 0.0
  %2318 = vadd.xlane.f32.xlu0 %v2317
  %v2319 = vpop.xlane.xlu0 %2318
  %v2320 = vrcp.pop %v2310
  %v2321 = vrcp.pop %v2313
  %v2322 = vrcp.pop %v2316
  %v2323 = vrcp.pop %v2319
  %v2324 = vmul.f32 %v2301, %v2320
  %v2325 = vmul.f32 %v2303, %v2321
  %v2326 = vmul.f32 %v2305, %v2322
  %v2327 = vmul.f32 %v2307, %v2323
  %v2328 = vpack.c.bf16 %v2325, %v2324
  %v2329 = vpack.c.bf16 %v2327, %v2326
  %v2332 = vunpack.c.l.b16 %v2168
  %v2333 = vunpack.c.l.b16 %v2169
  %v2334 = vpack.c.b16 %v2333, %v2332
  %2335 = vrot.lane.b32.xlu0 %v2334, 72
  %v2336 = vpop.permute.xlu0 %2335
  %v2338 = vsel %vm126, %v2328, 0
  %v2341 = vand.u32 %v2336, %v185
  %2343 = vmatprep.subr.bf16.mxu0 0
  %2344 = vmatpush1.bf16.msra.mxu0 %v2341
  %2345 = vmatprep.subr.bf16.mxu0 0
  %2346 = vmatpush1.bf16.msra.mxu0 0
  %2347 = vmatprep.subr.bf16.mxu0 0
  %2348 = vmatpush1.bf16.msra.mxu0 0
  %2349 = vmatprep.subr.bf16.mxu0 0
  %2350 = vmatpush1.bf16.msra.mxu0 0
  %2351 = vmatprep.subr.bf16.mxu0 0
  %2352 = vmatpush1.bf16.msra.mxu0 0
  %2353 = vmatprep.subr.bf16.mxu0 0
  %2354 = vmatpush1.bf16.msra.mxu0 0
  %2355 = vmatprep.subr.bf16.mxu0 0
  %2356 = vmatpush1.bf16.msra.mxu0 0
  %2357 = vmatprep.subr.bf16.mxu0 0
  %2358 = vmatpush1.bf16.msra.mxu0 0
  %2359 = vmatprep.subr.bf16.mxu0 0
  %2360 = vmatpush1.bf16.msra.mxu0 0
  %2361 = vmatprep.subr.bf16.mxu0 0
  %2362 = vmatpush1.bf16.msra.mxu0 0
  %2363 = vmatprep.subr.bf16.mxu0 0
  %2364 = vmatpush1.bf16.msra.mxu0 0
  %2365 = vmatprep.subr.bf16.mxu0 0
  %2366 = vmatpush1.bf16.msra.mxu0 0
  %2367 = vmatprep.subr.bf16.mxu0 0
  %2368 = vmatpush1.bf16.msra.mxu0 0
  %2369 = vmatprep.subr.bf16.mxu0 0
  %2370 = vmatpush1.bf16.msra.mxu0 0
  %2371 = vmatprep.subr.bf16.mxu0 0
  %2372 = vmatpush1.bf16.msra.mxu0 0
  %2373 = vmatprep.subr.bf16.mxu0 0
  %2374 = vmatpush1.bf16.msra.mxu0 0
  %2375 = vmatprep.mubr.bf16.mxu0 0
  %2376 = vmatmul.mubr.bf16.gmra.mrb[0].mxu0 %v2338
  %v2377 = vpop.f32.mrb[0].mxu0
  %v2378 = vadd.f32 0.0, %v2377
  %v2379 = vpop.f32.mrb[0].mxu0
  %v2380 = vpop.f32.mrb[0].mxu0
  %v2381 = vadd.f32 0.0, %v2380
  %v2382 = vpop.f32.mrb[0].mxu0
  %2383 = vdwg.mxu0
  %v2386 = vunpack.c.l.b16 %v2170
  %v2387 = vunpack.c.l.b16 %v2171
  %v2388 = vpack.c.b16 %v2387, %v2386
  %2389 = vrot.lane.b32.xlu0 %v2388, 72
  %v2390 = vpop.permute.xlu0 %2389
  %v2392 = vsel %vm126, %v2329, 0
  %v2395 = vand.u32 %v2390, %v185
  %2397 = vmatprep.subr.bf16.mxu0 0
  %2398 = vmatpush1.bf16.msra.mxu0 %v2395
  %2399 = vmatprep.subr.bf16.mxu0 0
  %2400 = vmatpush1.bf16.msra.mxu0 0
  %2401 = vmatprep.subr.bf16.mxu0 0
  %2402 = vmatpush1.bf16.msra.mxu0 0
  %2403 = vmatprep.subr.bf16.mxu0 0
  %2404 = vmatpush1.bf16.msra.mxu0 0
  %2405 = vmatprep.subr.bf16.mxu0 0
  %2406 = vmatpush1.bf16.msra.mxu0 0
  %2407 = vmatprep.subr.bf16.mxu0 0
  %2408 = vmatpush1.bf16.msra.mxu0 0
  %2409 = vmatprep.subr.bf16.mxu0 0
  %2410 = vmatpush1.bf16.msra.mxu0 0
  %2411 = vmatprep.subr.bf16.mxu0 0
  %2412 = vmatpush1.bf16.msra.mxu0 0
  %2413 = vmatprep.subr.bf16.mxu0 0
  %2414 = vmatpush1.bf16.msra.mxu0 0
  %2415 = vmatprep.subr.bf16.mxu0 0
  %2416 = vmatpush1.bf16.msra.mxu0 0
  %2417 = vmatprep.subr.bf16.mxu0 0
  %2418 = vmatpush1.bf16.msra.mxu0 0
  %2419 = vmatprep.subr.bf16.mxu0 0
  %2420 = vmatpush1.bf16.msra.mxu0 0
  %2421 = vmatprep.subr.bf16.mxu0 0
  %2422 = vmatpush1.bf16.msra.mxu0 0
  %2423 = vmatprep.subr.bf16.mxu0 0
  %2424 = vmatpush1.bf16.msra.mxu0 0
  %2425 = vmatprep.subr.bf16.mxu0 0
  %2426 = vmatpush1.bf16.msra.mxu0 0
  %2427 = vmatprep.subr.bf16.mxu0 0
  %2428 = vmatpush1.bf16.msra.mxu0 0
  %2429 = vmatprep.mubr.bf16.mxu0 0
  %2430 = vmatmul.mubr.bf16.gmra.mrb[0].mxu0 %v2392
  %v2431 = vpop.f32.mrb[0].mxu0
  %v2432 = vadd.f32 0.0, %v2431
  %v2433 = vpop.f32.mrb[0].mxu0
  %v2434 = vpop.f32.mrb[0].mxu0
  %v2435 = vadd.f32 0.0, %v2434
  %v2436 = vpop.f32.mrb[0].mxu0
  %2437 = vdwg.mxu0
  %v2438 = vpack.c.bf16 %v2381, %v2378
  %v2439 = vpack.c.bf16 %v2435, %v2432
  %v2442 = vunpack.c.l.b16 %v2438
  %v2443 = vunpack.c.h.b16 %v2438
  %v2444 = vunpack.c.l.b16 %v2439
  %v2445 = vunpack.c.h.b16 %v2439
  %v2446 = vpack.c.b16 %v2442, %v2442
  %v2447 = vpack.c.b16 %v2443, %v2443
  %v2448 = vpack.c.b16 %v2444, %v2444
  %v2449 = vpack.c.b16 %v2445, %v2445
  %2450 = vrot.lane.b32.xlu0 %v2446, 56
  %v2451 = vpop.permute.xlu0 %2450
  %2452 = vrot.lane.b32.xlu0 %v2447, 56
  %v2453 = vpop.permute.xlu0 %2452
  %2454 = vrot.lane.b32.xlu0 %v2448, 56
  %v2455 = vpop.permute.xlu0 %2454
  %2456 = vrot.lane.b32.xlu0 %v2449, 56
  %v2457 = vpop.permute.xlu0 %2456
  %vm2462 = vcmask 519616
  %2463 = vst.msk [vmem:[%s1] sm:$0xf] %vm2462, %v2451
  %vm2464 = vcmask 516544
  %vm2465 = vmand %vm2464, %vm301
  %v2466 = vld [vmem:[%s1 + $0x4] sm:$0x1]
  %v2467 = vsel %vm2465, %v2453, %v2466
  %2468 = vst [vmem:[%s1 + $0x4] sm:$0x1] %v2467
  %2469 = vst.msk [vmem:[%s1 + $0x8] sm:$0xf] %vm2462, %v2455
  %v2470 = vld [vmem:[%s1 + $0xc] sm:$0x1]
  %v2471 = vsel %vm2465, %v2457, %v2470
  %2472 = vst [vmem:[%s1 + $0xc] sm:$0x1] %v2471
  // Predicated region
  $region6: #{taggregate_forward.10} parent=0 // pred_check
    _
  $region7: #{taggregate_forward.10} parent=0 // pred_check_branch
    %2474 = sbr.rel (0) target = $region9
  $region8: #{taggregate_forward.10} parent=0 // pred_region
    _
  $region9: #{taggregate_forward.10} parent=0 // pred_fallthru
    _
  // Predicated region
  $region10: #{taggregate_forward.10} parent=0 // pred_check
    _
  $region11: #{taggregate_forward.10} parent=0 // pred_check_branch
    %2476 = sbr.rel (0) target = $region13
  $region12: #{taggregate_forward.10} parent=0 // pred_region
    _
  $region13: #{taggregate_forward.10} parent=0 // pred_fallthru
    _

</llo_original>
